<compile_context>
chip_gen: v7x
topology: tpu7x:2x2x1
jax: 0.10.0
libtpu: 0.0.40
codegen_flags: <defaults>
</compile_context>

<pallas_src>
import functools

import numpy as np

import jax
import jax.numpy as jnp
from jax.experimental import pallas as pl
from jax.experimental.pallas import tpu as pltpu

NEG_SLOPE = 0.01   # nn.LeakyReLU default negative_slope
LN_EPS = 1e-5      # nn.LayerNorm default eps

_VMEM_SPEC = pl.BlockSpec(memory_space=pltpu.MemorySpace.VMEM)


# ------------------------------ in-kernel math -------------------------------

def _leaky(x):
    return jnp.where(x >= 0, x, NEG_SLOPE * x)


def _layernorm(x, g, b):
    # Single-pass statistics: mean and E[x^2] are independent reductions
    # (overlap on the XLU), var = E[x^2] - mean^2 (biased, as torch).
    mean = jnp.mean(x, axis=-1, keepdims=True)
    mean_sq = jnp.mean(x * x, axis=-1, keepdims=True)
    var = jnp.maximum(mean_sq - mean * mean, 0.0)
    return (x - mean) * jax.lax.rsqrt(var + LN_EPS) * g + b


def _dot(a, b):
    # DEFAULT precision: one MXU pass (HIGHEST would ~3x the latency of every
    # matmul on the serial MLP chain for accuracy we don't need at K<=72).
    return jnp.dot(a, b, preferred_element_type=jnp.float32)


def _get(slab_ref, offsets, name):
    """Static slice of a packed weight slab ref."""
    off, r, c = offsets[name]
    return slab_ref[off:off + r, 0:c]


def _cols(x, runs):
    """Select feature columns with static contiguous lane slices (in-kernel)."""
    parts = [x[:, l:r] for (l, r) in runs]
    return parts[0] if len(parts) == 1 else jnp.concatenate(parts, axis=1)


def _item_forward(x, slab_ref, m):
    """Fused ItemEncoder forward; everything stays in vregs/VMEM."""
    offs = m["offsets"]
    g = lambda name: _get(slab_ref, offs, name)

    coords = _cols(x, m["coord_runs"])          # (B, 2*npts)
    numbers = _cols(x, m["number_runs"])        # (B, n_dim)

    # point encoder: shared per-point Linear(2 -> pdim) folded into one
    # block-diagonal weight -> single MXU dot.
    pe = _dot(coords, g("pe_w")) + g("pe_b")    # (B, npts*pdim)

    # coord MLP: LayerNorm -> Linear+LeakyReLU -> Linear+LeakyReLU
    ce = _layernorm(pe, g("c_ln_g"), g("c_ln_b"))
    ce = _leaky(_dot(ce, g("c_fc1_w")) + g("c_fc1_b"))
    ce = _leaky(_dot(ce, g("c_fc2_w")) + g("c_fc2_b"))

    # number MLP: LayerNorm -> Linear+LeakyReLU -> Linear
    ne = _layernorm(numbers, g("n_ln_g"), g("n_ln_b"))
    ne = _leaky(_dot(ne, g("n_fc1_w")) + g("n_fc1_b"))
    ne = _dot(ne, g("n_fc2_w")) + g("n_fc2_b")

    # mlp0 applied to the (virtual) concat [ce, ne] via a split weight:
    # concat([ce, ne]) @ W + b == ce @ W_c + ne @ W_n + b
    h = _dot(ce, g("m0_w_c")) + _dot(ne, g("m0_w_n")) + g("m0_b")

    # mlp_layers: Sequential(LeakyReLU, Dropout(eval -> identity), Linear)
    for li in range(m["num_layers"]):
        h = _dot(_leaky(h), g(f"layer{li}_w")) + g(f"layer{li}_b")
    return h


def _number_forward(x, slab_ref, m):
    """Fused NumberEncoder forward."""
    offs = m["offsets"]
    g = lambda name: _get(slab_ref, offs, name)
    h = _layernorm(x, g("ln_g"), g("ln_b"))
    h = _leaky(_dot(h, g("fc1_w")) + g("fc1_b"))
    return _dot(h, g("fc2_w")) + g("fc2_b")


def _gamble_fused_kernel(*refs, metas):
    """One launch for all encoders; independent chains interleave freely."""
    n = len(metas)
    x_refs = refs[:n]
    slab_refs = refs[n:2 * n]
    out_refs = refs[2 * n:3 * n]
    for i, meta in enumerate(metas):
        x = x_refs[i][...]
        if meta["kind"] == "item":
            out_refs[i][...] = _item_forward(x, slab_refs[i], meta)
        else:
            out_refs[i][...] = _number_forward(x, slab_refs[i], meta)


# --------------------------- parameter construction ---------------------------

def _linear_params(key, fan_in, fan_out):
    k1, k2 = jax.random.split(key)
    bound = 1.0 / (fan_in ** 0.5)            # PyTorch default Linear init range
    w = jax.random.uniform(k1, (fan_in, fan_out), jnp.float32, -bound, bound)
    b = jax.random.uniform(k2, (1, fan_out), jnp.float32, -bound, bound)
    return w, b


def _runs(idxs):
    """Compress a sorted index list into contiguous (l, r) runs (static)."""
    runs = []
    start = prev = idxs[0]
    for i in idxs[1:]:
        if i == prev + 1:
            prev = i
        else:
            runs.append((start, prev + 1))
            start = prev = i
    runs.append((start, prev + 1))
    return tuple(runs)


def _round_up(x, m):
    return ((x + m - 1) // m) * m


def _pack_slab(named):
    """Pack named 2-D f32 arrays into one lane-padded slab (one DMA/encoder)."""
    offsets = {}
    row = 0
    max_c = 1
    for name, a in named:
        r, c = a.shape
        offsets[name] = (row, r, c)
        row += _round_up(r, 8)               # 8-align every block start
        max_c = max(max_c, c)
    lane = _round_up(max_c, 128)
    slab = np.zeros((_round_up(row, 8), lane), np.float32)
    for name, a in named:
        off, r, c = offsets[name]
        slab[off:off + r, :c] = np.asarray(a)
    return jnp.asarray(slab), offsets


def make_number_encoder_params(key, numbers_np_dim, number_embedding_dim):
    k1, k2 = jax.random.split(key)
    w1, b1 = _linear_params(k1, numbers_np_dim, number_embedding_dim)
    w2, b2 = _linear_params(k2, number_embedding_dim, number_embedding_dim)
    named = [
        ("ln_g", np.ones((1, numbers_np_dim), np.float32)),
        ("ln_b", np.zeros((1, numbers_np_dim), np.float32)),
        ("fc1_w", w1), ("fc1_b", b1),
        ("fc2_w", w2), ("fc2_b", b2),
    ]
    slab, offsets = _pack_slab(named)
    meta = {"kind": "number", "offsets": offsets, "out_dim": number_embedding_dim}
    return {"slab": slab, "meta": meta}


def make_item_encoder_params(key, feature_types, item_embedding_dim,
                             point_embedding_dim, cat_points_embedding_dim,
                             num_layers):
    coords_idxs, numbers_idxs = [], []
    for (l, r), t in feature_types.items():
        if t == "coords":
            coords_idxs.extend(range(l, r))
        elif t == "numbers":
            numbers_idxs.extend(range(l, r))
        else:
            raise RuntimeError("no such type of feature")
    coords_idxs = sorted(coords_idxs)
    numbers_idxs = sorted(numbers_idxs)

    assert point_embedding_dim % 4 == 0
    npts = len(coords_idxs) // 2
    pdim = point_embedding_dim
    c_in = npts * pdim
    ce_dim = npts * cat_points_embedding_dim
    n_dim = len(numbers_idxs)
    ne_dim = n_dim

    keys = jax.random.split(key, 6 + num_layers)

    # TODO(synk): LinearPointEncoder / FreqPointEncoder definitions are not in
    # the source; modeled as a shared per-point Linear(2 -> point_embedding_dim)
    # and only the normalize_coords=False path is implemented.
    pe_w, pe_b = _linear_params(keys[0], 2, pdim)
    pe_w_np = np.asarray(pe_w)
    w_big = np.zeros((2 * npts, c_in), np.float32)     # block-diagonal form
    for j in range(npts):
        w_big[2 * j:2 * j + 2, j * pdim:(j + 1) * pdim] = pe_w_np
    b_big = np.tile(np.asarray(pe_b), (1, npts))

    c_fc1_w, c_fc1_b = _linear_params(keys[1], c_in, ce_dim)
    c_fc2_w, c_fc2_b = _linear_params(keys[2], ce_dim, ce_dim)
    n_fc1_w, n_fc1_b = _linear_params(keys[3], n_dim, ne_dim)
    n_fc2_w, n_fc2_b = _linear_params(keys[4], ne_dim, ne_dim)
    m0_w, m0_b = _linear_params(keys[5], ce_dim + ne_dim, item_embedding_dim)
    layers = [_linear_params(keys[6 + i], item_embedding_dim, item_embedding_dim)
              for i in range(num_layers)]

    named = [
        ("pe_w", w_big), ("pe_b", b_big),
        ("c_ln_g", np.ones((1, c_in), np.float32)),
        ("c_ln_b", np.zeros((1, c_in), np.float32)),
        ("c_fc1_w", c_fc1_w), ("c_fc1_b", c_fc1_b),
        ("c_fc2_w", c_fc2_w), ("c_fc2_b", c_fc2_b),
        ("n_ln_g", np.ones((1, n_dim), np.float32)),
        ("n_ln_b", np.zeros((1, n_dim), np.float32)),
        ("n_fc1_w", n_fc1_w), ("n_fc1_b", n_fc1_b),
        ("n_fc2_w", n_fc2_w), ("n_fc2_b", n_fc2_b),
        # split mlp0 weight -> no concat needed in-kernel
        ("m0_w_c", m0_w[:ce_dim, :]), ("m0_w_n", m0_w[ce_dim:, :]),
        ("m0_b", m0_b),
    ]
    for i, (lw, lb) in enumerate(layers):
        named.append((f"layer{i}_w", lw))
        named.append((f"layer{i}_b", lb))

    slab, offsets = _pack_slab(named)
    meta = {
        "kind": "item",
        "coord_runs": _runs(coords_idxs),      # static Python slices
        "number_runs": _runs(numbers_idxs),
        "num_layers": num_layers,
        "offsets": offsets,
        "out_dim": item_embedding_dim,
    }
    return {"slab": slab, "meta": meta}


# ------------------------------ forward pass ----------------------------------

def gamble_encoder_forward(params, gamble_np_dict):
    tasks = []   # (out_key, encoder_params, x)
    if gamble_np_dict["crr"] is not None:
        tasks.append(("crr", params["courier"], gamble_np_dict["crr"]))
    tasks.append(("clm", params["claim"], gamble_np_dict["clm"]))
    if gamble_np_dict["ord"] is not None:
        tasks.append(("ord", params["order"], gamble_np_dict["ord"]))
    tasks.append(("gmb", params["gamble"], gamble_np_dict["gmb"]))

    xs = [x for (_, _, x) in tasks]
    slabs = [p["slab"] for (_, p, _) in tasks]
    metas = tuple(p["meta"] for (_, p, _) in tasks)
    out_shape = tuple(
        jax.ShapeDtypeStruct((x.shape[0], p["meta"]["out_dim"]), jnp.float32)
        for (_, p, x) in tasks)

    kernel = functools.partial(_gamble_fused_kernel, metas=metas)
    outs = pl.pallas_call(
        kernel,
        out_shape=out_shape,
        in_specs=[_VMEM_SPEC] * (2 * len(tasks)),
        out_specs=tuple([_VMEM_SPEC] * len(tasks)),
    )(*xs, *slabs)

    result = {"crr": None, "clm": None, "ord": None, "gmb": None}
    for (name, _, _), o in zip(tasks, outs):
        result[name] = o
    return result


# ----------------------------------- main --------------------------------------

if __name__ == "__main__":
    key = jax.random.PRNGKey(0)

    # config (kwargs of GambleEncoder)
    point_embedding_dim = 8
    cat_points_embedding_dim = 8
    num_layers = 1
    max_num_points_in_route = 2
    claim_embedding_dim = 32
    courier_order_embedding_dim = 32
    gamble_features_embedding_dim = 16

    # TODO(synk): Claim/Courier/Order/Gamble numpy feature layouts are not in the
    # source; synthetic feature layouts with the same structure are used.
    claim_features = {(0, 4): "coords", (4, 7): "numbers"}                  # 7 cols
    courier_features = {(0, 2): "coords", (2, 5): "numbers"}                # 5 cols
    order_coord_cols = 2 * (1 + max_num_points_in_route)                    # 6
    order_features = {(0, order_coord_cols): "coords",
                      (order_coord_cols, order_coord_cols + 4): "numbers"}  # 10 cols
    gamble_feature_size = 5

    kc, kcr, ko, kg, kd = jax.random.split(key, 5)
    params = {
        "claim": make_item_encoder_params(
            kc, claim_features, claim_embedding_dim,
            point_embedding_dim * 2, cat_points_embedding_dim, num_layers),
        "courier": make_item_encoder_params(
            kcr, courier_features, courier_order_embedding_dim,
            point_embedding_dim * 1, cat_points_embedding_dim, num_layers),
        "order": make_item_encoder_params(
            ko, order_features, courier_order_embedding_dim,
            point_embedding_dim * (1 + max_num_points_in_route),
            cat_points_embedding_dim, num_layers),
        "gamble": make_number_encoder_params(
            kg, gamble_feature_size, gamble_features_embedding_dim),
    }

    k1, k2, k3, k4 = jax.random.split(kd, 4)
    gamble_np_dict = {
        "crr": jax.random.normal(k1, (3, 5), jnp.float32),
        "clm": jax.random.normal(k2, (4, 7), jnp.float32),
        "ord": jax.random.normal(k3, (2, 10), jnp.float32),
        "gmb": jax.random.normal(k4, (2, gamble_feature_size), jnp.float32),
    }

    out = gamble_encoder_forward(params, gamble_np_dict)
    out = jax.block_until_ready(out)

    assert out["crr"].shape == (3, courier_order_embedding_dim)
    assert out["clm"].shape == (4, claim_embedding_dim)
    assert out["ord"].shape == (2, courier_order_embedding_dim)
    assert out["gmb"].shape == (2, gamble_features_embedding_dim)
    assert all(v.dtype == jnp.float32 for v in out.values())
    assert all(bool(jnp.all(jnp.isfinite(v))) for v in out.values())

    print("KERNEL_OK")
</pallas_src>

<mosaic_0001>
module attributes {stable_mosaic.version = 11 : i64} {
  func.func @_gamble_fused_kernel(%arg0: memref<3x5xf32, #tpu.memory_space<vmem>>, %arg1: memref<4x7xf32, #tpu.memory_space<vmem>>, %arg2: memref<2x10xf32, #tpu.memory_space<vmem>>, %arg3: memref<2x5xf32, #tpu.memory_space<vmem>>, %arg4: memref<176x128xf32, #tpu.memory_space<vmem>>, %arg5: memref<216x128xf32, #tpu.memory_space<vmem>>, %arg6: memref<272x128xf32, #tpu.memory_space<vmem>>, %arg7: memref<56x128xf32, #tpu.memory_space<vmem>>, %arg8: memref<3x32xf32, #tpu.memory_space<vmem>>, %arg9: memref<4x32xf32, #tpu.memory_space<vmem>>, %arg10: memref<2x32xf32, #tpu.memory_space<vmem>>, %arg11: memref<2x16xf32, #tpu.memory_space<vmem>>) attributes {dimension_semantics = [], scalar_prefetch = 0 : i64, scratch_operands = 0 : i64, tpu.core_type = #tpu.core_type<tc>} {
    %c0 = arith.constant 0 : index
    %c0_0 = arith.constant 0 : index
    %0 = vector.load %arg0[%c0, %c0_0] : memref<3x5xf32, #tpu.memory_space<vmem>>, vector<3x5xf32>
    %1 = vector.extract_strided_slice %0 {offsets = [0, 0], sizes = [3, 2], strides = [1, 1]} : vector<3x5xf32> to vector<3x2xf32>
    %2 = vector.extract_strided_slice %0 {offsets = [0, 2], sizes = [3, 3], strides = [1, 1]} : vector<3x5xf32> to vector<3x3xf32>
    %c0_1 = arith.constant 0 : index
    %c0_2 = arith.constant 0 : index
    %3 = vector.load %arg4[%c0_1, %c0_2] : memref<176x128xf32, #tpu.memory_space<vmem>>, vector<2x8xf32>
    %cst = arith.constant dense<0.000000e+00> : vector<3x8xf32>
    %4 = tpu.matmul %1, %3, %cst {dimension_numbers = #tpu.dot_dimension_numbers<[1], [0], [0], [1], [0, 0, 1, 1], [], []>} : vector<3x2xf32>, vector<2x8xf32>, vector<3x8xf32> -> vector<3x8xf32>
    %c8 = arith.constant 8 : index
    %c0_3 = arith.constant 0 : index
    %5 = vector.load %arg4[%c8, %c0_3] : memref<176x128xf32, #tpu.memory_space<vmem>>, vector<1x8xf32>
    %6 = vector.broadcast %5 : vector<1x8xf32> to vector<3x8xf32>
    %7 = arith.addf %4, %6 : vector<3x8xf32>
    %c16 = arith.constant 16 : index
    %c0_4 = arith.constant 0 : index
    %8 = vector.load %arg4[%c16, %c0_4] : memref<176x128xf32, #tpu.memory_space<vmem>>, vector<1x8xf32>
    %c24 = arith.constant 24 : index
    %c0_5 = arith.constant 0 : index
    %9 = vector.load %arg4[%c24, %c0_5] : memref<176x128xf32, #tpu.memory_space<vmem>>, vector<1x8xf32>
    %cst_6 = arith.constant dense<0.000000e+00> : vector<3xf32>
    %10 = vector.multi_reduction <add>, %7, %cst_6 [1] : vector<3x8xf32> to vector<3xf32>
    %11 = vector.shape_cast %10 : vector<3xf32> to vector<3x1xf32>
    %cst_7 = arith.constant 8.000000e+00 : f32
    %12 = vector.broadcast %cst_7 : f32 to vector<3x1xf32>
    %13 = arith.divf %11, %12 : vector<3x1xf32>
    %14 = arith.mulf %7, %7 : vector<3x8xf32>
    %cst_8 = arith.constant dense<0.000000e+00> : vector<3xf32>
    %15 = vector.multi_reduction <add>, %14, %cst_8 [1] : vector<3x8xf32> to vector<3xf32>
    %16 = vector.shape_cast %15 : vector<3xf32> to vector<3x1xf32>
    %cst_9 = arith.constant 8.000000e+00 : f32
    %17 = vector.broadcast %cst_9 : f32 to vector<3x1xf32>
    %18 = arith.divf %16, %17 : vector<3x1xf32>
    %19 = arith.mulf %13, %13 : vector<3x1xf32>
    %20 = arith.subf %18, %19 : vector<3x1xf32>
    %cst_10 = arith.constant 0.000000e+00 : f32
    %21 = vector.broadcast %cst_10 : f32 to vector<3x1xf32>
    %22 = arith.maximumf %20, %21 : vector<3x1xf32>
    %23 = vector.broadcast %13 : vector<3x1xf32> to vector<3x8xf32>
    %24 = arith.subf %7, %23 : vector<3x8xf32>
    %cst_11 = arith.constant 9.99999974E-6 : f32
    %25 = vector.broadcast %cst_11 : f32 to vector<3x1xf32>
    %26 = arith.addf %22, %25 : vector<3x1xf32>
    %27 = math.rsqrt %26 : vector<3x1xf32>
    %28 = vector.broadcast %27 : vector<3x1xf32> to vector<3x8xf32>
    %29 = arith.mulf %24, %28 : vector<3x8xf32>
    %30 = vector.broadcast %8 : vector<1x8xf32> to vector<3x8xf32>
    %31 = arith.mulf %29, %30 : vector<3x8xf32>
    %32 = vector.broadcast %9 : vector<1x8xf32> to vector<3x8xf32>
    %33 = arith.addf %31, %32 : vector<3x8xf32>
    %c32 = arith.constant 32 : index
    %c0_12 = arith.constant 0 : index
    %34 = vector.load %arg4[%c32, %c0_12] : memref<176x128xf32, #tpu.memory_space<vmem>>, vector<8x8xf32>
    %cst_13 = arith.constant dense<0.000000e+00> : vector<3x8xf32>
    %35 = tpu.matmul %33, %34, %cst_13 {dimension_numbers = #tpu.dot_dimension_numbers<[1], [0], [0], [1], [0, 0, 1, 1], [], []>} : vector<3x8xf32>, vector<8x8xf32>, vector<3x8xf32> -> vector<3x8xf32>
    %c40 = arith.constant 40 : index
    %c0_14 = arith.constant 0 : index
    %36 = vector.load %arg4[%c40, %c0_14] : memref<176x128xf32, #tpu.memory_space<vmem>>, vector<1x8xf32>
    %37 = vector.broadcast %36 : vector<1x8xf32> to vector<3x8xf32>
    %38 = arith.addf %35, %37 : vector<3x8xf32>
    %cst_15 = arith.constant 0.000000e+00 : f32
    %39 = vector.broadcast %cst_15 : f32 to vector<3x8xf32>
    %40 = arith.cmpf oge, %38, %39 : vector<3x8xf32>
    %cst_16 = arith.constant 0.00999999977 : f32
    %41 = vector.broadcast %cst_16 : f32 to vector<3x8xf32>
    %42 = arith.mulf %41, %38 : vector<3x8xf32>
    %43 = arith.select %40, %38, %42 : vector<3x8xi1>, vector<3x8xf32>
    %c48 = arith.constant 48 : index
    %c0_17 = arith.constant 0 : index
    %44 = vector.load %arg4[%c48, %c0_17] : memref<176x128xf32, #tpu.memory_space<vmem>>, vector<8x8xf32>
    %cst_18 = arith.constant dense<0.000000e+00> : vector<3x8xf32>
    %45 = tpu.matmul %43, %44, %cst_18 {dimension_numbers = #tpu.dot_dimension_numbers<[1], [0], [0], [1], [0, 0, 1, 1], [], []>} : vector<3x8xf32>, vector<8x8xf32>, vector<3x8xf32> -> vector<3x8xf32>
    %c56 = arith.constant 56 : index
    %c0_19 = arith.constant 0 : index
    %46 = vector.load %arg4[%c56, %c0_19] : memref<176x128xf32, #tpu.memory_space<vmem>>, vector<1x8xf32>
    %47 = vector.broadcast %46 : vector<1x8xf32> to vector<3x8xf32>
    %48 = arith.addf %45, %47 : vector<3x8xf32>
    %cst_20 = arith.constant 0.000000e+00 : f32
    %49 = vector.broadcast %cst_20 : f32 to vector<3x8xf32>
    %50 = arith.cmpf oge, %48, %49 : vector<3x8xf32>
    %cst_21 = arith.constant 0.00999999977 : f32
    %51 = vector.broadcast %cst_21 : f32 to vector<3x8xf32>
    %52 = arith.mulf %51, %48 : vector<3x8xf32>
    %53 = arith.select %50, %48, %52 : vector<3x8xi1>, vector<3x8xf32>
    %c64 = arith.constant 64 : index
    %c0_22 = arith.constant 0 : index
    %54 = vector.load %arg4[%c64, %c0_22] : memref<176x128xf32, #tpu.memory_space<vmem>>, vector<1x3xf32>
    %c72 = arith.constant 72 : index
    %c0_23 = arith.constant 0 : index
    %55 = vector.load %arg4[%c72, %c0_23] : memref<176x128xf32, #tpu.memory_space<vmem>>, vector<1x3xf32>
    %cst_24 = arith.constant dense<0.000000e+00> : vector<3xf32>
    %56 = vector.multi_reduction <add>, %2, %cst_24 [1] : vector<3x3xf32> to vector<3xf32>
    %57 = vector.shape_cast %56 : vector<3xf32> to vector<3x1xf32>
    %cst_25 = arith.constant 3.000000e+00 : f32
    %58 = vector.broadcast %cst_25 : f32 to vector<3x1xf32>
    %59 = arith.divf %57, %58 : vector<3x1xf32>
    %60 = arith.mulf %2, %2 : vector<3x3xf32>
    %cst_26 = arith.constant dense<0.000000e+00> : vector<3xf32>
    %61 = vector.multi_reduction <add>, %60, %cst_26 [1] : vector<3x3xf32> to vector<3xf32>
    %62 = vector.shape_cast %61 : vector<3xf32> to vector<3x1xf32>
    %cst_27 = arith.constant 3.000000e+00 : f32
    %63 = vector.broadcast %cst_27 : f32 to vector<3x1xf32>
    %64 = arith.divf %62, %63 : vector<3x1xf32>
    %65 = arith.mulf %59, %59 : vector<3x1xf32>
    %66 = arith.subf %64, %65 : vector<3x1xf32>
    %cst_28 = arith.constant 0.000000e+00 : f32
    %67 = vector.broadcast %cst_28 : f32 to vector<3x1xf32>
    %68 = arith.maximumf %66, %67 : vector<3x1xf32>
    %69 = vector.broadcast %59 : vector<3x1xf32> to vector<3x3xf32>
    %70 = arith.subf %2, %69 : vector<3x3xf32>
    %cst_29 = arith.constant 9.99999974E-6 : f32
    %71 = vector.broadcast %cst_29 : f32 to vector<3x1xf32>
    %72 = arith.addf %68, %71 : vector<3x1xf32>
    %73 = math.rsqrt %72 : vector<3x1xf32>
    %74 = vector.broadcast %73 : vector<3x1xf32> to vector<3x3xf32>
    %75 = arith.mulf %70, %74 : vector<3x3xf32>
    %76 = vector.broadcast %54 : vector<1x3xf32> to vector<3x3xf32>
    %77 = arith.mulf %75, %76 : vector<3x3xf32>
    %78 = vector.broadcast %55 : vector<1x3xf32> to vector<3x3xf32>
    %79 = arith.addf %77, %78 : vector<3x3xf32>
    %c80 = arith.constant 80 : index
    %c0_30 = arith.constant 0 : index
    %80 = vector.load %arg4[%c80, %c0_30] : memref<176x128xf32, #tpu.memory_space<vmem>>, vector<3x3xf32>
    %cst_31 = arith.constant dense<0.000000e+00> : vector<3x3xf32>
    %81 = tpu.matmul %79, %80, %cst_31 {dimension_numbers = #tpu.dot_dimension_numbers<[1], [0], [0], [1], [0, 0, 1, 1], [], []>} : vector<3x3xf32>, vector<3x3xf32>, vector<3x3xf32> -> vector<3x3xf32>
    %c88 = arith.constant 88 : index
    %c0_32 = arith.constant 0 : index
    %82 = vector.load %arg4[%c88, %c0_32] : memref<176x128xf32, #tpu.memory_space<vmem>>, vector<1x3xf32>
    %83 = vector.broadcast %82 : vector<1x3xf32> to vector<3x3xf32>
    %84 = arith.addf %81, %83 : vector<3x3xf32>
    %cst_33 = arith.constant 0.000000e+00 : f32
    %85 = vector.broadcast %cst_33 : f32 to vector<3x3xf32>
    %86 = arith.cmpf oge, %84, %85 : vector<3x3xf32>
    %cst_34 = arith.constant 0.00999999977 : f32
    %87 = vector.broadcast %cst_34 : f32 to vector<3x3xf32>
    %88 = arith.mulf %87, %84 : vector<3x3xf32>
    %89 = arith.select %86, %84, %88 : vector<3x3xi1>, vector<3x3xf32>
    %c96 = arith.constant 96 : index
    %c0_35 = arith.constant 0 : index
    %90 = vector.load %arg4[%c96, %c0_35] : memref<176x128xf32, #tpu.memory_space<vmem>>, vector<3x3xf32>
    %cst_36 = arith.constant dense<0.000000e+00> : vector<3x3xf32>
    %91 = tpu.matmul %89, %90, %cst_36 {dimension_numbers = #tpu.dot_dimension_numbers<[1], [0], [0], [1], [0, 0, 1, 1], [], []>} : vector<3x3xf32>, vector<3x3xf32>, vector<3x3xf32> -> vector<3x3xf32>
    %c104 = arith.constant 104 : index
    %c0_37 = arith.constant 0 : index
    %92 = vector.load %arg4[%c104, %c0_37] : memref<176x128xf32, #tpu.memory_space<vmem>>, vector<1x3xf32>
    %93 = vector.broadcast %92 : vector<1x3xf32> to vector<3x3xf32>
    %94 = arith.addf %91, %93 : vector<3x3xf32>
    %c112 = arith.constant 112 : index
    %c0_38 = arith.constant 0 : index
    %95 = vector.load %arg4[%c112, %c0_38] : memref<176x128xf32, #tpu.memory_space<vmem>>, vector<8x32xf32>
    %cst_39 = arith.constant dense<0.000000e+00> : vector<3x32xf32>
    %96 = tpu.matmul %53, %95, %cst_39 {dimension_numbers = #tpu.dot_dimension_numbers<[1], [0], [0], [1], [0, 0, 1, 1], [], []>} : vector<3x8xf32>, vector<8x32xf32>, vector<3x32xf32> -> vector<3x32xf32>
    %c120 = arith.constant 120 : index
    %c0_40 = arith.constant 0 : index
    %97 = vector.load %arg4[%c120, %c0_40] : memref<176x128xf32, #tpu.memory_space<vmem>>, vector<3x32xf32>
    %cst_41 = arith.constant dense<0.000000e+00> : vector<3x32xf32>
    %98 = tpu.matmul %94, %97, %cst_41 {dimension_numbers = #tpu.dot_dimension_numbers<[1], [0], [0], [1], [0, 0, 1, 1], [], []>} : vector<3x3xf32>, vector<3x32xf32>, vector<3x32xf32> -> vector<3x32xf32>
    %99 = arith.addf %96, %98 : vector<3x32xf32>
    %c128 = arith.constant 128 : index
    %c0_42 = arith.constant 0 : index
    %100 = vector.load %arg4[%c128, %c0_42] : memref<176x128xf32, #tpu.memory_space<vmem>>, vector<1x32xf32>
    %101 = vector.broadcast %100 : vector<1x32xf32> to vector<3x32xf32>
    %102 = arith.addf %99, %101 : vector<3x32xf32>
    %cst_43 = arith.constant 0.000000e+00 : f32
    %103 = vector.broadcast %cst_43 : f32 to vector<3x32xf32>
    %104 = arith.cmpf oge, %102, %103 : vector<3x32xf32>
    %cst_44 = arith.constant 0.00999999977 : f32
    %105 = vector.broadcast %cst_44 : f32 to vector<3x32xf32>
    %106 = arith.mulf %105, %102 : vector<3x32xf32>
    %107 = arith.select %104, %102, %106 : vector<3x32xi1>, vector<3x32xf32>
    %c136 = arith.constant 136 : index
    %c0_45 = arith.constant 0 : index
    %108 = vector.load %arg4[%c136, %c0_45] : memref<176x128xf32, #tpu.memory_space<vmem>>, vector<32x32xf32>
    %cst_46 = arith.constant dense<0.000000e+00> : vector<3x32xf32>
    %109 = tpu.matmul %107, %108, %cst_46 {dimension_numbers = #tpu.dot_dimension_numbers<[1], [0], [0], [1], [0, 0, 1, 1], [], []>} : vector<3x32xf32>, vector<32x32xf32>, vector<3x32xf32> -> vector<3x32xf32>
    %c168 = arith.constant 168 : index
    %c0_47 = arith.constant 0 : index
    %110 = vector.load %arg4[%c168, %c0_47] : memref<176x128xf32, #tpu.memory_space<vmem>>, vector<1x32xf32>
    %111 = vector.broadcast %110 : vector<1x32xf32> to vector<3x32xf32>
    %112 = arith.addf %109, %111 : vector<3x32xf32>
    %c0_48 = arith.constant 0 : index
    %c0_49 = arith.constant 0 : index
    %113 = vector.load %arg8[%c0_48, %c0_49] : memref<3x32xf32, #tpu.memory_space<vmem>>, vector<3x32xf32>
    tpu.vector_store %arg8[%c0_48, %c0_49], %112 {strides = array<i32>} : memref<3x32xf32, #tpu.memory_space<vmem>>, vector<3x32xf32>,
    %c0_50 = arith.constant 0 : index
    %c0_51 = arith.constant 0 : index
    %114 = vector.load %arg1[%c0_50, %c0_51] : memref<4x7xf32, #tpu.memory_space<vmem>>, vector<4x7xf32>
    %115 = vector.extract_strided_slice %114 {offsets = [0, 0], sizes = [4, 4], strides = [1, 1]} : vector<4x7xf32> to vector<4x4xf32>
    %116 = vector.extract_strided_slice %114 {offsets = [0, 4], sizes = [4, 3], strides = [1, 1]} : vector<4x7xf32> to vector<4x3xf32>
    %c0_52 = arith.constant 0 : index
    %c0_53 = arith.constant 0 : index
    %117 = vector.load %arg5[%c0_52, %c0_53] : memref<216x128xf32, #tpu.memory_space<vmem>>, vector<4x32xf32>
    %cst_54 = arith.constant dense<0.000000e+00> : vector<4x32xf32>
    %118 = tpu.matmul %115, %117, %cst_54 {dimension_numbers = #tpu.dot_dimension_numbers<[1], [0], [0], [1], [0, 0, 1, 1], [], []>} : vector<4x4xf32>, vector<4x32xf32>, vector<4x32xf32> -> vector<4x32xf32>
    %c8_55 = arith.constant 8 : index
    %c0_56 = arith.constant 0 : index
    %119 = vector.load %arg5[%c8_55, %c0_56] : memref<216x128xf32, #tpu.memory_space<vmem>>, vector<1x32xf32>
    %120 = vector.broadcast %119 : vector<1x32xf32> to vector<4x32xf32>
    %121 = arith.addf %118, %120 : vector<4x32xf32>
    %c16_57 = arith.constant 16 : index
    %c0_58 = arith.constant 0 : index
    %122 = vector.load %arg5[%c16_57, %c0_58] : memref<216x128xf32, #tpu.memory_space<vmem>>, vector<1x32xf32>
    %c24_59 = arith.constant 24 : index
    %c0_60 = arith.constant 0 : index
    %123 = vector.load %arg5[%c24_59, %c0_60] : memref<216x128xf32, #tpu.memory_space<vmem>>, vector<1x32xf32>
    %cst_61 = arith.constant dense<0.000000e+00> : vector<4xf32>
    %124 = vector.multi_reduction <add>, %121, %cst_61 [1] : vector<4x32xf32> to vector<4xf32>
    %125 = vector.shape_cast %124 : vector<4xf32> to vector<4x1xf32>
    %cst_62 = arith.constant 3.200000e+01 : f32
    %126 = vector.broadcast %cst_62 : f32 to vector<4x1xf32>
    %127 = arith.divf %125, %126 : vector<4x1xf32>
    %128 = arith.mulf %121, %121 : vector<4x32xf32>
    %cst_63 = arith.constant dense<0.000000e+00> : vector<4xf32>
    %129 = vector.multi_reduction <add>, %128, %cst_63 [1] : vector<4x32xf32> to vector<4xf32>
    %130 = vector.shape_cast %129 : vector<4xf32> to vector<4x1xf32>
    %cst_64 = arith.constant 3.200000e+01 : f32
    %131 = vector.broadcast %cst_64 : f32 to vector<4x1xf32>
    %132 = arith.divf %130, %131 : vector<4x1xf32>
    %133 = arith.mulf %127, %127 : vector<4x1xf32>
    %134 = arith.subf %132, %133 : vector<4x1xf32>
    %cst_65 = arith.constant 0.000000e+00 : f32
    %135 = vector.broadcast %cst_65 : f32 to vector<4x1xf32>
    %136 = arith.maximumf %134, %135 : vector<4x1xf32>
    %137 = vector.broadcast %127 : vector<4x1xf32> to vector<4x32xf32>
    %138 = arith.subf %121, %137 : vector<4x32xf32>
    %cst_66 = arith.constant 9.99999974E-6 : f32
    %139 = vector.broadcast %cst_66 : f32 to vector<4x1xf32>
    %140 = arith.addf %136, %139 : vector<4x1xf32>
    %141 = math.rsqrt %140 : vector<4x1xf32>
    %142 = vector.broadcast %141 : vector<4x1xf32> to vector<4x32xf32>
    %143 = arith.mulf %138, %142 : vector<4x32xf32>
    %144 = vector.broadcast %122 : vector<1x32xf32> to vector<4x32xf32>
    %145 = arith.mulf %143, %144 : vector<4x32xf32>
    %146 = vector.broadcast %123 : vector<1x32xf32> to vector<4x32xf32>
    %147 = arith.addf %145, %146 : vector<4x32xf32>
    %c32_67 = arith.constant 32 : index
    %c0_68 = arith.constant 0 : index
    %148 = vector.load %arg5[%c32_67, %c0_68] : memref<216x128xf32, #tpu.memory_space<vmem>>, vector<32x16xf32>
    %cst_69 = arith.constant dense<0.000000e+00> : vector<4x16xf32>
    %149 = tpu.matmul %147, %148, %cst_69 {dimension_numbers = #tpu.dot_dimension_numbers<[1], [0], [0], [1], [0, 0, 1, 1], [], []>} : vector<4x32xf32>, vector<32x16xf32>, vector<4x16xf32> -> vector<4x16xf32>
    %c64_70 = arith.constant 64 : index
    %c0_71 = arith.constant 0 : index
    %150 = vector.load %arg5[%c64_70, %c0_71] : memref<216x128xf32, #tpu.memory_space<vmem>>, vector<1x16xf32>
    %151 = vector.broadcast %150 : vector<1x16xf32> to vector<4x16xf32>
    %152 = arith.addf %149, %151 : vector<4x16xf32>
    %cst_72 = arith.constant 0.000000e+00 : f32
    %153 = vector.broadcast %cst_72 : f32 to vector<4x16xf32>
    %154 = arith.cmpf oge, %152, %153 : vector<4x16xf32>
    %cst_73 = arith.constant 0.00999999977 : f32
    %155 = vector.broadcast %cst_73 : f32 to vector<4x16xf32>
    %156 = arith.mulf %155, %152 : vector<4x16xf32>
    %157 = arith.select %154, %152, %156 : vector<4x16xi1>, vector<4x16xf32>
    %c72_74 = arith.constant 72 : index
    %c0_75 = arith.constant 0 : index
    %158 = vector.load %arg5[%c72_74, %c0_75] : memref<216x128xf32, #tpu.memory_space<vmem>>, vector<16x16xf32>
    %cst_76 = arith.constant dense<0.000000e+00> : vector<4x16xf32>
    %159 = tpu.matmul %157, %158, %cst_76 {dimension_numbers = #tpu.dot_dimension_numbers<[1], [0], [0], [1], [0, 0, 1, 1], [], []>} : vector<4x16xf32>, vector<16x16xf32>, vector<4x16xf32> -> vector<4x16xf32>
    %c88_77 = arith.constant 88 : index
    %c0_78 = arith.constant 0 : index
    %160 = vector.load %arg5[%c88_77, %c0_78] : memref<216x128xf32, #tpu.memory_space<vmem>>, vector<1x16xf32>
    %161 = vector.broadcast %160 : vector<1x16xf32> to vector<4x16xf32>
    %162 = arith.addf %159, %161 : vector<4x16xf32>
    %cst_79 = arith.constant 0.000000e+00 : f32
    %163 = vector.broadcast %cst_79 : f32 to vector<4x16xf32>
    %164 = arith.cmpf oge, %162, %163 : vector<4x16xf32>
    %cst_80 = arith.constant 0.00999999977 : f32
    %165 = vector.broadcast %cst_80 : f32 to vector<4x16xf32>
    %166 = arith.mulf %165, %162 : vector<4x16xf32>
    %167 = arith.select %164, %162, %166 : vector<4x16xi1>, vector<4x16xf32>
    %c96_81 = arith.constant 96 : index
    %c0_82 = arith.constant 0 : index
    %168 = vector.load %arg5[%c96_81, %c0_82] : memref<216x128xf32, #tpu.memory_space<vmem>>, vector<1x3xf32>
    %c104_83 = arith.constant 104 : index
    %c0_84 = arith.constant 0 : index
    %169 = vector.load %arg5[%c104_83, %c0_84] : memref<216x128xf32, #tpu.memory_space<vmem>>, vector<1x3xf32>
    %cst_85 = arith.constant dense<0.000000e+00> : vector<4xf32>
    %170 = vector.multi_reduction <add>, %116, %cst_85 [1] : vector<4x3xf32> to vector<4xf32>
    %171 = vector.shape_cast %170 : vector<4xf32> to vector<4x1xf32>
    %cst_86 = arith.constant 3.000000e+00 : f32
    %172 = vector.broadcast %cst_86 : f32 to vector<4x1xf32>
    %173 = arith.divf %171, %172 : vector<4x1xf32>
    %174 = arith.mulf %116, %116 : vector<4x3xf32>
    %cst_87 = arith.constant dense<0.000000e+00> : vector<4xf32>
    %175 = vector.multi_reduction <add>, %174, %cst_87 [1] : vector<4x3xf32> to vector<4xf32>
    %176 = vector.shape_cast %175 : vector<4xf32> to vector<4x1xf32>
    %cst_88 = arith.constant 3.000000e+00 : f32
    %177 = vector.broadcast %cst_88 : f32 to vector<4x1xf32>
    %178 = arith.divf %176, %177 : vector<4x1xf32>
    %179 = arith.mulf %173, %173 : vector<4x1xf32>
    %180 = arith.subf %178, %179 : vector<4x1xf32>
    %cst_89 = arith.constant 0.000000e+00 : f32
    %181 = vector.broadcast %cst_89 : f32 to vector<4x1xf32>
    %182 = arith.maximumf %180, %181 : vector<4x1xf32>
    %183 = vector.broadcast %173 : vector<4x1xf32> to vector<4x3xf32>
    %184 = arith.subf %116, %183 : vector<4x3xf32>
    %cst_90 = arith.constant 9.99999974E-6 : f32
    %185 = vector.broadcast %cst_90 : f32 to vector<4x1xf32>
    %186 = arith.addf %182, %185 : vector<4x1xf32>
    %187 = math.rsqrt %186 : vector<4x1xf32>
    %188 = vector.broadcast %187 : vector<4x1xf32> to vector<4x3xf32>
    %189 = arith.mulf %184, %188 : vector<4x3xf32>
    %190 = vector.broadcast %168 : vector<1x3xf32> to vector<4x3xf32>
    %191 = arith.mulf %189, %190 : vector<4x3xf32>
    %192 = vector.broadcast %169 : vector<1x3xf32> to vector<4x3xf32>
    %193 = arith.addf %191, %192 : vector<4x3xf32>
    %c112_91 = arith.constant 112 : index
    %c0_92 = arith.constant 0 : index
    %194 = vector.load %arg5[%c112_91, %c0_92] : memref<216x128xf32, #tpu.memory_space<vmem>>, vector<3x3xf32>
    %cst_93 = arith.constant dense<0.000000e+00> : vector<4x3xf32>
    %195 = tpu.matmul %193, %194, %cst_93 {dimension_numbers = #tpu.dot_dimension_numbers<[1], [0], [0], [1], [0, 0, 1, 1], [], []>} : vector<4x3xf32>, vector<3x3xf32>, vector<4x3xf32> -> vector<4x3xf32>
    %c120_94 = arith.constant 120 : index
    %c0_95 = arith.constant 0 : index
    %196 = vector.load %arg5[%c120_94, %c0_95] : memref<216x128xf32, #tpu.memory_space<vmem>>, vector<1x3xf32>
    %197 = vector.broadcast %196 : vector<1x3xf32> to vector<4x3xf32>
    %198 = arith.addf %195, %197 : vector<4x3xf32>
    %cst_96 = arith.constant 0.000000e+00 : f32
    %199 = vector.broadcast %cst_96 : f32 to vector<4x3xf32>
    %200 = arith.cmpf oge, %198, %199 : vector<4x3xf32>
    %cst_97 = arith.constant 0.00999999977 : f32
    %201 = vector.broadcast %cst_97 : f32 to vector<4x3xf32>
    %202 = arith.mulf %201, %198 : vector<4x3xf32>
    %203 = arith.select %200, %198, %202 : vector<4x3xi1>, vector<4x3xf32>
    %c128_98 = arith.constant 128 : index
    %c0_99 = arith.constant 0 : index
    %204 = vector.load %arg5[%c128_98, %c0_99] : memref<216x128xf32, #tpu.memory_space<vmem>>, vector<3x3xf32>
    %cst_100 = arith.constant dense<0.000000e+00> : vector<4x3xf32>
    %205 = tpu.matmul %203, %204, %cst_100 {dimension_numbers = #tpu.dot_dimension_numbers<[1], [0], [0], [1], [0, 0, 1, 1], [], []>} : vector<4x3xf32>, vector<3x3xf32>, vector<4x3xf32> -> vector<4x3xf32>
    %c136_101 = arith.constant 136 : index
    %c0_102 = arith.constant 0 : index
    %206 = vector.load %arg5[%c136_101, %c0_102] : memref<216x128xf32, #tpu.memory_space<vmem>>, vector<1x3xf32>
    %207 = vector.broadcast %206 : vector<1x3xf32> to vector<4x3xf32>
    %208 = arith.addf %205, %207 : vector<4x3xf32>
    %c144 = arith.constant 144 : index
    %c0_103 = arith.constant 0 : index
    %209 = vector.load %arg5[%c144, %c0_103] : memref<216x128xf32, #tpu.memory_space<vmem>>, vector<16x32xf32>
    %cst_104 = arith.constant dense<0.000000e+00> : vector<4x32xf32>
    %210 = tpu.matmul %167, %209, %cst_104 {dimension_numbers = #tpu.dot_dimension_numbers<[1], [0], [0], [1], [0, 0, 1, 1], [], []>} : vector<4x16xf32>, vector<16x32xf32>, vector<4x32xf32> -> vector<4x32xf32>
    %c160 = arith.constant 160 : index
    %c0_105 = arith.constant 0 : index
    %211 = vector.load %arg5[%c160, %c0_105] : memref<216x128xf32, #tpu.memory_space<vmem>>, vector<3x32xf32>
    %cst_106 = arith.constant dense<0.000000e+00> : vector<4x32xf32>
    %212 = tpu.matmul %208, %211, %cst_106 {dimension_numbers = #tpu.dot_dimension_numbers<[1], [0], [0], [1], [0, 0, 1, 1], [], []>} : vector<4x3xf32>, vector<3x32xf32>, vector<4x32xf32> -> vector<4x32xf32>
    %213 = arith.addf %210, %212 : vector<4x32xf32>
    %c168_107 = arith.constant 168 : index
    %c0_108 = arith.constant 0 : index
    %214 = vector.load %arg5[%c168_107, %c0_108] : memref<216x128xf32, #tpu.memory_space<vmem>>, vector<1x32xf32>
    %215 = vector.broadcast %214 : vector<1x32xf32> to vector<4x32xf32>
    %216 = arith.addf %213, %215 : vector<4x32xf32>
    %cst_109 = arith.constant 0.000000e+00 : f32
    %217 = vector.broadcast %cst_109 : f32 to vector<4x32xf32>
    %218 = arith.cmpf oge, %216, %217 : vector<4x32xf32>
    %cst_110 = arith.constant 0.00999999977 : f32
    %219 = vector.broadcast %cst_110 : f32 to vector<4x32xf32>
    %220 = arith.mulf %219, %216 : vector<4x32xf32>
    %221 = arith.select %218, %216, %220 : vector<4x32xi1>, vector<4x32xf32>
    %c176 = arith.constant 176 : index
    %c0_111 = arith.constant 0 : index
    %222 = vector.load %arg5[%c176, %c0_111] : memref<216x128xf32, #tpu.memory_space<vmem>>, vector<32x32xf32>
    %cst_112 = arith.constant dense<0.000000e+00> : vector<4x32xf32>
    %223 = tpu.matmul %221, %222, %cst_112 {dimension_numbers = #tpu.dot_dimension_numbers<[1], [0], [0], [1], [0, 0, 1, 1], [], []>} : vector<4x32xf32>, vector<32x32xf32>, vector<4x32xf32> -> vector<4x32xf32>
    %c208 = arith.constant 208 : index
    %c0_113 = arith.constant 0 : index
    %224 = vector.load %arg5[%c208, %c0_113] : memref<216x128xf32, #tpu.memory_space<vmem>>, vector<1x32xf32>
    %225 = vector.broadcast %224 : vector<1x32xf32> to vector<4x32xf32>
    %226 = arith.addf %223, %225 : vector<4x32xf32>
    %c0_114 = arith.constant 0 : index
    %c0_115 = arith.constant 0 : index
    %227 = vector.load %arg9[%c0_114, %c0_115] : memref<4x32xf32, #tpu.memory_space<vmem>>, vector<4x32xf32>
    tpu.vector_store %arg9[%c0_114, %c0_115], %226 {strides = array<i32>} : memref<4x32xf32, #tpu.memory_space<vmem>>, vector<4x32xf32>,
    %c0_116 = arith.constant 0 : index
    %c0_117 = arith.constant 0 : index
    %228 = vector.load %arg2[%c0_116, %c0_117] : memref<2x10xf32, #tpu.memory_space<vmem>>, vector<2x10xf32>
    %229 = vector.extract_strided_slice %228 {offsets = [0, 0], sizes = [2, 6], strides = [1, 1]} : vector<2x10xf32> to vector<2x6xf32>
    %230 = vector.extract_strided_slice %228 {offsets = [0, 6], sizes = [2, 4], strides = [1, 1]} : vector<2x10xf32> to vector<2x4xf32>
    %c0_118 = arith.constant 0 : index
    %c0_119 = arith.constant 0 : index
    %231 = vector.load %arg6[%c0_118, %c0_119] : memref<272x128xf32, #tpu.memory_space<vmem>>, vector<6x72xf32>
    %cst_120 = arith.constant dense<0.000000e+00> : vector<2x72xf32>
    %232 = tpu.matmul %229, %231, %cst_120 {dimension_numbers = #tpu.dot_dimension_numbers<[1], [0], [0], [1], [0, 0, 1, 1], [], []>} : vector<2x6xf32>, vector<6x72xf32>, vector<2x72xf32> -> vector<2x72xf32>
    %c8_121 = arith.constant 8 : index
    %c0_122 = arith.constant 0 : index
    %233 = vector.load %arg6[%c8_121, %c0_122] : memref<272x128xf32, #tpu.memory_space<vmem>>, vector<1x72xf32>
    %234 = vector.broadcast %233 : vector<1x72xf32> to vector<2x72xf32>
    %235 = arith.addf %232, %234 : vector<2x72xf32>
    %c16_123 = arith.constant 16 : index
    %c0_124 = arith.constant 0 : index
    %236 = vector.load %arg6[%c16_123, %c0_124] : memref<272x128xf32, #tpu.memory_space<vmem>>, vector<1x72xf32>
    %c24_125 = arith.constant 24 : index
    %c0_126 = arith.constant 0 : index
    %237 = vector.load %arg6[%c24_125, %c0_126] : memref<272x128xf32, #tpu.memory_space<vmem>>, vector<1x72xf32>
    %cst_127 = arith.constant dense<0.000000e+00> : vector<2xf32>
    %238 = vector.multi_reduction <add>, %235, %cst_127 [1] : vector<2x72xf32> to vector<2xf32>
    %239 = vector.shape_cast %238 : vector<2xf32> to vector<2x1xf32>
    %cst_128 = arith.constant 7.200000e+01 : f32
    %240 = vector.broadcast %cst_128 : f32 to vector<2x1xf32>
    %241 = arith.divf %239, %240 : vector<2x1xf32>
    %242 = arith.mulf %235, %235 : vector<2x72xf32>
    %cst_129 = arith.constant dense<0.000000e+00> : vector<2xf32>
    %243 = vector.multi_reduction <add>, %242, %cst_129 [1] : vector<2x72xf32> to vector<2xf32>
    %244 = vector.shape_cast %243 : vector<2xf32> to vector<2x1xf32>
    %cst_130 = arith.constant 7.200000e+01 : f32
    %245 = vector.broadcast %cst_130 : f32 to vector<2x1xf32>
    %246 = arith.divf %244, %245 : vector<2x1xf32>
    %247 = arith.mulf %241, %241 : vector<2x1xf32>
    %248 = arith.subf %246, %247 : vector<2x1xf32>
    %cst_131 = arith.constant 0.000000e+00 : f32
    %249 = vector.broadcast %cst_131 : f32 to vector<2x1xf32>
    %250 = arith.maximumf %248, %249 : vector<2x1xf32>
    %251 = vector.broadcast %241 : vector<2x1xf32> to vector<2x72xf32>
    %252 = arith.subf %235, %251 : vector<2x72xf32>
    %cst_132 = arith.constant 9.99999974E-6 : f32
    %253 = vector.broadcast %cst_132 : f32 to vector<2x1xf32>
    %254 = arith.addf %250, %253 : vector<2x1xf32>
    %255 = math.rsqrt %254 : vector<2x1xf32>
    %256 = vector.broadcast %255 : vector<2x1xf32> to vector<2x72xf32>
    %257 = arith.mulf %252, %256 : vector<2x72xf32>
    %258 = vector.broadcast %236 : vector<1x72xf32> to vector<2x72xf32>
    %259 = arith.mulf %257, %258 : vector<2x72xf32>
    %260 = vector.broadcast %237 : vector<1x72xf32> to vector<2x72xf32>
    %261 = arith.addf %259, %260 : vector<2x72xf32>
    %c32_133 = arith.constant 32 : index
    %c0_134 = arith.constant 0 : index
    %262 = vector.load %arg6[%c32_133, %c0_134] : memref<272x128xf32, #tpu.memory_space<vmem>>, vector<72x24xf32>
    %cst_135 = arith.constant dense<0.000000e+00> : vector<2x24xf32>
    %263 = tpu.matmul %261, %262, %cst_135 {dimension_numbers = #tpu.dot_dimension_numbers<[1], [0], [0], [1], [0, 0, 1, 1], [], []>} : vector<2x72xf32>, vector<72x24xf32>, vector<2x24xf32> -> vector<2x24xf32>
    %c104_136 = arith.constant 104 : index
    %c0_137 = arith.constant 0 : index
    %264 = vector.load %arg6[%c104_136, %c0_137] : memref<272x128xf32, #tpu.memory_space<vmem>>, vector<1x24xf32>
    %265 = vector.broadcast %264 : vector<1x24xf32> to vector<2x24xf32>
    %266 = arith.addf %263, %265 : vector<2x24xf32>
    %cst_138 = arith.constant 0.000000e+00 : f32
    %267 = vector.broadcast %cst_138 : f32 to vector<2x24xf32>
    %268 = arith.cmpf oge, %266, %267 : vector<2x24xf32>
    %cst_139 = arith.constant 0.00999999977 : f32
    %269 = vector.broadcast %cst_139 : f32 to vector<2x24xf32>
    %270 = arith.mulf %269, %266 : vector<2x24xf32>
    %271 = arith.select %268, %266, %270 : vector<2x24xi1>, vector<2x24xf32>
    %c112_140 = arith.constant 112 : index
    %c0_141 = arith.constant 0 : index
    %272 = vector.load %arg6[%c112_140, %c0_141] : memref<272x128xf32, #tpu.memory_space<vmem>>, vector<24x24xf32>
    %cst_142 = arith.constant dense<0.000000e+00> : vector<2x24xf32>
    %273 = tpu.matmul %271, %272, %cst_142 {dimension_numbers = #tpu.dot_dimension_numbers<[1], [0], [0], [1], [0, 0, 1, 1], [], []>} : vector<2x24xf32>, vector<24x24xf32>, vector<2x24xf32> -> vector<2x24xf32>
    %c136_143 = arith.constant 136 : index
    %c0_144 = arith.constant 0 : index
    %274 = vector.load %arg6[%c136_143, %c0_144] : memref<272x128xf32, #tpu.memory_space<vmem>>, vector<1x24xf32>
    %275 = vector.broadcast %274 : vector<1x24xf32> to vector<2x24xf32>
    %276 = arith.addf %273, %275 : vector<2x24xf32>
    %cst_145 = arith.constant 0.000000e+00 : f32
    %277 = vector.broadcast %cst_145 : f32 to vector<2x24xf32>
    %278 = arith.cmpf oge, %276, %277 : vector<2x24xf32>
    %cst_146 = arith.constant 0.00999999977 : f32
    %279 = vector.broadcast %cst_146 : f32 to vector<2x24xf32>
    %280 = arith.mulf %279, %276 : vector<2x24xf32>
    %281 = arith.select %278, %276, %280 : vector<2x24xi1>, vector<2x24xf32>
    %c144_147 = arith.constant 144 : index
    %c0_148 = arith.constant 0 : index
    %282 = vector.load %arg6[%c144_147, %c0_148] : memref<272x128xf32, #tpu.memory_space<vmem>>, vector<1x4xf32>
    %c152 = arith.constant 152 : index
    %c0_149 = arith.constant 0 : index
    %283 = vector.load %arg6[%c152, %c0_149] : memref<272x128xf32, #tpu.memory_space<vmem>>, vector<1x4xf32>
    %cst_150 = arith.constant dense<0.000000e+00> : vector<2xf32>
    %284 = vector.multi_reduction <add>, %230, %cst_150 [1] : vector<2x4xf32> to vector<2xf32>
    %285 = vector.shape_cast %284 : vector<2xf32> to vector<2x1xf32>
    %cst_151 = arith.constant 4.000000e+00 : f32
    %286 = vector.broadcast %cst_151 : f32 to vector<2x1xf32>
    %287 = arith.divf %285, %286 : vector<2x1xf32>
    %288 = arith.mulf %230, %230 : vector<2x4xf32>
    %cst_152 = arith.constant dense<0.000000e+00> : vector<2xf32>
    %289 = vector.multi_reduction <add>, %288, %cst_152 [1] : vector<2x4xf32> to vector<2xf32>
    %290 = vector.shape_cast %289 : vector<2xf32> to vector<2x1xf32>
    %cst_153 = arith.constant 4.000000e+00 : f32
    %291 = vector.broadcast %cst_153 : f32 to vector<2x1xf32>
    %292 = arith.divf %290, %291 : vector<2x1xf32>
    %293 = arith.mulf %287, %287 : vector<2x1xf32>
    %294 = arith.subf %292, %293 : vector<2x1xf32>
    %cst_154 = arith.constant 0.000000e+00 : f32
    %295 = vector.broadcast %cst_154 : f32 to vector<2x1xf32>
    %296 = arith.maximumf %294, %295 : vector<2x1xf32>
    %297 = vector.broadcast %287 : vector<2x1xf32> to vector<2x4xf32>
    %298 = arith.subf %230, %297 : vector<2x4xf32>
    %cst_155 = arith.constant 9.99999974E-6 : f32
    %299 = vector.broadcast %cst_155 : f32 to vector<2x1xf32>
    %300 = arith.addf %296, %299 : vector<2x1xf32>
    %301 = math.rsqrt %300 : vector<2x1xf32>
    %302 = vector.broadcast %301 : vector<2x1xf32> to vector<2x4xf32>
    %303 = arith.mulf %298, %302 : vector<2x4xf32>
    %304 = vector.broadcast %282 : vector<1x4xf32> to vector<2x4xf32>
    %305 = arith.mulf %303, %304 : vector<2x4xf32>
    %306 = vector.broadcast %283 : vector<1x4xf32> to vector<2x4xf32>
    %307 = arith.addf %305, %306 : vector<2x4xf32>
    %c160_156 = arith.constant 160 : index
    %c0_157 = arith.constant 0 : index
    %308 = vector.load %arg6[%c160_156, %c0_157] : memref<272x128xf32, #tpu.memory_space<vmem>>, vector<4x4xf32>
    %cst_158 = arith.constant dense<0.000000e+00> : vector<2x4xf32>
    %309 = tpu.matmul %307, %308, %cst_158 {dimension_numbers = #tpu.dot_dimension_numbers<[1], [0], [0], [1], [0, 0, 1, 1], [], []>} : vector<2x4xf32>, vector<4x4xf32>, vector<2x4xf32> -> vector<2x4xf32>
    %c168_159 = arith.constant 168 : index
    %c0_160 = arith.constant 0 : index
    %310 = vector.load %arg6[%c168_159, %c0_160] : memref<272x128xf32, #tpu.memory_space<vmem>>, vector<1x4xf32>
    %311 = vector.broadcast %310 : vector<1x4xf32> to vector<2x4xf32>
    %312 = arith.addf %309, %311 : vector<2x4xf32>
    %cst_161 = arith.constant 0.000000e+00 : f32
    %313 = vector.broadcast %cst_161 : f32 to vector<2x4xf32>
    %314 = arith.cmpf oge, %312, %313 : vector<2x4xf32>
    %cst_162 = arith.constant 0.00999999977 : f32
    %315 = vector.broadcast %cst_162 : f32 to vector<2x4xf32>
    %316 = arith.mulf %315, %312 : vector<2x4xf32>
    %317 = arith.select %314, %312, %316 : vector<2x4xi1>, vector<2x4xf32>
    %c176_163 = arith.constant 176 : index
    %c0_164 = arith.constant 0 : index
    %318 = vector.load %arg6[%c176_163, %c0_164] : memref<272x128xf32, #tpu.memory_space<vmem>>, vector<4x4xf32>
    %cst_165 = arith.constant dense<0.000000e+00> : vector<2x4xf32>
    %319 = tpu.matmul %317, %318, %cst_165 {dimension_numbers = #tpu.dot_dimension_numbers<[1], [0], [0], [1], [0, 0, 1, 1], [], []>} : vector<2x4xf32>, vector<4x4xf32>, vector<2x4xf32> -> vector<2x4xf32>
    %c184 = arith.constant 184 : index
    %c0_166 = arith.constant 0 : index
    %320 = vector.load %arg6[%c184, %c0_166] : memref<272x128xf32, #tpu.memory_space<vmem>>, vector<1x4xf32>
    %321 = vector.broadcast %320 : vector<1x4xf32> to vector<2x4xf32>
    %322 = arith.addf %319, %321 : vector<2x4xf32>
    %c192 = arith.constant 192 : index
    %c0_167 = arith.constant 0 : index
    %323 = vector.load %arg6[%c192, %c0_167] : memref<272x128xf32, #tpu.memory_space<vmem>>, vector<24x32xf32>
    %cst_168 = arith.constant dense<0.000000e+00> : vector<2x32xf32>
    %324 = tpu.matmul %281, %323, %cst_168 {dimension_numbers = #tpu.dot_dimension_numbers<[1], [0], [0], [1], [0, 0, 1, 1], [], []>} : vector<2x24xf32>, vector<24x32xf32>, vector<2x32xf32> -> vector<2x32xf32>
    %c216 = arith.constant 216 : index
    %c0_169 = arith.constant 0 : index
    %325 = vector.load %arg6[%c216, %c0_169] : memref<272x128xf32, #tpu.memory_space<vmem>>, vector<4x32xf32>
    %cst_170 = arith.constant dense<0.000000e+00> : vector<2x32xf32>
    %326 = tpu.matmul %322, %325, %cst_170 {dimension_numbers = #tpu.dot_dimension_numbers<[1], [0], [0], [1], [0, 0, 1, 1], [], []>} : vector<2x4xf32>, vector<4x32xf32>, vector<2x32xf32> -> vector<2x32xf32>
    %327 = arith.addf %324, %326 : vector<2x32xf32>
    %c224 = arith.constant 224 : index
    %c0_171 = arith.constant 0 : index
    %328 = vector.load %arg6[%c224, %c0_171] : memref<272x128xf32, #tpu.memory_space<vmem>>, vector<1x32xf32>
    %329 = vector.broadcast %328 : vector<1x32xf32> to vector<2x32xf32>
    %330 = arith.addf %327, %329 : vector<2x32xf32>
    %cst_172 = arith.constant 0.000000e+00 : f32
    %331 = vector.broadcast %cst_172 : f32 to vector<2x32xf32>
    %332 = arith.cmpf oge, %330, %331 : vector<2x32xf32>
    %cst_173 = arith.constant 0.00999999977 : f32
    %333 = vector.broadcast %cst_173 : f32 to vector<2x32xf32>
    %334 = arith.mulf %333, %330 : vector<2x32xf32>
    %335 = arith.select %332, %330, %334 : vector<2x32xi1>, vector<2x32xf32>
    %c232 = arith.constant 232 : index
    %c0_174 = arith.constant 0 : index
    %336 = vector.load %arg6[%c232, %c0_174] : memref<272x128xf32, #tpu.memory_space<vmem>>, vector<32x32xf32>
    %cst_175 = arith.constant dense<0.000000e+00> : vector<2x32xf32>
    %337 = tpu.matmul %335, %336, %cst_175 {dimension_numbers = #tpu.dot_dimension_numbers<[1], [0], [0], [1], [0, 0, 1, 1], [], []>} : vector<2x32xf32>, vector<32x32xf32>, vector<2x32xf32> -> vector<2x32xf32>
    %c264 = arith.constant 264 : index
    %c0_176 = arith.constant 0 : index
    %338 = vector.load %arg6[%c264, %c0_176] : memref<272x128xf32, #tpu.memory_space<vmem>>, vector<1x32xf32>
    %339 = vector.broadcast %338 : vector<1x32xf32> to vector<2x32xf32>
    %340 = arith.addf %337, %339 : vector<2x32xf32>
    %c0_177 = arith.constant 0 : index
    %c0_178 = arith.constant 0 : index
    %341 = vector.load %arg10[%c0_177, %c0_178] : memref<2x32xf32, #tpu.memory_space<vmem>>, vector<2x32xf32>
    tpu.vector_store %arg10[%c0_177, %c0_178], %340 {strides = array<i32>} : memref<2x32xf32, #tpu.memory_space<vmem>>, vector<2x32xf32>,
    %c0_179 = arith.constant 0 : index
    %c0_180 = arith.constant 0 : index
    %342 = vector.load %arg3[%c0_179, %c0_180] : memref<2x5xf32, #tpu.memory_space<vmem>>, vector<2x5xf32>
    %c0_181 = arith.constant 0 : index
    %c0_182 = arith.constant 0 : index
    %343 = vector.load %arg7[%c0_181, %c0_182] : memref<56x128xf32, #tpu.memory_space<vmem>>, vector<1x5xf32>
    %c8_183 = arith.constant 8 : index
    %c0_184 = arith.constant 0 : index
    %344 = vector.load %arg7[%c8_183, %c0_184] : memref<56x128xf32, #tpu.memory_space<vmem>>, vector<1x5xf32>
    %cst_185 = arith.constant dense<0.000000e+00> : vector<2xf32>
    %345 = vector.multi_reduction <add>, %342, %cst_185 [1] : vector<2x5xf32> to vector<2xf32>
    %346 = vector.shape_cast %345 : vector<2xf32> to vector<2x1xf32>
    %cst_186 = arith.constant 5.000000e+00 : f32
    %347 = vector.broadcast %cst_186 : f32 to vector<2x1xf32>
    %348 = arith.divf %346, %347 : vector<2x1xf32>
    %349 = arith.mulf %342, %342 : vector<2x5xf32>
    %cst_187 = arith.constant dense<0.000000e+00> : vector<2xf32>
    %350 = vector.multi_reduction <add>, %349, %cst_187 [1] : vector<2x5xf32> to vector<2xf32>
    %351 = vector.shape_cast %350 : vector<2xf32> to vector<2x1xf32>
    %cst_188 = arith.constant 5.000000e+00 : f32
    %352 = vector.broadcast %cst_188 : f32 to vector<2x1xf32>
    %353 = arith.divf %351, %352 : vector<2x1xf32>
    %354 = arith.mulf %348, %348 : vector<2x1xf32>
    %355 = arith.subf %353, %354 : vector<2x1xf32>
    %cst_189 = arith.constant 0.000000e+00 : f32
    %356 = vector.broadcast %cst_189 : f32 to vector<2x1xf32>
    %357 = arith.maximumf %355, %356 : vector<2x1xf32>
    %358 = vector.broadcast %348 : vector<2x1xf32> to vector<2x5xf32>
    %359 = arith.subf %342, %358 : vector<2x5xf32>
    %cst_190 = arith.constant 9.99999974E-6 : f32
    %360 = vector.broadcast %cst_190 : f32 to vector<2x1xf32>
    %361 = arith.addf %357, %360 : vector<2x1xf32>
    %362 = math.rsqrt %361 : vector<2x1xf32>
    %363 = vector.broadcast %362 : vector<2x1xf32> to vector<2x5xf32>
    %364 = arith.mulf %359, %363 : vector<2x5xf32>
    %365 = vector.broadcast %343 : vector<1x5xf32> to vector<2x5xf32>
    %366 = arith.mulf %364, %365 : vector<2x5xf32>
    %367 = vector.broadcast %344 : vector<1x5xf32> to vector<2x5xf32>
    %368 = arith.addf %366, %367 : vector<2x5xf32>
    %c16_191 = arith.constant 16 : index
    %c0_192 = arith.constant 0 : index
    %369 = vector.load %arg7[%c16_191, %c0_192] : memref<56x128xf32, #tpu.memory_space<vmem>>, vector<5x16xf32>
    %cst_193 = arith.constant dense<0.000000e+00> : vector<2x16xf32>
    %370 = tpu.matmul %368, %369, %cst_193 {dimension_numbers = #tpu.dot_dimension_numbers<[1], [0], [0], [1], [0, 0, 1, 1], [], []>} : vector<2x5xf32>, vector<5x16xf32>, vector<2x16xf32> -> vector<2x16xf32>
    %c24_194 = arith.constant 24 : index
    %c0_195 = arith.constant 0 : index
    %371 = vector.load %arg7[%c24_194, %c0_195] : memref<56x128xf32, #tpu.memory_space<vmem>>, vector<1x16xf32>
    %372 = vector.broadcast %371 : vector<1x16xf32> to vector<2x16xf32>
    %373 = arith.addf %370, %372 : vector<2x16xf32>
    %cst_196 = arith.constant 0.000000e+00 : f32
    %374 = vector.broadcast %cst_196 : f32 to vector<2x16xf32>
    %375 = arith.cmpf oge, %373, %374 : vector<2x16xf32>
    %cst_197 = arith.constant 0.00999999977 : f32
    %376 = vector.broadcast %cst_197 : f32 to vector<2x16xf32>
    %377 = arith.mulf %376, %373 : vector<2x16xf32>
    %378 = arith.select %375, %373, %377 : vector<2x16xi1>, vector<2x16xf32>
    %c32_198 = arith.constant 32 : index
    %c0_199 = arith.constant 0 : index
    %379 = vector.load %arg7[%c32_198, %c0_199] : memref<56x128xf32, #tpu.memory_space<vmem>>, vector<16x16xf32>
    %cst_200 = arith.constant dense<0.000000e+00> : vector<2x16xf32>
    %380 = tpu.matmul %378, %379, %cst_200 {dimension_numbers = #tpu.dot_dimension_numbers<[1], [0], [0], [1], [0, 0, 1, 1], [], []>} : vector<2x16xf32>, vector<16x16xf32>, vector<2x16xf32> -> vector<2x16xf32>
    %c48_201 = arith.constant 48 : index
    %c0_202 = arith.constant 0 : index
    %381 = vector.load %arg7[%c48_201, %c0_202] : memref<56x128xf32, #tpu.memory_space<vmem>>, vector<1x16xf32>
    %382 = vector.broadcast %381 : vector<1x16xf32> to vector<2x16xf32>
    %383 = arith.addf %380, %382 : vector<2x16xf32>
    %c0_203 = arith.constant 0 : index
    %c0_204 = arith.constant 0 : index
    %384 = vector.load %arg11[%c0_203, %c0_204] : memref<2x16xf32, #tpu.memory_space<vmem>>, vector<2x16xf32>
    tpu.vector_store %arg11[%c0_203, %c0_204], %383 {strides = array<i32>} : memref<2x16xf32, #tpu.memory_space<vmem>>, vector<2x16xf32>,
    return
  }
}

</mosaic_0001>

<llo_original>
// kernel: tpu_custom_call.1
$region0: #{tpu_custom_call.1}
  #allocation0 [shape = 'u32[]', space=smem, size = 0x4, offset = 0x4, fixed_abs, tag = 'smem constant byte address 0x4 - core index']
  #allocation1 [shape = 'u32[144,128]{1,0:T(1,128)}', space=vmem, size = 0x12000, scoped, tag = 'internal scratch']
  %s0 = inlined_call_operand.hbm [shape: f32[3,5], index: 0, kind: input, shape index: {}]
  %s1 = inlined_call_operand.hbm [shape: f32[4,7], index: 1, kind: input, shape index: {}]
  %s2 = inlined_call_operand.vmem [shape: f32[2,10], index: 2, kind: input, shape index: {}]
  %s3 = inlined_call_operand.vmem [shape: f32[2,5], index: 3, kind: input, shape index: {}]
  %s4 = inlined_call_operand.hbm [shape: f32[176,128], index: 4, kind: input, shape index: {}]
  %s5 = inlined_call_operand.hbm [shape: f32[216,128], index: 5, kind: input, shape index: {}]
  %s6 = inlined_call_operand.hbm [shape: f32[272,128], index: 6, kind: input, shape index: {}]
  %s7 = inlined_call_operand.hbm [shape: f32[56,128], index: 7, kind: input, shape index: {}]
  %s8 = inlined_call_operand.hbm [shape: f32[3,32], index: 8, kind: output, shape index: {0}]
  %s9 = inlined_call_operand.hbm [shape: f32[4,32], index: 9, kind: output, shape index: {1}]
  %s10 = inlined_call_operand.hbm [shape: f32[2,32], index: 10, kind: output, shape index: {2}]
  %s11 = inlined_call_operand.hbm [shape: f32[2,16], index: 11, kind: output, shape index: {3}]
  %12 = xla_tuple %s8, %s9, %s10, %s11
  %s13 = sld [smem:[#allocation0]]
  $region90: #{tpu_custom_call.1} parent=0
    _
  %s15 = ssub.s32 1, %s13
  %s16 = scalar_select 0, %s15, %s13
  $region1: #{tpu_custom_call.1} parent=0
    #allocation2 [shape = 'u8[2048]{0}', space=vmem, size = 0x800, scoped, tag = 'input window, operand 0, single buffered']
    #allocation3 [shape = 's32[1]{0}', space=sflag, size = 0x4, scoped, tag = 'scoped memory for tpu_custom_call.1']
    #allocation4 [shape = 's32[1]{0}', space=sflag, size = 0x4, scoped, tag = 'scoped memory for tpu_custom_call.1']
    #allocation5 [shape = 'u8[2048]{0}', space=vmem, size = 0x800, scoped, tag = 'input window, operand 1, single buffered']
    #allocation6 [shape = 's32[1]{0}', space=sflag, size = 0x4, scoped, tag = 'scoped memory for tpu_custom_call.1']
    #allocation7 [shape = 'u8[90112]{0}', space=vmem, size = 0x16000, scoped, tag = 'input window, operand 4, single buffered']
    #allocation8 [shape = 'u8[110592]{0}', space=vmem, size = 0x1b000, scoped, tag = 'input window, operand 5, single buffered']
    #allocation9 [shape = 's32[1]{0}', space=sflag, size = 0x4, scoped, tag = 'scoped memory for tpu_custom_call.1']
    #allocation10 [shape = 'u8[139264]{0}', space=vmem, size = 0x22000, scoped, tag = 'input window, operand 6, single buffered']
    #allocation11 [shape = 'u8[28672]{0}', space=vmem, size = 0x7000, scoped, tag = 'input window, operand 7, single buffered']
    #allocation12 [shape = 's32[1]{0}', space=sflag, size = 0x4, scoped, tag = 'scoped memory for tpu_custom_call.1']
    #allocation13 [shape = 'u8[2048]{0}', space=vmem, size = 0x800, scoped, tag = 'output window, operand 0, single buffered']
    #allocation14 [shape = 'u8[2048]{0}', space=vmem, size = 0x800, scoped, tag = 'output window, operand 1, single buffered']
    #allocation15 [shape = 's32[1]{0}', space=sflag, size = 0x4, scoped, tag = 'scoped memory for tpu_custom_call.1']
    #allocation16 [shape = 'u8[1024]{0}', space=vmem, size = 0x400, scoped, tag = 'output window, operand 2, single buffered']
    #allocation17 [shape = 'u8[1024]{0}', space=vmem, size = 0x400, scoped, tag = 'output window, operand 3, single buffered']
    #allocation18 [shape = 's32[1]{0}', space=sflag, size = 0x4, scoped, tag = 'scoped memory for tpu_custom_call.1']
    %17 = vsyncpa [#allocation3], 0
    %18 = vsyncpa [#allocation6], 0
    %19 = vsyncpa [#allocation9], 0
    %20 = vsyncpa [#allocation12], 0
    %21 = vsyncpa [#allocation4], 0
    %22 = vsyncpa [#allocation15], 0
    %23 = vsyncpa [#allocation18], 0
    // Predicated region
    $region2: #{tpu_custom_call.1} parent=1 // pred_check
      _
    $region3: #{tpu_custom_call.1} parent=1 // pred_check_branch
      %25 = sbr.rel (0) target = $region5
    $region4: #{tpu_custom_call.1} parent=1 // pred_region
      %s27 = ssub.s32 64, 64
      %28 = vsyncadd [#allocation3], %s27
      %s30 = sshll.u32 [#allocation2], 4
      %s31 = int_to_ptr.vmem [resolvable:$true] %s30
      %33 = dma.hbm_to_vmem [thread:$0]  %s0, 64, %s31, [#allocation3]
    $region5: #{tpu_custom_call.1} parent=1 // pred_fallthru
      _
    // Predicated region
    $region6: #{tpu_custom_call.1} parent=1 // pred_check
      _
    $region7: #{tpu_custom_call.1} parent=1 // pred_check_branch
      %35 = sbr.rel (0) target = $region9
    $region8: #{tpu_custom_call.1} parent=1 // pred_region
      %s37 = ssub.s32 64, 64
      %38 = vsyncadd [#allocation6], %s37
      %s40 = sshll.u32 [#allocation5], 4
      %s41 = int_to_ptr.vmem [resolvable:$true] %s40
      %43 = dma.hbm_to_vmem [thread:$0]  %s1, 64, %s41, [#allocation6]
    $region9: #{tpu_custom_call.1} parent=1 // pred_fallthru
      _
    // Predicated region
    $region10: #{tpu_custom_call.1} parent=1 // pred_check
      _
    $region11: #{tpu_custom_call.1} parent=1 // pred_check_branch
      %45 = sbr.rel (0) target = $region13
    $region12: #{tpu_custom_call.1} parent=1 // pred_region
      _
    $region13: #{tpu_custom_call.1} parent=1 // pred_fallthru
      _
    // Predicated region
    $region14: #{tpu_custom_call.1} parent=1 // pred_check
      _
    $region15: #{tpu_custom_call.1} parent=1 // pred_check_branch
      %47 = sbr.rel (0) target = $region17
    $region16: #{tpu_custom_call.1} parent=1 // pred_region
      _
    $region17: #{tpu_custom_call.1} parent=1 // pred_fallthru
      _
    // Predicated region
    $region18: #{tpu_custom_call.1} parent=1 // pred_check
      _
    $region19: #{tpu_custom_call.1} parent=1 // pred_check_branch
      %49 = sbr.rel (0) target = $region21
    $region20: #{tpu_custom_call.1} parent=1 // pred_region
      %s51 = ssub.s32 2816, 2816
      %52 = vsyncadd [#allocation6], %s51
      %s53 = sshll.u32 [#allocation7], 4
      %s54 = int_to_ptr.vmem [resolvable:$true] %s53
      %59 = dma.hbm_to_vmem [thread:$0]  %s4, 2816, %s54, [#allocation6], 128, 128, 8
    $region21: #{tpu_custom_call.1} parent=1 // pred_fallthru
      _
    // Predicated region
    $region22: #{tpu_custom_call.1} parent=1 // pred_check
      _
    $region23: #{tpu_custom_call.1} parent=1 // pred_check_branch
      %61 = sbr.rel (0) target = $region25
    $region24: #{tpu_custom_call.1} parent=1 // pred_region
      %s63 = ssub.s32 3456, 3456
      %64 = vsyncadd [#allocation9], %s63
      %s65 = sshll.u32 [#allocation8], 4
      %s66 = int_to_ptr.vmem [resolvable:$true] %s65
      %71 = dma.hbm_to_vmem [thread:$0]  %s5, 3456, %s66, [#allocation9], 128, 128, 8
    $region25: #{tpu_custom_call.1} parent=1 // pred_fallthru
      _
    // Predicated region
    $region26: #{tpu_custom_call.1} parent=1 // pred_check
      _
    $region27: #{tpu_custom_call.1} parent=1 // pred_check_branch
      %73 = sbr.rel (0) target = $region29
    $region28: #{tpu_custom_call.1} parent=1 // pred_region
      %s75 = ssub.s32 4352, 4352
      %76 = vsyncadd [#allocation9], %s75
      %s77 = sshll.u32 [#allocation10], 4
      %s78 = int_to_ptr.vmem [resolvable:$true] %s77
      %83 = dma.hbm_to_vmem [thread:$0]  %s6, 4352, %s78, [#allocation9], 128, 128, 8
    $region29: #{tpu_custom_call.1} parent=1 // pred_fallthru
      _
    // Predicated region
    $region30: #{tpu_custom_call.1} parent=1 // pred_check
      _
    $region31: #{tpu_custom_call.1} parent=1 // pred_check_branch
      %85 = sbr.rel (0) target = $region33
    $region32: #{tpu_custom_call.1} parent=1 // pred_region
      %s87 = ssub.s32 896, 896
      %88 = vsyncadd [#allocation12], %s87
      %s89 = sshll.u32 [#allocation11], 4
      %s90 = int_to_ptr.vmem [resolvable:$true] %s89
      %95 = dma.hbm_to_vmem [thread:$0]  %s7, 896, %s90, [#allocation12], 128, 128, 8
    $region33: #{tpu_custom_call.1} parent=1 // pred_fallthru
      _
    // Predicated region
    $region34: #{tpu_custom_call.1} parent=1 // pred_check
      _
    $region35: #{tpu_custom_call.1} parent=1 // pred_check_branch
      %97 = sbr.rel (0) target = $region37
    $region36: #{tpu_custom_call.1} parent=1 // pred_region
      %98 = dma.done [#allocation3], 64
    $region37: #{tpu_custom_call.1} parent=1 // pred_fallthru
      _
    // Predicated region
    $region38: #{tpu_custom_call.1} parent=1 // pred_check
      _
    $region39: #{tpu_custom_call.1} parent=1 // pred_check_branch
      %100 = sbr.rel (0) target = $region41
    $region40: #{tpu_custom_call.1} parent=1 // pred_region
      %101 = dma.done [#allocation6], 64
    $region41: #{tpu_custom_call.1} parent=1 // pred_fallthru
      _
    // Predicated region
    $region42: #{tpu_custom_call.1} parent=1 // pred_check
      _
    $region43: #{tpu_custom_call.1} parent=1 // pred_check_branch
      %103 = sbr.rel (0) target = $region45
    $region44: #{tpu_custom_call.1} parent=1 // pred_region
      %104 = dma.done [#allocation6], 2816
    $region45: #{tpu_custom_call.1} parent=1 // pred_fallthru
      _
    // Predicated region
    $region46: #{tpu_custom_call.1} parent=1 // pred_check
      _
    $region47: #{tpu_custom_call.1} parent=1 // pred_check_branch
      %106 = sbr.rel (0) target = $region49
    $region48: #{tpu_custom_call.1} parent=1 // pred_region
      %107 = dma.done [#allocation9], 3456
    $region49: #{tpu_custom_call.1} parent=1 // pred_fallthru
      _
    // Predicated region
    $region50: #{tpu_custom_call.1} parent=1 // pred_check
      _
    $region51: #{tpu_custom_call.1} parent=1 // pred_check_branch
      %109 = sbr.rel (0) target = $region53
    $region52: #{tpu_custom_call.1} parent=1 // pred_region
      %110 = dma.done [#allocation9], 4352
    $region53: #{tpu_custom_call.1} parent=1 // pred_fallthru
      _
    // Predicated region
    $region54: #{tpu_custom_call.1} parent=1 // pred_check
      _
    $region55: #{tpu_custom_call.1} parent=1 // pred_check_branch
      %112 = sbr.rel (0) target = $region57
    $region56: #{tpu_custom_call.1} parent=1 // pred_region
      %113 = dma.done [#allocation12], 896
    $region57: #{tpu_custom_call.1} parent=1 // pred_fallthru
      _
    %v114 = vld [vmem:[#allocation2] sm:$0x7]
    %v115 = vld [vmem:[#allocation7] sm:$0x3]
    %v116 = vld [vmem:[#allocation7 + $0x8] sm:$0x1]
    %v117 = vlaneseq
    %v118 = vshrl.u32 %v117, 7
    %v119 = vsub.s32 0, %v118
    %v120 = vrot.slane %v116, %v119
    %vm121 = vcmask 15360
    %v123 = vsel %vm121, %v114, 0
    %vm125 = vcmask 1041408
    %v127 = vsel %vm125, %v115, 0
    %129 = vmatprep.subr.mxu0 0.0
    %130 = vmatpush1.msra.mxu0 %v127
    %131 = vmatprep.subr.mxu0 0.0
    %132 = vmatpush1.msra.mxu0 0.0
    %133 = vmatprep.subr.mxu0 0.0
    %134 = vmatpush1.msra.mxu0 0.0
    %135 = vmatprep.subr.mxu0 0.0
    %136 = vmatpush1.msra.mxu0 0.0
    %137 = vmatprep.subr.mxu0 0.0
    %138 = vmatpush1.msra.mxu0 0.0
    %139 = vmatprep.subr.mxu0 0.0
    %140 = vmatpush1.msra.mxu0 0.0
    %141 = vmatprep.subr.mxu0 0.0
    %142 = vmatpush1.msra.mxu0 0.0
    %143 = vmatprep.subr.mxu0 0.0
    %144 = vmatpush1.msra.mxu0 0.0
    %145 = vmatprep.subr.mxu0 0.0
    %146 = vmatpush1.msra.mxu0 0.0
    %147 = vmatprep.subr.mxu0 0.0
    %148 = vmatpush1.msra.mxu0 0.0
    %149 = vmatprep.subr.mxu0 0.0
    %150 = vmatpush1.msra.mxu0 0.0
    %151 = vmatprep.subr.mxu0 0.0
    %152 = vmatpush1.msra.mxu0 0.0
    %153 = vmatprep.subr.mxu0 0.0
    %154 = vmatpush1.msra.mxu0 0.0
    %155 = vmatprep.subr.mxu0 0.0
    %156 = vmatpush1.msra.mxu0 0.0
    %157 = vmatprep.subr.mxu0 0.0
    %158 = vmatpush1.msra.mxu0 0.0
    %159 = vmatprep.subr.mxu0 0.0
    %160 = vmatpush1.msra.mxu0 0.0
    %161 = vmatprep.subr.mxu0 0.0
    %162 = vmatpush1.msra.mxu0 0.0
    %163 = vmatprep.subr.mxu0 0.0
    %164 = vmatpush1.msra.mxu0 0.0
    %165 = vmatprep.subr.mxu0 0.0
    %166 = vmatpush1.msra.mxu0 0.0
    %167 = vmatprep.subr.mxu0 0.0
    %168 = vmatpush1.msra.mxu0 0.0
    %169 = vmatprep.subr.mxu0 0.0
    %170 = vmatpush1.msra.mxu0 0.0
    %171 = vmatprep.subr.mxu0 0.0
    %172 = vmatpush1.msra.mxu0 0.0
    %173 = vmatprep.subr.mxu0 0.0
    %174 = vmatpush1.msra.mxu0 0.0
    %175 = vmatprep.subr.mxu0 0.0
    %176 = vmatpush1.msra.mxu0 0.0
    %177 = vmatprep.subr.mxu0 0.0
    %178 = vmatpush1.msra.mxu0 0.0
    %179 = vmatprep.subr.mxu0 0.0
    %180 = vmatpush1.msra.mxu0 0.0
    %181 = vmatprep.subr.mxu0 0.0
    %182 = vmatpush1.msra.mxu0 0.0
    %183 = vmatprep.subr.mxu0 0.0
    %184 = vmatpush1.msra.mxu0 0.0
    %185 = vmatprep.subr.mxu0 0.0
    %186 = vmatpush1.msra.mxu0 0.0
    %187 = vmatprep.subr.mxu0 0.0
    %188 = vmatpush1.msra.mxu0 0.0
    %189 = vmatprep.subr.mxu0 0.0
    %190 = vmatpush1.msra.mxu0 0.0
    %191 = vmatprep.subr.mxu0 0.0
    %192 = vmatpush1.msra.mxu0 0.0
    %193 = vmatprep.mubr.f32.mxu0 0.0
    %194 = vmatmul.mubr.f32.gmra.mrb[0].mxu0 %v123
    %v195 = vpop.f32.mrb[0].mxu0
    %v196 = vadd.f32 %v120, %v195
    %v197 = vpop.f32.mrb[0].mxu0
    %198 = vdwg.mxu0
    %v199 = vld [vmem:[#allocation7 + $0x10] sm:$0x1]
    %v200 = vld [vmem:[#allocation7 + $0x18] sm:$0x1]
    %vm201 = vcmask 59392
    %v202 = vsel %vm201, %v196, 0.0
    %203 = vadd.xlane.f32.xlu0 %v202
    %v204 = vpop.xlane.xlu0 %203
    %v205 = vrcp.pop 8.0
    %v206 = vmul.f32 %v204, %v205
    %v207 = vmul.f32 %v196, %v196
    %v208 = vsel %vm201, %v207, 0.0
    %209 = vadd.xlane.f32.xlu0 %v208
    %v210 = vpop.xlane.xlu0 %209
    %v211 = vmul.f32 %v210, %v205
    %v212 = vmul.f32 %v206, %v206
    %v213 = vsub.f32 %v211, %v212
    %v214 = vmax.f32 %v213, 0.0
    %v215 = vsub.f32 %v196, %v206
    %v216 = vadd.f32 %v214, 1e-05
    %v217 = vrsqrt.pop %v216
    %v218 = vmul.f32 %v215, %v217
    %v219 = vlaneseq
    %v220 = vshrl.u32 %v219, 7
    %v221 = vsub.s32 0, %v220
    %v222 = vrot.slane %v199, %v221
    %v223 = vmul.f32 %v218, %v222
    %v224 = vlaneseq
    %v225 = vshrl.u32 %v224, 7
    %v226 = vsub.s32 0, %v225
    %v227 = vrot.slane %v200, %v226
    %v228 = vadd.f32 %v223, %v227
    %v229 = vld [vmem:[#allocation7 + $0x20] sm:$0xff]
    %v230 = vld [vmem:[#allocation7 + $0x28] sm:$0x1]
    %v231 = vlaneseq
    %v232 = vshrl.u32 %v231, 7
    %v233 = vsub.s32 0, %v232
    %v234 = vrot.slane %v230, %v233
    %vm235 = vcmask 64512
    %v237 = vsel %vm235, %v228, 0
    %239 = vmatprep.subr.mxu0 0.0
    %240 = vmatpush1.msra.mxu0 %v229
    %241 = vmatprep.subr.mxu0 0.0
    %242 = vmatpush1.msra.mxu0 0.0
    %243 = vmatprep.subr.mxu0 0.0
    %244 = vmatpush1.msra.mxu0 0.0
    %245 = vmatprep.subr.mxu0 0.0
    %246 = vmatpush1.msra.mxu0 0.0
    %247 = vmatprep.subr.mxu0 0.0
    %248 = vmatpush1.msra.mxu0 0.0
    %249 = vmatprep.subr.mxu0 0.0
    %250 = vmatpush1.msra.mxu0 0.0
    %251 = vmatprep.subr.mxu0 0.0
    %252 = vmatpush1.msra.mxu0 0.0
    %253 = vmatprep.subr.mxu0 0.0
    %254 = vmatpush1.msra.mxu0 0.0
    %255 = vmatprep.subr.mxu0 0.0
    %256 = vmatpush1.msra.mxu0 0.0
    %257 = vmatprep.subr.mxu0 0.0
    %258 = vmatpush1.msra.mxu0 0.0
    %259 = vmatprep.subr.mxu0 0.0
    %260 = vmatpush1.msra.mxu0 0.0
    %261 = vmatprep.subr.mxu0 0.0
    %262 = vmatpush1.msra.mxu0 0.0
    %263 = vmatprep.subr.mxu0 0.0
    %264 = vmatpush1.msra.mxu0 0.0
    %265 = vmatprep.subr.mxu0 0.0
    %266 = vmatpush1.msra.mxu0 0.0
    %267 = vmatprep.subr.mxu0 0.0
    %268 = vmatpush1.msra.mxu0 0.0
    %269 = vmatprep.subr.mxu0 0.0
    %270 = vmatpush1.msra.mxu0 0.0
    %271 = vmatprep.subr.mxu0 0.0
    %272 = vmatpush1.msra.mxu0 0.0
    %273 = vmatprep.subr.mxu0 0.0
    %274 = vmatpush1.msra.mxu0 0.0
    %275 = vmatprep.subr.mxu0 0.0
    %276 = vmatpush1.msra.mxu0 0.0
    %277 = vmatprep.subr.mxu0 0.0
    %278 = vmatpush1.msra.mxu0 0.0
    %279 = vmatprep.subr.mxu0 0.0
    %280 = vmatpush1.msra.mxu0 0.0
    %281 = vmatprep.subr.mxu0 0.0
    %282 = vmatpush1.msra.mxu0 0.0
    %283 = vmatprep.subr.mxu0 0.0
    %284 = vmatpush1.msra.mxu0 0.0
    %285 = vmatprep.subr.mxu0 0.0
    %286 = vmatpush1.msra.mxu0 0.0
    %287 = vmatprep.subr.mxu0 0.0
    %288 = vmatpush1.msra.mxu0 0.0
    %289 = vmatprep.subr.mxu0 0.0
    %290 = vmatpush1.msra.mxu0 0.0
    %291 = vmatprep.subr.mxu0 0.0
    %292 = vmatpush1.msra.mxu0 0.0
    %293 = vmatprep.subr.mxu0 0.0
    %294 = vmatpush1.msra.mxu0 0.0
    %295 = vmatprep.subr.mxu0 0.0
    %296 = vmatpush1.msra.mxu0 0.0
    %297 = vmatprep.subr.mxu0 0.0
    %298 = vmatpush1.msra.mxu0 0.0
    %299 = vmatprep.subr.mxu0 0.0
    %300 = vmatpush1.msra.mxu0 0.0
    %301 = vmatprep.subr.mxu0 0.0
    %302 = vmatpush1.msra.mxu0 0.0
    %303 = vmatprep.mubr.f32.mxu0 0.0
    %304 = vmatmul.mubr.f32.gmra.mrb[0].mxu0 %v237
    %v305 = vpop.f32.mrb[0].mxu0
    %v306 = vadd.f32 %v234, %v305
    %v307 = vpop.f32.mrb[0].mxu0
    %308 = vdwg.mxu0
    %vm309 = vcmp.ge.f32.partialorder %v306, 0.0
    %v310 = vmul.f32 %v306, 0.01
    %v311 = vsel %vm309, %v306, %v310
    %v312 = vld [vmem:[#allocation7 + $0x30] sm:$0xff]
    %v313 = vld [vmem:[#allocation7 + $0x38] sm:$0x1]
    %v314 = vlaneseq
    %v315 = vshrl.u32 %v314, 7
    %v316 = vsub.s32 0, %v315
    %v317 = vrot.slane %v313, %v316
    %v319 = vsel %vm235, %v311, 0
    %321 = vmatprep.subr.mxu0 0.0
    %322 = vmatpush1.msra.mxu0 %v312
    %323 = vmatprep.subr.mxu0 0.0
    %324 = vmatpush1.msra.mxu0 0.0
    %325 = vmatprep.subr.mxu0 0.0
    %326 = vmatpush1.msra.mxu0 0.0
    %327 = vmatprep.subr.mxu0 0.0
    %328 = vmatpush1.msra.mxu0 0.0
    %329 = vmatprep.subr.mxu0 0.0
    %330 = vmatpush1.msra.mxu0 0.0
    %331 = vmatprep.subr.mxu0 0.0
    %332 = vmatpush1.msra.mxu0 0.0
    %333 = vmatprep.subr.mxu0 0.0
    %334 = vmatpush1.msra.mxu0 0.0
    %335 = vmatprep.subr.mxu0 0.0
    %336 = vmatpush1.msra.mxu0 0.0
    %337 = vmatprep.subr.mxu0 0.0
    %338 = vmatpush1.msra.mxu0 0.0
    %339 = vmatprep.subr.mxu0 0.0
    %340 = vmatpush1.msra.mxu0 0.0
    %341 = vmatprep.subr.mxu0 0.0
    %342 = vmatpush1.msra.mxu0 0.0
    %343 = vmatprep.subr.mxu0 0.0
    %344 = vmatpush1.msra.mxu0 0.0
    %345 = vmatprep.subr.mxu0 0.0
    %346 = vmatpush1.msra.mxu0 0.0
    %347 = vmatprep.subr.mxu0 0.0
    %348 = vmatpush1.msra.mxu0 0.0
    %349 = vmatprep.subr.mxu0 0.0
    %350 = vmatpush1.msra.mxu0 0.0
    %351 = vmatprep.subr.mxu0 0.0
    %352 = vmatpush1.msra.mxu0 0.0
    %353 = vmatprep.subr.mxu0 0.0
    %354 = vmatpush1.msra.mxu0 0.0
    %355 = vmatprep.subr.mxu0 0.0
    %356 = vmatpush1.msra.mxu0 0.0
    %357 = vmatprep.subr.mxu0 0.0
    %358 = vmatpush1.msra.mxu0 0.0
    %359 = vmatprep.subr.mxu0 0.0
    %360 = vmatpush1.msra.mxu0 0.0
    %361 = vmatprep.subr.mxu0 0.0
    %362 = vmatpush1.msra.mxu0 0.0
    %363 = vmatprep.subr.mxu0 0.0
    %364 = vmatpush1.msra.mxu0 0.0
    %365 = vmatprep.subr.mxu0 0.0
    %366 = vmatpush1.msra.mxu0 0.0
    %367 = vmatprep.subr.mxu0 0.0
    %368 = vmatpush1.msra.mxu0 0.0
    %369 = vmatprep.subr.mxu0 0.0
    %370 = vmatpush1.msra.mxu0 0.0
    %371 = vmatprep.subr.mxu0 0.0
    %372 = vmatpush1.msra.mxu0 0.0
    %373 = vmatprep.subr.mxu0 0.0
    %374 = vmatpush1.msra.mxu0 0.0
    %375 = vmatprep.subr.mxu0 0.0
    %376 = vmatpush1.msra.mxu0 0.0
    %377 = vmatprep.subr.mxu0 0.0
    %378 = vmatpush1.msra.mxu0 0.0
    %379 = vmatprep.subr.mxu0 0.0
    %380 = vmatpush1.msra.mxu0 0.0
    %381 = vmatprep.subr.mxu0 0.0
    %382 = vmatpush1.msra.mxu0 0.0
    %383 = vmatprep.subr.mxu0 0.0
    %384 = vmatpush1.msra.mxu0 0.0
    %385 = vmatprep.mubr.f32.mxu0 0.0
    %386 = vmatmul.mubr.f32.gmra.mrb[0].mxu0 %v319
    %v387 = vpop.f32.mrb[0].mxu0
    %v388 = vadd.f32 %v317, %v387
    %v389 = vpop.f32.mrb[0].mxu0
    %390 = vdwg.mxu0
    %vm391 = vcmp.ge.f32.partialorder %v388, 0.0
    %v392 = vmul.f32 %v388, 0.01
    %v393 = vsel %vm391, %v388, %v392
    %v394 = vld [vmem:[#allocation7 + $0x40] sm:$0x1]
    %v395 = vld [vmem:[#allocation7 + $0x48] sm:$0x1]
    %396 = vrot.lane.b32.xlu0 %v114, 126
    %v397 = vpop.permute.xlu0 %396
    %vm399 = vcmask 18432
    %v400 = vsel %vm399, %v397, 0.0
    %401 = vadd.xlane.f32.xlu0 %v400
    %v402 = vpop.xlane.xlu0 %401
    %v403 = vrcp.pop 3.0
    %v404 = vmul.f32 %v402, %v403
    %v405 = vmul.f32 %v114, %v114
    %407 = vrot.lane.b32.xlu0 %v405, 126
    %v408 = vpop.permute.xlu0 %407
    %v410 = vsel %vm399, %v408, 0.0
    %411 = vadd.xlane.f32.xlu0 %v410
    %v412 = vpop.xlane.xlu0 %411
    %v413 = vmul.f32 %v412, %v403
    %v414 = vmul.f32 %v404, %v404
    %v415 = vsub.f32 %v413, %v414
    %v416 = vmax.f32 %v415, 0.0
    %v417 = vsub.f32 %v114, %v404
    %v418 = vadd.f32 %v416, 1e-05
    %v419 = vrsqrt.pop %v418
    %v420 = vmul.f32 %v417, %v419
    %v421 = vlaneseq
    %v422 = vshrl.u32 %v421, 7
    %v423 = vsub.s32 0, %v422
    %v424 = vrot.slane %v394, %v423
    %426 = vrot.lane.b32.xlu0 %v424, 2
    %v427 = vpop.permute.xlu0 %426
    %v429 = vmul.f32 %v420, %v427
    %v430 = vlaneseq
    %v431 = vshrl.u32 %v430, 7
    %v432 = vsub.s32 0, %v431
    %v433 = vrot.slane %v395, %v432
    %435 = vrot.lane.b32.xlu0 %v433, 2
    %v436 = vpop.permute.xlu0 %435
    %v438 = vadd.f32 %v429, %v436
    %v439 = vld [vmem:[#allocation7 + $0x50] sm:$0x7]
    %v440 = vld [vmem:[#allocation7 + $0x58] sm:$0x1]
    %v441 = vlaneseq
    %v442 = vshrl.u32 %v441, 7
    %v443 = vsub.s32 0, %v442
    %v444 = vrot.slane %v440, %v443
    %446 = vrot.lane.b32.xlu0 %v438, 126
    %v447 = vpop.permute.xlu0 %446
    %vm448 = vcmask 23552
    %v449 = vsel %vm448, %v447, 0
    %vm451 = vcmask 1042432
    %v453 = vsel %vm451, %v439, 0
    %455 = vmatprep.subr.mxu0 0.0
    %456 = vmatpush1.msra.mxu0 %v453
    %457 = vmatprep.subr.mxu0 0.0
    %458 = vmatpush1.msra.mxu0 0.0
    %459 = vmatprep.subr.mxu0 0.0
    %460 = vmatpush1.msra.mxu0 0.0
    %461 = vmatprep.subr.mxu0 0.0
    %462 = vmatpush1.msra.mxu0 0.0
    %463 = vmatprep.subr.mxu0 0.0
    %464 = vmatpush1.msra.mxu0 0.0
    %465 = vmatprep.subr.mxu0 0.0
    %466 = vmatpush1.msra.mxu0 0.0
    %467 = vmatprep.subr.mxu0 0.0
    %468 = vmatpush1.msra.mxu0 0.0
    %469 = vmatprep.subr.mxu0 0.0
    %470 = vmatpush1.msra.mxu0 0.0
    %471 = vmatprep.subr.mxu0 0.0
    %472 = vmatpush1.msra.mxu0 0.0
    %473 = vmatprep.subr.mxu0 0.0
    %474 = vmatpush1.msra.mxu0 0.0
    %475 = vmatprep.subr.mxu0 0.0
    %476 = vmatpush1.msra.mxu0 0.0
    %477 = vmatprep.subr.mxu0 0.0
    %478 = vmatpush1.msra.mxu0 0.0
    %479 = vmatprep.subr.mxu0 0.0
    %480 = vmatpush1.msra.mxu0 0.0
    %481 = vmatprep.subr.mxu0 0.0
    %482 = vmatpush1.msra.mxu0 0.0
    %483 = vmatprep.subr.mxu0 0.0
    %484 = vmatpush1.msra.mxu0 0.0
    %485 = vmatprep.subr.mxu0 0.0
    %486 = vmatpush1.msra.mxu0 0.0
    %487 = vmatprep.subr.mxu0 0.0
    %488 = vmatpush1.msra.mxu0 0.0
    %489 = vmatprep.subr.mxu0 0.0
    %490 = vmatpush1.msra.mxu0 0.0
    %491 = vmatprep.subr.mxu0 0.0
    %492 = vmatpush1.msra.mxu0 0.0
    %493 = vmatprep.subr.mxu0 0.0
    %494 = vmatpush1.msra.mxu0 0.0
    %495 = vmatprep.subr.mxu0 0.0
    %496 = vmatpush1.msra.mxu0 0.0
    %497 = vmatprep.subr.mxu0 0.0
    %498 = vmatpush1.msra.mxu0 0.0
    %499 = vmatprep.subr.mxu0 0.0
    %500 = vmatpush1.msra.mxu0 0.0
    %501 = vmatprep.subr.mxu0 0.0
    %502 = vmatpush1.msra.mxu0 0.0
    %503 = vmatprep.subr.mxu0 0.0
    %504 = vmatpush1.msra.mxu0 0.0
    %505 = vmatprep.subr.mxu0 0.0
    %506 = vmatpush1.msra.mxu0 0.0
    %507 = vmatprep.subr.mxu0 0.0
    %508 = vmatpush1.msra.mxu0 0.0
    %509 = vmatprep.subr.mxu0 0.0
    %510 = vmatpush1.msra.mxu0 0.0
    %511 = vmatprep.subr.mxu0 0.0
    %512 = vmatpush1.msra.mxu0 0.0
    %513 = vmatprep.subr.mxu0 0.0
    %514 = vmatpush1.msra.mxu0 0.0
    %515 = vmatprep.subr.mxu0 0.0
    %516 = vmatpush1.msra.mxu0 0.0
    %517 = vmatprep.subr.mxu0 0.0
    %518 = vmatpush1.msra.mxu0 0.0
    %519 = vmatprep.mubr.f32.mxu0 0.0
    %520 = vmatmul.mubr.f32.gmra.mrb[0].mxu0 %v449
    %v521 = vpop.f32.mrb[0].mxu0
    %v522 = vadd.f32 %v444, %v521
    %v523 = vpop.f32.mrb[0].mxu0
    %524 = vdwg.mxu0
    %vm525 = vcmp.ge.f32.partialorder %v522, 0.0
    %v526 = vmul.f32 %v522, 0.01
    %v527 = vsel %vm525, %v522, %v526
    %v528 = vld [vmem:[#allocation7 + $0x60] sm:$0x7]
    %v529 = vld [vmem:[#allocation7 + $0x68] sm:$0x1]
    %v530 = vlaneseq
    %v531 = vshrl.u32 %v530, 7
    %v532 = vsub.s32 0, %v531
    %v533 = vrot.slane %v529, %v532
    %v535 = vsel %vm448, %v527, 0
    %v538 = vsel %vm451, %v528, 0
    %540 = vmatprep.subr.mxu0 0.0
    %541 = vmatpush1.msra.mxu0 %v538
    %542 = vmatprep.subr.mxu0 0.0
    %543 = vmatpush1.msra.mxu0 0.0
    %544 = vmatprep.subr.mxu0 0.0
    %545 = vmatpush1.msra.mxu0 0.0
    %546 = vmatprep.subr.mxu0 0.0
    %547 = vmatpush1.msra.mxu0 0.0
    %548 = vmatprep.subr.mxu0 0.0
    %549 = vmatpush1.msra.mxu0 0.0
    %550 = vmatprep.subr.mxu0 0.0
    %551 = vmatpush1.msra.mxu0 0.0
    %552 = vmatprep.subr.mxu0 0.0
    %553 = vmatpush1.msra.mxu0 0.0
    %554 = vmatprep.subr.mxu0 0.0
    %555 = vmatpush1.msra.mxu0 0.0
    %556 = vmatprep.subr.mxu0 0.0
    %557 = vmatpush1.msra.mxu0 0.0
    %558 = vmatprep.subr.mxu0 0.0
    %559 = vmatpush1.msra.mxu0 0.0
    %560 = vmatprep.subr.mxu0 0.0
    %561 = vmatpush1.msra.mxu0 0.0
    %562 = vmatprep.subr.mxu0 0.0
    %563 = vmatpush1.msra.mxu0 0.0
    %564 = vmatprep.subr.mxu0 0.0
    %565 = vmatpush1.msra.mxu0 0.0
    %566 = vmatprep.subr.mxu0 0.0
    %567 = vmatpush1.msra.mxu0 0.0
    %568 = vmatprep.subr.mxu0 0.0
    %569 = vmatpush1.msra.mxu0 0.0
    %570 = vmatprep.subr.mxu0 0.0
    %571 = vmatpush1.msra.mxu0 0.0
    %572 = vmatprep.subr.mxu0 0.0
    %573 = vmatpush1.msra.mxu0 0.0
    %574 = vmatprep.subr.mxu0 0.0
    %575 = vmatpush1.msra.mxu0 0.0
    %576 = vmatprep.subr.mxu0 0.0
    %577 = vmatpush1.msra.mxu0 0.0
    %578 = vmatprep.subr.mxu0 0.0
    %579 = vmatpush1.msra.mxu0 0.0
    %580 = vmatprep.subr.mxu0 0.0
    %581 = vmatpush1.msra.mxu0 0.0
    %582 = vmatprep.subr.mxu0 0.0
    %583 = vmatpush1.msra.mxu0 0.0
    %584 = vmatprep.subr.mxu0 0.0
    %585 = vmatpush1.msra.mxu0 0.0
    %586 = vmatprep.subr.mxu0 0.0
    %587 = vmatpush1.msra.mxu0 0.0
    %588 = vmatprep.subr.mxu0 0.0
    %589 = vmatpush1.msra.mxu0 0.0
    %590 = vmatprep.subr.mxu0 0.0
    %591 = vmatpush1.msra.mxu0 0.0
    %592 = vmatprep.subr.mxu0 0.0
    %593 = vmatpush1.msra.mxu0 0.0
    %594 = vmatprep.subr.mxu0 0.0
    %595 = vmatpush1.msra.mxu0 0.0
    %596 = vmatprep.subr.mxu0 0.0
    %597 = vmatpush1.msra.mxu0 0.0
    %598 = vmatprep.subr.mxu0 0.0
    %599 = vmatpush1.msra.mxu0 0.0
    %600 = vmatprep.subr.mxu0 0.0
    %601 = vmatpush1.msra.mxu0 0.0
    %602 = vmatprep.subr.mxu0 0.0
    %603 = vmatpush1.msra.mxu0 0.0
    %604 = vmatprep.mubr.f32.mxu0 0.0
    %605 = vmatmul.mubr.f32.gmra.mrb[0].mxu0 %v535
    %v606 = vpop.f32.mrb[0].mxu0
    %v607 = vadd.f32 %v533, %v606
    %v608 = vpop.f32.mrb[0].mxu0
    %609 = vdwg.mxu0
    %v610 = vld [vmem:[#allocation7 + $0x70] sm:$0xff]
    %v611 = vld [vmem:[#allocation7 + $0x78] sm:$0x7]
    %v613 = vsel %vm448, %v607, 0
    %v616 = vsel %vm451, %v611, 0
    %618 = vmatprep.subr.mxu0 0.0
    %619 = vmatpush1.msra.mxu0 %v616
    %620 = vmatprep.subr.mxu0 0.0
    %621 = vmatpush1.msra.mxu0 0.0
    %622 = vmatprep.subr.mxu0 0.0
    %623 = vmatpush1.msra.mxu0 0.0
    %624 = vmatprep.subr.mxu0 0.0
    %625 = vmatpush1.msra.mxu0 0.0
    %626 = vmatprep.subr.mxu0 0.0
    %627 = vmatpush1.msra.mxu0 0.0
    %628 = vmatprep.subr.mxu0 0.0
    %629 = vmatpush1.msra.mxu0 0.0
    %630 = vmatprep.subr.mxu0 0.0
    %631 = vmatpush1.msra.mxu0 0.0
    %632 = vmatprep.subr.mxu0 0.0
    %633 = vmatpush1.msra.mxu0 0.0
    %634 = vmatprep.subr.mxu0 0.0
    %635 = vmatpush1.msra.mxu0 0.0
    %636 = vmatprep.subr.mxu0 0.0
    %637 = vmatpush1.msra.mxu0 0.0
    %638 = vmatprep.subr.mxu0 0.0
    %639 = vmatpush1.msra.mxu0 0.0
    %640 = vmatprep.subr.mxu0 0.0
    %641 = vmatpush1.msra.mxu0 0.0
    %642 = vmatprep.subr.mxu0 0.0
    %643 = vmatpush1.msra.mxu0 0.0
    %644 = vmatprep.subr.mxu0 0.0
    %645 = vmatpush1.msra.mxu0 0.0
    %646 = vmatprep.subr.mxu0 0.0
    %647 = vmatpush1.msra.mxu0 0.0
    %648 = vmatprep.subr.mxu0 0.0
    %649 = vmatpush1.msra.mxu0 0.0
    %650 = vmatprep.subr.mxu0 0.0
    %651 = vmatpush1.msra.mxu0 0.0
    %652 = vmatprep.subr.mxu0 0.0
    %653 = vmatpush1.msra.mxu0 0.0
    %654 = vmatprep.subr.mxu0 0.0
    %655 = vmatpush1.msra.mxu0 0.0
    %656 = vmatprep.subr.mxu0 0.0
    %657 = vmatpush1.msra.mxu0 0.0
    %658 = vmatprep.subr.mxu0 0.0
    %659 = vmatpush1.msra.mxu0 0.0
    %660 = vmatprep.subr.mxu0 0.0
    %661 = vmatpush1.msra.mxu0 0.0
    %662 = vmatprep.subr.mxu0 0.0
    %663 = vmatpush1.msra.mxu0 0.0
    %664 = vmatprep.subr.mxu0 0.0
    %665 = vmatpush1.msra.mxu0 0.0
    %666 = vmatprep.subr.mxu0 0.0
    %667 = vmatpush1.msra.mxu0 0.0
    %668 = vmatprep.subr.mxu0 0.0
    %669 = vmatpush1.msra.mxu0 0.0
    %670 = vmatprep.subr.mxu0 0.0
    %671 = vmatpush1.msra.mxu0 0.0
    %672 = vmatprep.subr.mxu0 0.0
    %673 = vmatpush1.msra.mxu0 0.0
    %674 = vmatprep.subr.mxu0 0.0
    %675 = vmatpush1.msra.mxu0 0.0
    %676 = vmatprep.subr.mxu0 0.0
    %677 = vmatpush1.msra.mxu0 0.0
    %678 = vmatprep.subr.mxu0 0.0
    %679 = vmatpush1.msra.mxu0 0.0
    %680 = vmatprep.subr.mxu0 0.0
    %681 = vmatpush1.msra.mxu0 0.0
    %682 = vmatprep.mubr.f32.mxu0 0.0
    %683 = vmatmul.mubr.f32.gmra.mrb[0].mxu0 %v613
    %v684 = vpop.f32.mrb[0].mxu0
    %v685 = vadd.f32 0.0, %v684
    %v686 = vpop.f32.mrb[0].mxu0
    %687 = vdwg.mxu0
    %v689 = vsel %vm235, %v393, 0
    %691 = vmatprep.subr.mxu0 0.0
    %692 = vmatpush1.msra.mxu0 %v610
    %693 = vmatprep.subr.mxu0 0.0
    %694 = vmatpush1.msra.mxu0 0.0
    %695 = vmatprep.subr.mxu0 0.0
    %696 = vmatpush1.msra.mxu0 0.0
    %697 = vmatprep.subr.mxu0 0.0
    %698 = vmatpush1.msra.mxu0 0.0
    %699 = vmatprep.subr.mxu0 0.0
    %700 = vmatpush1.msra.mxu0 0.0
    %701 = vmatprep.subr.mxu0 0.0
    %702 = vmatpush1.msra.mxu0 0.0
    %703 = vmatprep.subr.mxu0 0.0
    %704 = vmatpush1.msra.mxu0 0.0
    %705 = vmatprep.subr.mxu0 0.0
    %706 = vmatpush1.msra.mxu0 0.0
    %707 = vmatprep.subr.mxu0 0.0
    %708 = vmatpush1.msra.mxu0 0.0
    %709 = vmatprep.subr.mxu0 0.0
    %710 = vmatpush1.msra.mxu0 0.0
    %711 = vmatprep.subr.mxu0 0.0
    %712 = vmatpush1.msra.mxu0 0.0
    %713 = vmatprep.subr.mxu0 0.0
    %714 = vmatpush1.msra.mxu0 0.0
    %715 = vmatprep.subr.mxu0 0.0
    %716 = vmatpush1.msra.mxu0 0.0
    %717 = vmatprep.subr.mxu0 0.0
    %718 = vmatpush1.msra.mxu0 0.0
    %719 = vmatprep.subr.mxu0 0.0
    %720 = vmatpush1.msra.mxu0 0.0
    %721 = vmatprep.subr.mxu0 0.0
    %722 = vmatpush1.msra.mxu0 0.0
    %723 = vmatprep.subr.mxu0 0.0
    %724 = vmatpush1.msra.mxu0 0.0
    %725 = vmatprep.subr.mxu0 0.0
    %726 = vmatpush1.msra.mxu0 0.0
    %727 = vmatprep.subr.mxu0 0.0
    %728 = vmatpush1.msra.mxu0 0.0
    %729 = vmatprep.subr.mxu0 0.0
    %730 = vmatpush1.msra.mxu0 0.0
    %731 = vmatprep.subr.mxu0 0.0
    %732 = vmatpush1.msra.mxu0 0.0
    %733 = vmatprep.subr.mxu0 0.0
    %734 = vmatpush1.msra.mxu0 0.0
    %735 = vmatprep.subr.mxu0 0.0
    %736 = vmatpush1.msra.mxu0 0.0
    %737 = vmatprep.subr.mxu0 0.0
    %738 = vmatpush1.msra.mxu0 0.0
    %739 = vmatprep.subr.mxu0 0.0
    %740 = vmatpush1.msra.mxu0 0.0
    %741 = vmatprep.subr.mxu0 0.0
    %742 = vmatpush1.msra.mxu0 0.0
    %743 = vmatprep.subr.mxu0 0.0
    %744 = vmatpush1.msra.mxu0 0.0
    %745 = vmatprep.subr.mxu0 0.0
    %746 = vmatpush1.msra.mxu0 0.0
    %747 = vmatprep.subr.mxu0 0.0
    %748 = vmatpush1.msra.mxu0 0.0
    %749 = vmatprep.subr.mxu0 0.0
    %750 = vmatpush1.msra.mxu0 0.0
    %751 = vmatprep.subr.mxu0 0.0
    %752 = vmatpush1.msra.mxu0 0.0
    %753 = vmatprep.subr.mxu0 0.0
    %754 = vmatpush1.msra.mxu0 0.0
    %755 = vmatprep.mubr.f32.mxu0 0.0
    %756 = vmatmul.mubr.f32.gmra.mrb[0].mxu0 %v689
    %v757 = vpop.f32.mrb[0].mxu0
    %v758 = vadd.f32 %v685, %v757
    %v759 = vpop.f32.mrb[0].mxu0
    %760 = vdwg.mxu0
    %v761 = vld [vmem:[#allocation7 + $0x80] sm:$0x1]
    %v762 = vlaneseq
    %v763 = vshrl.u32 %v762, 7
    %v764 = vsub.s32 0, %v763
    %v765 = vrot.slane %v761, %v764
    %v766 = vadd.f32 %v758, %v765
    %vm767 = vcmp.ge.f32.partialorder %v766, 0.0
    %v768 = vmul.f32 %v766, 0.01
    %v769 = vsel %vm767, %v766, %v768
    %v770 = vld [vmem:[#allocation7 + $0x88] sm:$0xff]
    %v771 = vld [vmem:[#allocation7 + $0x90] sm:$0xff]
    %v772 = vld [vmem:[#allocation7 + $0x98] sm:$0xff]
    %v773 = vld [vmem:[#allocation7 + $0xa0] sm:$0xff]
    %v774 = vld [vmem:[#allocation7 + $0xa8] sm:$0x1]
    %v775 = vlaneseq
    %v776 = vshrl.u32 %v775, 7
    %v777 = vsub.s32 0, %v776
    %v778 = vrot.slane %v774, %v777
    %vm779 = vcmask 261120
    %v781 = vsel %vm779, %v769, 0
    %783 = vmatprep.subr.mxu0 0.0
    %784 = vmatpush1.msra.mxu0 %v770
    %785 = vmatprep.subr.mxu0 0.0
    %786 = vmatpush1.msra.mxu0 %v771
    %787 = vmatprep.subr.mxu0 0.0
    %788 = vmatpush1.msra.mxu0 %v772
    %789 = vmatprep.subr.mxu0 0.0
    %790 = vmatpush1.msra.mxu0 %v773
    %791 = vmatprep.subr.mxu0 0.0
    %792 = vmatpush1.msra.mxu0 0.0
    %793 = vmatprep.subr.mxu0 0.0
    %794 = vmatpush1.msra.mxu0 0.0
    %795 = vmatprep.subr.mxu0 0.0
    %796 = vmatpush1.msra.mxu0 0.0
    %797 = vmatprep.subr.mxu0 0.0
    %798 = vmatpush1.msra.mxu0 0.0
    %799 = vmatprep.subr.mxu0 0.0
    %800 = vmatpush1.msra.mxu0 0.0
    %801 = vmatprep.subr.mxu0 0.0
    %802 = vmatpush1.msra.mxu0 0.0
    %803 = vmatprep.subr.mxu0 0.0
    %804 = vmatpush1.msra.mxu0 0.0
    %805 = vmatprep.subr.mxu0 0.0
    %806 = vmatpush1.msra.mxu0 0.0
    %807 = vmatprep.subr.mxu0 0.0
    %808 = vmatpush1.msra.mxu0 0.0
    %809 = vmatprep.subr.mxu0 0.0
    %810 = vmatpush1.msra.mxu0 0.0
    %811 = vmatprep.subr.mxu0 0.0
    %812 = vmatpush1.msra.mxu0 0.0
    %813 = vmatprep.subr.mxu0 0.0
    %814 = vmatpush1.msra.mxu0 0.0
    %815 = vmatprep.subr.mxu0 0.0
    %816 = vmatpush1.msra.mxu0 0.0
    %817 = vmatprep.subr.mxu0 0.0
    %818 = vmatpush1.msra.mxu0 0.0
    %819 = vmatprep.subr.mxu0 0.0
    %820 = vmatpush1.msra.mxu0 0.0
    %821 = vmatprep.subr.mxu0 0.0
    %822 = vmatpush1.msra.mxu0 0.0
    %823 = vmatprep.subr.mxu0 0.0
    %824 = vmatpush1.msra.mxu0 0.0
    %825 = vmatprep.subr.mxu0 0.0
    %826 = vmatpush1.msra.mxu0 0.0
    %827 = vmatprep.subr.mxu0 0.0
    %828 = vmatpush1.msra.mxu0 0.0
    %829 = vmatprep.subr.mxu0 0.0
    %830 = vmatpush1.msra.mxu0 0.0
    %831 = vmatprep.subr.mxu0 0.0
    %832 = vmatpush1.msra.mxu0 0.0
    %833 = vmatprep.subr.mxu0 0.0
    %834 = vmatpush1.msra.mxu0 0.0
    %835 = vmatprep.subr.mxu0 0.0
    %836 = vmatpush1.msra.mxu0 0.0
    %837 = vmatprep.subr.mxu0 0.0
    %838 = vmatpush1.msra.mxu0 0.0
    %839 = vmatprep.subr.mxu0 0.0
    %840 = vmatpush1.msra.mxu0 0.0
    %841 = vmatprep.subr.mxu0 0.0
    %842 = vmatpush1.msra.mxu0 0.0
    %843 = vmatprep.subr.mxu0 0.0
    %844 = vmatpush1.msra.mxu0 0.0
    %845 = vmatprep.subr.mxu0 0.0
    %846 = vmatpush1.msra.mxu0 0.0
    %847 = vmatprep.mubr.f32.mxu0 0.0
    %848 = vmatmul.mubr.f32.gmra.mrb[0].mxu0 %v781
    %v849 = vpop.f32.mrb[0].mxu0
    %v850 = vadd.f32 %v778, %v849
    %v851 = vpop.f32.mrb[0].mxu0
    %852 = vdwg.mxu0
    %vm853 = vcmask 256000
    %854 = vst.msk [vmem:[#allocation13] sm:$0x7] %vm853, %v850
    %v855 = vld [vmem:[#allocation5] sm:$0xf]
    %v856 = vld [vmem:[#allocation8] sm:$0xf]
    %v857 = vld [vmem:[#allocation8 + $0x8] sm:$0x1]
    %v858 = vlaneseq
    %v859 = vshrl.u32 %v858, 7
    %v860 = vsub.s32 0, %v859
    %v861 = vrot.slane %v857, %v860
    %vm862 = vcmask 31744
    %v864 = vsel %vm862, %v855, 0
    %vm866 = vcmask 1043456
    %v868 = vsel %vm866, %v856, 0
    %870 = vmatprep.subr.mxu0 0.0
    %871 = vmatpush1.msra.mxu0 %v868
    %872 = vmatprep.subr.mxu0 0.0
    %873 = vmatpush1.msra.mxu0 0.0
    %874 = vmatprep.subr.mxu0 0.0
    %875 = vmatpush1.msra.mxu0 0.0
    %876 = vmatprep.subr.mxu0 0.0
    %877 = vmatpush1.msra.mxu0 0.0
    %878 = vmatprep.subr.mxu0 0.0
    %879 = vmatpush1.msra.mxu0 0.0
    %880 = vmatprep.subr.mxu0 0.0
    %881 = vmatpush1.msra.mxu0 0.0
    %882 = vmatprep.subr.mxu0 0.0
    %883 = vmatpush1.msra.mxu0 0.0
    %884 = vmatprep.subr.mxu0 0.0
    %885 = vmatpush1.msra.mxu0 0.0
    %886 = vmatprep.subr.mxu0 0.0
    %887 = vmatpush1.msra.mxu0 0.0
    %888 = vmatprep.subr.mxu0 0.0
    %889 = vmatpush1.msra.mxu0 0.0
    %890 = vmatprep.subr.mxu0 0.0
    %891 = vmatpush1.msra.mxu0 0.0
    %892 = vmatprep.subr.mxu0 0.0
    %893 = vmatpush1.msra.mxu0 0.0
    %894 = vmatprep.subr.mxu0 0.0
    %895 = vmatpush1.msra.mxu0 0.0
    %896 = vmatprep.subr.mxu0 0.0
    %897 = vmatpush1.msra.mxu0 0.0
    %898 = vmatprep.subr.mxu0 0.0
    %899 = vmatpush1.msra.mxu0 0.0
    %900 = vmatprep.subr.mxu0 0.0
    %901 = vmatpush1.msra.mxu0 0.0
    %902 = vmatprep.subr.mxu0 0.0
    %903 = vmatpush1.msra.mxu0 0.0
    %904 = vmatprep.subr.mxu0 0.0
    %905 = vmatpush1.msra.mxu0 0.0
    %906 = vmatprep.subr.mxu0 0.0
    %907 = vmatpush1.msra.mxu0 0.0
    %908 = vmatprep.subr.mxu0 0.0
    %909 = vmatpush1.msra.mxu0 0.0
    %910 = vmatprep.subr.mxu0 0.0
    %911 = vmatpush1.msra.mxu0 0.0
    %912 = vmatprep.subr.mxu0 0.0
    %913 = vmatpush1.msra.mxu0 0.0
    %914 = vmatprep.subr.mxu0 0.0
    %915 = vmatpush1.msra.mxu0 0.0
    %916 = vmatprep.subr.mxu0 0.0
    %917 = vmatpush1.msra.mxu0 0.0
    %918 = vmatprep.subr.mxu0 0.0
    %919 = vmatpush1.msra.mxu0 0.0
    %920 = vmatprep.subr.mxu0 0.0
    %921 = vmatpush1.msra.mxu0 0.0
    %922 = vmatprep.subr.mxu0 0.0
    %923 = vmatpush1.msra.mxu0 0.0
    %924 = vmatprep.subr.mxu0 0.0
    %925 = vmatpush1.msra.mxu0 0.0
    %926 = vmatprep.subr.mxu0 0.0
    %927 = vmatpush1.msra.mxu0 0.0
    %928 = vmatprep.subr.mxu0 0.0
    %929 = vmatpush1.msra.mxu0 0.0
    %930 = vmatprep.subr.mxu0 0.0
    %931 = vmatpush1.msra.mxu0 0.0
    %932 = vmatprep.subr.mxu0 0.0
    %933 = vmatpush1.msra.mxu0 0.0
    %934 = vmatprep.mubr.f32.mxu0 0.0
    %935 = vmatmul.mubr.f32.gmra.mrb[0].mxu0 %v864
    %v936 = vpop.f32.mrb[0].mxu0
    %v937 = vadd.f32 %v861, %v936
    %v938 = vpop.f32.mrb[0].mxu0
    %939 = vdwg.mxu0
    %v940 = vld [vmem:[#allocation8 + $0x10] sm:$0x1]
    %v941 = vld [vmem:[#allocation8 + $0x18] sm:$0x1]
    %vm942 = vcmask 257024
    %v943 = vsel %vm942, %v937, 0.0
    %944 = vadd.xlane.f32.xlu0 %v943
    %v945 = vpop.xlane.xlu0 %944
    %v946 = vrcp.pop 32.0
    %v947 = vmul.f32 %v945, %v946
    %v948 = vmul.f32 %v937, %v937
    %v949 = vsel %vm942, %v948, 0.0
    %950 = vadd.xlane.f32.xlu0 %v949
    %v951 = vpop.xlane.xlu0 %950
    %v952 = vmul.f32 %v951, %v946
    %v953 = vmul.f32 %v947, %v947
    %v954 = vsub.f32 %v952, %v953
    %v955 = vmax.f32 %v954, 0.0
    %v956 = vsub.f32 %v937, %v947
    %v957 = vadd.f32 %v955, 1e-05
    %v958 = vrsqrt.pop %v957
    %v959 = vmul.f32 %v956, %v958
    %v960 = vlaneseq
    %v961 = vshrl.u32 %v960, 7
    %v962 = vsub.s32 0, %v961
    %v963 = vrot.slane %v940, %v962
    %v964 = vmul.f32 %v959, %v963
    %v965 = vlaneseq
    %v966 = vshrl.u32 %v965, 7
    %v967 = vsub.s32 0, %v966
    %v968 = vrot.slane %v941, %v967
    %v969 = vadd.f32 %v964, %v968
    %v970 = vld [vmem:[#allocation8 + $0x20] sm:$0xff]
    %v971 = vld [vmem:[#allocation8 + $0x28] sm:$0xff]
    %v972 = vld [vmem:[#allocation8 + $0x30] sm:$0xff]
    %v973 = vld [vmem:[#allocation8 + $0x38] sm:$0xff]
    %v974 = vld [vmem:[#allocation8 + $0x40] sm:$0x1]
    %v975 = vlaneseq
    %v976 = vshrl.u32 %v975, 7
    %v977 = vsub.s32 0, %v976
    %v978 = vrot.slane %v974, %v977
    %v980 = vsel %vm779, %v969, 0
    %982 = vmatprep.subr.mxu0 0.0
    %983 = vmatpush1.msra.mxu0 %v970
    %984 = vmatprep.subr.mxu0 0.0
    %985 = vmatpush1.msra.mxu0 %v971
    %986 = vmatprep.subr.mxu0 0.0
    %987 = vmatpush1.msra.mxu0 %v972
    %988 = vmatprep.subr.mxu0 0.0
    %989 = vmatpush1.msra.mxu0 %v973
    %990 = vmatprep.subr.mxu0 0.0
    %991 = vmatpush1.msra.mxu0 0.0
    %992 = vmatprep.subr.mxu0 0.0
    %993 = vmatpush1.msra.mxu0 0.0
    %994 = vmatprep.subr.mxu0 0.0
    %995 = vmatpush1.msra.mxu0 0.0
    %996 = vmatprep.subr.mxu0 0.0
    %997 = vmatpush1.msra.mxu0 0.0
    %998 = vmatprep.subr.mxu0 0.0
    %999 = vmatpush1.msra.mxu0 0.0
    %1000 = vmatprep.subr.mxu0 0.0
    %1001 = vmatpush1.msra.mxu0 0.0
    %1002 = vmatprep.subr.mxu0 0.0
    %1003 = vmatpush1.msra.mxu0 0.0
    %1004 = vmatprep.subr.mxu0 0.0
    %1005 = vmatpush1.msra.mxu0 0.0
    %1006 = vmatprep.subr.mxu0 0.0
    %1007 = vmatpush1.msra.mxu0 0.0
    %1008 = vmatprep.subr.mxu0 0.0
    %1009 = vmatpush1.msra.mxu0 0.0
    %1010 = vmatprep.subr.mxu0 0.0
    %1011 = vmatpush1.msra.mxu0 0.0
    %1012 = vmatprep.subr.mxu0 0.0
    %1013 = vmatpush1.msra.mxu0 0.0
    %1014 = vmatprep.subr.mxu0 0.0
    %1015 = vmatpush1.msra.mxu0 0.0
    %1016 = vmatprep.subr.mxu0 0.0
    %1017 = vmatpush1.msra.mxu0 0.0
    %1018 = vmatprep.subr.mxu0 0.0
    %1019 = vmatpush1.msra.mxu0 0.0
    %1020 = vmatprep.subr.mxu0 0.0
    %1021 = vmatpush1.msra.mxu0 0.0
    %1022 = vmatprep.subr.mxu0 0.0
    %1023 = vmatpush1.msra.mxu0 0.0
    %1024 = vmatprep.subr.mxu0 0.0
    %1025 = vmatpush1.msra.mxu0 0.0
    %1026 = vmatprep.subr.mxu0 0.0
    %1027 = vmatpush1.msra.mxu0 0.0
    %1028 = vmatprep.subr.mxu0 0.0
    %1029 = vmatpush1.msra.mxu0 0.0
    %1030 = vmatprep.subr.mxu0 0.0
    %1031 = vmatpush1.msra.mxu0 0.0
    %1032 = vmatprep.subr.mxu0 0.0
    %1033 = vmatpush1.msra.mxu0 0.0
    %1034 = vmatprep.subr.mxu0 0.0
    %1035 = vmatpush1.msra.mxu0 0.0
    %1036 = vmatprep.subr.mxu0 0.0
    %1037 = vmatpush1.msra.mxu0 0.0
    %1038 = vmatprep.subr.mxu0 0.0
    %1039 = vmatpush1.msra.mxu0 0.0
    %1040 = vmatprep.subr.mxu0 0.0
    %1041 = vmatpush1.msra.mxu0 0.0
    %1042 = vmatprep.subr.mxu0 0.0
    %1043 = vmatpush1.msra.mxu0 0.0
    %1044 = vmatprep.subr.mxu0 0.0
    %1045 = vmatpush1.msra.mxu0 0.0
    %1046 = vmatprep.mubr.f32.mxu0 0.0
    %1047 = vmatmul.mubr.f32.gmra.mrb[0].mxu0 %v980
    %v1048 = vpop.f32.mrb[0].mxu0
    %v1049 = vadd.f32 %v978, %v1048
    %v1050 = vpop.f32.mrb[0].mxu0
    %1051 = vdwg.mxu0
    %vm1052 = vcmp.ge.f32.partialorder %v1049, 0.0
    %v1053 = vmul.f32 %v1049, 0.01
    %v1054 = vsel %vm1052, %v1049, %v1053
    %v1055 = vld [vmem:[#allocation8 + $0x48] sm:$0xff]
    %v1056 = vld [vmem:[#allocation8 + $0x50] sm:$0xff]
    %v1057 = vld [vmem:[#allocation8 + $0x58] sm:$0x1]
    %v1058 = vlaneseq
    %v1059 = vshrl.u32 %v1058, 7
    %v1060 = vsub.s32 0, %v1059
    %v1061 = vrot.slane %v1057, %v1060
    %vm1062 = vcmask 130048
    %v1064 = vsel %vm1062, %v1054, 0
    %1066 = vmatprep.subr.mxu0 0.0
    %1067 = vmatpush1.msra.mxu0 %v1055
    %1068 = vmatprep.subr.mxu0 0.0
    %1069 = vmatpush1.msra.mxu0 %v1056
    %1070 = vmatprep.subr.mxu0 0.0
    %1071 = vmatpush1.msra.mxu0 0.0
    %1072 = vmatprep.subr.mxu0 0.0
    %1073 = vmatpush1.msra.mxu0 0.0
    %1074 = vmatprep.subr.mxu0 0.0
    %1075 = vmatpush1.msra.mxu0 0.0
    %1076 = vmatprep.subr.mxu0 0.0
    %1077 = vmatpush1.msra.mxu0 0.0
    %1078 = vmatprep.subr.mxu0 0.0
    %1079 = vmatpush1.msra.mxu0 0.0
    %1080 = vmatprep.subr.mxu0 0.0
    %1081 = vmatpush1.msra.mxu0 0.0
    %1082 = vmatprep.subr.mxu0 0.0
    %1083 = vmatpush1.msra.mxu0 0.0
    %1084 = vmatprep.subr.mxu0 0.0
    %1085 = vmatpush1.msra.mxu0 0.0
    %1086 = vmatprep.subr.mxu0 0.0
    %1087 = vmatpush1.msra.mxu0 0.0
    %1088 = vmatprep.subr.mxu0 0.0
    %1089 = vmatpush1.msra.mxu0 0.0
    %1090 = vmatprep.subr.mxu0 0.0
    %1091 = vmatpush1.msra.mxu0 0.0
    %1092 = vmatprep.subr.mxu0 0.0
    %1093 = vmatpush1.msra.mxu0 0.0
    %1094 = vmatprep.subr.mxu0 0.0
    %1095 = vmatpush1.msra.mxu0 0.0
    %1096 = vmatprep.subr.mxu0 0.0
    %1097 = vmatpush1.msra.mxu0 0.0
    %1098 = vmatprep.subr.mxu0 0.0
    %1099 = vmatpush1.msra.mxu0 0.0
    %1100 = vmatprep.subr.mxu0 0.0
    %1101 = vmatpush1.msra.mxu0 0.0
    %1102 = vmatprep.subr.mxu0 0.0
    %1103 = vmatpush1.msra.mxu0 0.0
    %1104 = vmatprep.subr.mxu0 0.0
    %1105 = vmatpush1.msra.mxu0 0.0
    %1106 = vmatprep.subr.mxu0 0.0
    %1107 = vmatpush1.msra.mxu0 0.0
    %1108 = vmatprep.subr.mxu0 0.0
    %1109 = vmatpush1.msra.mxu0 0.0
    %1110 = vmatprep.subr.mxu0 0.0
    %1111 = vmatpush1.msra.mxu0 0.0
    %1112 = vmatprep.subr.mxu0 0.0
    %1113 = vmatpush1.msra.mxu0 0.0
    %1114 = vmatprep.subr.mxu0 0.0
    %1115 = vmatpush1.msra.mxu0 0.0
    %1116 = vmatprep.subr.mxu0 0.0
    %1117 = vmatpush1.msra.mxu0 0.0
    %1118 = vmatprep.subr.mxu0 0.0
    %1119 = vmatpush1.msra.mxu0 0.0
    %1120 = vmatprep.subr.mxu0 0.0
    %1121 = vmatpush1.msra.mxu0 0.0
    %1122 = vmatprep.subr.mxu0 0.0
    %1123 = vmatpush1.msra.mxu0 0.0
    %1124 = vmatprep.subr.mxu0 0.0
    %1125 = vmatpush1.msra.mxu0 0.0
    %1126 = vmatprep.subr.mxu0 0.0
    %1127 = vmatpush1.msra.mxu0 0.0
    %1128 = vmatprep.subr.mxu0 0.0
    %1129 = vmatpush1.msra.mxu0 0.0
    %1130 = vmatprep.mubr.f32.mxu0 0.0
    %1131 = vmatmul.mubr.f32.gmra.mrb[0].mxu0 %v1064
    %v1132 = vpop.f32.mrb[0].mxu0
    %v1133 = vadd.f32 %v1061, %v1132
    %v1134 = vpop.f32.mrb[0].mxu0
    %1135 = vdwg.mxu0
    %vm1136 = vcmp.ge.f32.partialorder %v1133, 0.0
    %v1137 = vmul.f32 %v1133, 0.01
    %v1138 = vsel %vm1136, %v1133, %v1137
    %v1139 = vld [vmem:[#allocation8 + $0x60] sm:$0x1]
    %v1140 = vld [vmem:[#allocation8 + $0x68] sm:$0x1]
    %1141 = vrot.lane.b32.xlu0 %v855, 124
    %v1142 = vpop.permute.xlu0 %1141
    %vm1144 = vcmask 19456
    %v1145 = vsel %vm1144, %v1142, 0.0
    %1146 = vadd.xlane.f32.xlu0 %v1145
    %v1147 = vpop.xlane.xlu0 %1146
    %v1148 = vmul.f32 %v1147, %v403
    %v1149 = vmul.f32 %v855, %v855
    %1151 = vrot.lane.b32.xlu0 %v1149, 124
    %v1152 = vpop.permute.xlu0 %1151
    %v1154 = vsel %vm1144, %v1152, 0.0
    %1155 = vadd.xlane.f32.xlu0 %v1154
    %v1156 = vpop.xlane.xlu0 %1155
    %v1157 = vmul.f32 %v1156, %v403
    %v1158 = vmul.f32 %v1148, %v1148
    %v1159 = vsub.f32 %v1157, %v1158
    %v1160 = vmax.f32 %v1159, 0.0
    %v1161 = vsub.f32 %v855, %v1148
    %v1162 = vadd.f32 %v1160, 1e-05
    %v1163 = vrsqrt.pop %v1162
    %v1164 = vmul.f32 %v1161, %v1163
    %v1165 = vlaneseq
    %v1166 = vshrl.u32 %v1165, 7
    %v1167 = vsub.s32 0, %v1166
    %v1168 = vrot.slane %v1139, %v1167
    %1170 = vrot.lane.b32.xlu0 %v1168, 4
    %v1171 = vpop.permute.xlu0 %1170
    %v1173 = vmul.f32 %v1164, %v1171
    %v1174 = vlaneseq
    %v1175 = vshrl.u32 %v1174, 7
    %v1176 = vsub.s32 0, %v1175
    %v1177 = vrot.slane %v1140, %v1176
    %1179 = vrot.lane.b32.xlu0 %v1177, 4
    %v1180 = vpop.permute.xlu0 %1179
    %v1182 = vadd.f32 %v1173, %v1180
    %v1183 = vld [vmem:[#allocation8 + $0x70] sm:$0x7]
    %v1184 = vld [vmem:[#allocation8 + $0x78] sm:$0x1]
    %v1185 = vlaneseq
    %v1186 = vshrl.u32 %v1185, 7
    %v1187 = vsub.s32 0, %v1186
    %v1188 = vrot.slane %v1184, %v1187
    %1190 = vrot.lane.b32.xlu0 %v1182, 124
    %v1191 = vpop.permute.xlu0 %1190
    %v1192 = vsel %vm448, %v1191, 0
    %v1195 = vsel %vm451, %v1183, 0
    %1197 = vmatprep.subr.mxu0 0.0
    %1198 = vmatpush1.msra.mxu0 %v1195
    %1199 = vmatprep.subr.mxu0 0.0
    %1200 = vmatpush1.msra.mxu0 0.0
    %1201 = vmatprep.subr.mxu0 0.0
    %1202 = vmatpush1.msra.mxu0 0.0
    %1203 = vmatprep.subr.mxu0 0.0
    %1204 = vmatpush1.msra.mxu0 0.0
    %1205 = vmatprep.subr.mxu0 0.0
    %1206 = vmatpush1.msra.mxu0 0.0
    %1207 = vmatprep.subr.mxu0 0.0
    %1208 = vmatpush1.msra.mxu0 0.0
    %1209 = vmatprep.subr.mxu0 0.0
    %1210 = vmatpush1.msra.mxu0 0.0
    %1211 = vmatprep.subr.mxu0 0.0
    %1212 = vmatpush1.msra.mxu0 0.0
    %1213 = vmatprep.subr.mxu0 0.0
    %1214 = vmatpush1.msra.mxu0 0.0
    %1215 = vmatprep.subr.mxu0 0.0
    %1216 = vmatpush1.msra.mxu0 0.0
    %1217 = vmatprep.subr.mxu0 0.0
    %1218 = vmatpush1.msra.mxu0 0.0
    %1219 = vmatprep.subr.mxu0 0.0
    %1220 = vmatpush1.msra.mxu0 0.0
    %1221 = vmatprep.subr.mxu0 0.0
    %1222 = vmatpush1.msra.mxu0 0.0
    %1223 = vmatprep.subr.mxu0 0.0
    %1224 = vmatpush1.msra.mxu0 0.0
    %1225 = vmatprep.subr.mxu0 0.0
    %1226 = vmatpush1.msra.mxu0 0.0
    %1227 = vmatprep.subr.mxu0 0.0
    %1228 = vmatpush1.msra.mxu0 0.0
    %1229 = vmatprep.subr.mxu0 0.0
    %1230 = vmatpush1.msra.mxu0 0.0
    %1231 = vmatprep.subr.mxu0 0.0
    %1232 = vmatpush1.msra.mxu0 0.0
    %1233 = vmatprep.subr.mxu0 0.0
    %1234 = vmatpush1.msra.mxu0 0.0
    %1235 = vmatprep.subr.mxu0 0.0
    %1236 = vmatpush1.msra.mxu0 0.0
    %1237 = vmatprep.subr.mxu0 0.0
    %1238 = vmatpush1.msra.mxu0 0.0
    %1239 = vmatprep.subr.mxu0 0.0
    %1240 = vmatpush1.msra.mxu0 0.0
    %1241 = vmatprep.subr.mxu0 0.0
    %1242 = vmatpush1.msra.mxu0 0.0
    %1243 = vmatprep.subr.mxu0 0.0
    %1244 = vmatpush1.msra.mxu0 0.0
    %1245 = vmatprep.subr.mxu0 0.0
    %1246 = vmatpush1.msra.mxu0 0.0
    %1247 = vmatprep.subr.mxu0 0.0
    %1248 = vmatpush1.msra.mxu0 0.0
    %1249 = vmatprep.subr.mxu0 0.0
    %1250 = vmatpush1.msra.mxu0 0.0
    %1251 = vmatprep.subr.mxu0 0.0
    %1252 = vmatpush1.msra.mxu0 0.0
    %1253 = vmatprep.subr.mxu0 0.0
    %1254 = vmatpush1.msra.mxu0 0.0
    %1255 = vmatprep.subr.mxu0 0.0
    %1256 = vmatpush1.msra.mxu0 0.0
    %1257 = vmatprep.subr.mxu0 0.0
    %1258 = vmatpush1.msra.mxu0 0.0
    %1259 = vmatprep.subr.mxu0 0.0
    %1260 = vmatpush1.msra.mxu0 0.0
    %1261 = vmatprep.mubr.f32.mxu0 0.0
    %1262 = vmatmul.mubr.f32.gmra.mrb[0].mxu0 %v1192
    %v1263 = vpop.f32.mrb[0].mxu0
    %v1264 = vadd.f32 %v1188, %v1263
    %v1265 = vpop.f32.mrb[0].mxu0
    %1266 = vdwg.mxu0
    %vm1267 = vcmp.ge.f32.partialorder %v1264, 0.0
    %v1268 = vmul.f32 %v1264, 0.01
    %v1269 = vsel %vm1267, %v1264, %v1268
    %v1270 = vld [vmem:[#allocation8 + $0x80] sm:$0x7]
    %v1271 = vld [vmem:[#allocation8 + $0x88] sm:$0x1]
    %v1272 = vlaneseq
    %v1273 = vshrl.u32 %v1272, 7
    %v1274 = vsub.s32 0, %v1273
    %v1275 = vrot.slane %v1271, %v1274
    %v1277 = vsel %vm448, %v1269, 0
    %v1280 = vsel %vm451, %v1270, 0
    %1282 = vmatprep.subr.mxu0 0.0
    %1283 = vmatpush1.msra.mxu0 %v1280
    %1284 = vmatprep.subr.mxu0 0.0
    %1285 = vmatpush1.msra.mxu0 0.0
    %1286 = vmatprep.subr.mxu0 0.0
    %1287 = vmatpush1.msra.mxu0 0.0
    %1288 = vmatprep.subr.mxu0 0.0
    %1289 = vmatpush1.msra.mxu0 0.0
    %1290 = vmatprep.subr.mxu0 0.0
    %1291 = vmatpush1.msra.mxu0 0.0
    %1292 = vmatprep.subr.mxu0 0.0
    %1293 = vmatpush1.msra.mxu0 0.0
    %1294 = vmatprep.subr.mxu0 0.0
    %1295 = vmatpush1.msra.mxu0 0.0
    %1296 = vmatprep.subr.mxu0 0.0
    %1297 = vmatpush1.msra.mxu0 0.0
    %1298 = vmatprep.subr.mxu0 0.0
    %1299 = vmatpush1.msra.mxu0 0.0
    %1300 = vmatprep.subr.mxu0 0.0
    %1301 = vmatpush1.msra.mxu0 0.0
    %1302 = vmatprep.subr.mxu0 0.0
    %1303 = vmatpush1.msra.mxu0 0.0
    %1304 = vmatprep.subr.mxu0 0.0
    %1305 = vmatpush1.msra.mxu0 0.0
    %1306 = vmatprep.subr.mxu0 0.0
    %1307 = vmatpush1.msra.mxu0 0.0
    %1308 = vmatprep.subr.mxu0 0.0
    %1309 = vmatpush1.msra.mxu0 0.0
    %1310 = vmatprep.subr.mxu0 0.0
    %1311 = vmatpush1.msra.mxu0 0.0
    %1312 = vmatprep.subr.mxu0 0.0
    %1313 = vmatpush1.msra.mxu0 0.0
    %1314 = vmatprep.subr.mxu0 0.0
    %1315 = vmatpush1.msra.mxu0 0.0
    %1316 = vmatprep.subr.mxu0 0.0
    %1317 = vmatpush1.msra.mxu0 0.0
    %1318 = vmatprep.subr.mxu0 0.0
    %1319 = vmatpush1.msra.mxu0 0.0
    %1320 = vmatprep.subr.mxu0 0.0
    %1321 = vmatpush1.msra.mxu0 0.0
    %1322 = vmatprep.subr.mxu0 0.0
    %1323 = vmatpush1.msra.mxu0 0.0
    %1324 = vmatprep.subr.mxu0 0.0
    %1325 = vmatpush1.msra.mxu0 0.0
    %1326 = vmatprep.subr.mxu0 0.0
    %1327 = vmatpush1.msra.mxu0 0.0
    %1328 = vmatprep.subr.mxu0 0.0
    %1329 = vmatpush1.msra.mxu0 0.0
    %1330 = vmatprep.subr.mxu0 0.0
    %1331 = vmatpush1.msra.mxu0 0.0
    %1332 = vmatprep.subr.mxu0 0.0
    %1333 = vmatpush1.msra.mxu0 0.0
    %1334 = vmatprep.subr.mxu0 0.0
    %1335 = vmatpush1.msra.mxu0 0.0
    %1336 = vmatprep.subr.mxu0 0.0
    %1337 = vmatpush1.msra.mxu0 0.0
    %1338 = vmatprep.subr.mxu0 0.0
    %1339 = vmatpush1.msra.mxu0 0.0
    %1340 = vmatprep.subr.mxu0 0.0
    %1341 = vmatpush1.msra.mxu0 0.0
    %1342 = vmatprep.subr.mxu0 0.0
    %1343 = vmatpush1.msra.mxu0 0.0
    %1344 = vmatprep.subr.mxu0 0.0
    %1345 = vmatpush1.msra.mxu0 0.0
    %1346 = vmatprep.mubr.f32.mxu0 0.0
    %1347 = vmatmul.mubr.f32.gmra.mrb[0].mxu0 %v1277
    %v1348 = vpop.f32.mrb[0].mxu0
    %v1349 = vadd.f32 %v1275, %v1348
    %v1350 = vpop.f32.mrb[0].mxu0
    %1351 = vdwg.mxu0
    %v1352 = vld [vmem:[#allocation8 + $0x90] sm:$0xff]
    %v1353 = vld [vmem:[#allocation8 + $0x98] sm:$0xff]
    %v1354 = vld [vmem:[#allocation8 + $0xa0] sm:$0x7]
    %v1356 = vsel %vm448, %v1349, 0
    %v1359 = vsel %vm451, %v1354, 0
    %1361 = vmatprep.subr.mxu0 0.0
    %1362 = vmatpush1.msra.mxu0 %v1359
    %1363 = vmatprep.subr.mxu0 0.0
    %1364 = vmatpush1.msra.mxu0 0.0
    %1365 = vmatprep.subr.mxu0 0.0
    %1366 = vmatpush1.msra.mxu0 0.0
    %1367 = vmatprep.subr.mxu0 0.0
    %1368 = vmatpush1.msra.mxu0 0.0
    %1369 = vmatprep.subr.mxu0 0.0
    %1370 = vmatpush1.msra.mxu0 0.0
    %1371 = vmatprep.subr.mxu0 0.0
    %1372 = vmatpush1.msra.mxu0 0.0
    %1373 = vmatprep.subr.mxu0 0.0
    %1374 = vmatpush1.msra.mxu0 0.0
    %1375 = vmatprep.subr.mxu0 0.0
    %1376 = vmatpush1.msra.mxu0 0.0
    %1377 = vmatprep.subr.mxu0 0.0
    %1378 = vmatpush1.msra.mxu0 0.0
    %1379 = vmatprep.subr.mxu0 0.0
    %1380 = vmatpush1.msra.mxu0 0.0
    %1381 = vmatprep.subr.mxu0 0.0
    %1382 = vmatpush1.msra.mxu0 0.0
    %1383 = vmatprep.subr.mxu0 0.0
    %1384 = vmatpush1.msra.mxu0 0.0
    %1385 = vmatprep.subr.mxu0 0.0
    %1386 = vmatpush1.msra.mxu0 0.0
    %1387 = vmatprep.subr.mxu0 0.0
    %1388 = vmatpush1.msra.mxu0 0.0
    %1389 = vmatprep.subr.mxu0 0.0
    %1390 = vmatpush1.msra.mxu0 0.0
    %1391 = vmatprep.subr.mxu0 0.0
    %1392 = vmatpush1.msra.mxu0 0.0
    %1393 = vmatprep.subr.mxu0 0.0
    %1394 = vmatpush1.msra.mxu0 0.0
    %1395 = vmatprep.subr.mxu0 0.0
    %1396 = vmatpush1.msra.mxu0 0.0
    %1397 = vmatprep.subr.mxu0 0.0
    %1398 = vmatpush1.msra.mxu0 0.0
    %1399 = vmatprep.subr.mxu0 0.0
    %1400 = vmatpush1.msra.mxu0 0.0
    %1401 = vmatprep.subr.mxu0 0.0
    %1402 = vmatpush1.msra.mxu0 0.0
    %1403 = vmatprep.subr.mxu0 0.0
    %1404 = vmatpush1.msra.mxu0 0.0
    %1405 = vmatprep.subr.mxu0 0.0
    %1406 = vmatpush1.msra.mxu0 0.0
    %1407 = vmatprep.subr.mxu0 0.0
    %1408 = vmatpush1.msra.mxu0 0.0
    %1409 = vmatprep.subr.mxu0 0.0
    %1410 = vmatpush1.msra.mxu0 0.0
    %1411 = vmatprep.subr.mxu0 0.0
    %1412 = vmatpush1.msra.mxu0 0.0
    %1413 = vmatprep.subr.mxu0 0.0
    %1414 = vmatpush1.msra.mxu0 0.0
    %1415 = vmatprep.subr.mxu0 0.0
    %1416 = vmatpush1.msra.mxu0 0.0
    %1417 = vmatprep.subr.mxu0 0.0
    %1418 = vmatpush1.msra.mxu0 0.0
    %1419 = vmatprep.subr.mxu0 0.0
    %1420 = vmatpush1.msra.mxu0 0.0
    %1421 = vmatprep.subr.mxu0 0.0
    %1422 = vmatpush1.msra.mxu0 0.0
    %1423 = vmatprep.subr.mxu0 0.0
    %1424 = vmatpush1.msra.mxu0 0.0
    %1425 = vmatprep.mubr.f32.mxu0 0.0
    %1426 = vmatmul.mubr.f32.gmra.mrb[0].mxu0 %v1356
    %v1427 = vpop.f32.mrb[0].mxu0
    %v1428 = vadd.f32 0.0, %v1427
    %v1429 = vpop.f32.mrb[0].mxu0
    %1430 = vdwg.mxu0
    %v1432 = vsel %vm1062, %v1138, 0
    %1434 = vmatprep.subr.mxu0 0.0
    %1435 = vmatpush1.msra.mxu0 %v1352
    %1436 = vmatprep.subr.mxu0 0.0
    %1437 = vmatpush1.msra.mxu0 %v1353
    %1438 = vmatprep.subr.mxu0 0.0
    %1439 = vmatpush1.msra.mxu0 0.0
    %1440 = vmatprep.subr.mxu0 0.0
    %1441 = vmatpush1.msra.mxu0 0.0
    %1442 = vmatprep.subr.mxu0 0.0
    %1443 = vmatpush1.msra.mxu0 0.0
    %1444 = vmatprep.subr.mxu0 0.0
    %1445 = vmatpush1.msra.mxu0 0.0
    %1446 = vmatprep.subr.mxu0 0.0
    %1447 = vmatpush1.msra.mxu0 0.0
    %1448 = vmatprep.subr.mxu0 0.0
    %1449 = vmatpush1.msra.mxu0 0.0
    %1450 = vmatprep.subr.mxu0 0.0
    %1451 = vmatpush1.msra.mxu0 0.0
    %1452 = vmatprep.subr.mxu0 0.0
    %1453 = vmatpush1.msra.mxu0 0.0
    %1454 = vmatprep.subr.mxu0 0.0
    %1455 = vmatpush1.msra.mxu0 0.0
    %1456 = vmatprep.subr.mxu0 0.0
    %1457 = vmatpush1.msra.mxu0 0.0
    %1458 = vmatprep.subr.mxu0 0.0
    %1459 = vmatpush1.msra.mxu0 0.0
    %1460 = vmatprep.subr.mxu0 0.0
    %1461 = vmatpush1.msra.mxu0 0.0
    %1462 = vmatprep.subr.mxu0 0.0
    %1463 = vmatpush1.msra.mxu0 0.0
    %1464 = vmatprep.subr.mxu0 0.0
    %1465 = vmatpush1.msra.mxu0 0.0
    %1466 = vmatprep.subr.mxu0 0.0
    %1467 = vmatpush1.msra.mxu0 0.0
    %1468 = vmatprep.subr.mxu0 0.0
    %1469 = vmatpush1.msra.mxu0 0.0
    %1470 = vmatprep.subr.mxu0 0.0
    %1471 = vmatpush1.msra.mxu0 0.0
    %1472 = vmatprep.subr.mxu0 0.0
    %1473 = vmatpush1.msra.mxu0 0.0
    %1474 = vmatprep.subr.mxu0 0.0
    %1475 = vmatpush1.msra.mxu0 0.0
    %1476 = vmatprep.subr.mxu0 0.0
    %1477 = vmatpush1.msra.mxu0 0.0
    %1478 = vmatprep.subr.mxu0 0.0
    %1479 = vmatpush1.msra.mxu0 0.0
    %1480 = vmatprep.subr.mxu0 0.0
    %1481 = vmatpush1.msra.mxu0 0.0
    %1482 = vmatprep.subr.mxu0 0.0
    %1483 = vmatpush1.msra.mxu0 0.0
    %1484 = vmatprep.subr.mxu0 0.0
    %1485 = vmatpush1.msra.mxu0 0.0
    %1486 = vmatprep.subr.mxu0 0.0
    %1487 = vmatpush1.msra.mxu0 0.0
    %1488 = vmatprep.subr.mxu0 0.0
    %1489 = vmatpush1.msra.mxu0 0.0
    %1490 = vmatprep.subr.mxu0 0.0
    %1491 = vmatpush1.msra.mxu0 0.0
    %1492 = vmatprep.subr.mxu0 0.0
    %1493 = vmatpush1.msra.mxu0 0.0
    %1494 = vmatprep.subr.mxu0 0.0
    %1495 = vmatpush1.msra.mxu0 0.0
    %1496 = vmatprep.subr.mxu0 0.0
    %1497 = vmatpush1.msra.mxu0 0.0
    %1498 = vmatprep.mubr.f32.mxu0 0.0
    %1499 = vmatmul.mubr.f32.gmra.mrb[0].mxu0 %v1432
    %v1500 = vpop.f32.mrb[0].mxu0
    %v1501 = vadd.f32 %v1428, %v1500
    %v1502 = vpop.f32.mrb[0].mxu0
    %1503 = vdwg.mxu0
    %v1504 = vld [vmem:[#allocation8 + $0xa8] sm:$0x1]
    %v1505 = vlaneseq
    %v1506 = vshrl.u32 %v1505, 7
    %v1507 = vsub.s32 0, %v1506
    %v1508 = vrot.slane %v1504, %v1507
    %v1509 = vadd.f32 %v1501, %v1508
    %vm1510 = vcmp.ge.f32.partialorder %v1509, 0.0
    %v1511 = vmul.f32 %v1509, 0.01
    %v1512 = vsel %vm1510, %v1509, %v1511
    %v1513 = vld [vmem:[#allocation8 + $0xb0] sm:$0xff]
    %v1514 = vld [vmem:[#allocation8 + $0xb8] sm:$0xff]
    %v1515 = vld [vmem:[#allocation8 + $0xc0] sm:$0xff]
    %v1516 = vld [vmem:[#allocation8 + $0xc8] sm:$0xff]
    %v1517 = vld [vmem:[#allocation8 + $0xd0] sm:$0x1]
    %v1518 = vlaneseq
    %v1519 = vshrl.u32 %v1518, 7
    %v1520 = vsub.s32 0, %v1519
    %v1521 = vrot.slane %v1517, %v1520
    %v1523 = vsel %vm779, %v1512, 0
    %1525 = vmatprep.subr.mxu0 0.0
    %1526 = vmatpush1.msra.mxu0 %v1513
    %1527 = vmatprep.subr.mxu0 0.0
    %1528 = vmatpush1.msra.mxu0 %v1514
    %1529 = vmatprep.subr.mxu0 0.0
    %1530 = vmatpush1.msra.mxu0 %v1515
    %1531 = vmatprep.subr.mxu0 0.0
    %1532 = vmatpush1.msra.mxu0 %v1516
    %1533 = vmatprep.subr.mxu0 0.0
    %1534 = vmatpush1.msra.mxu0 0.0
    %1535 = vmatprep.subr.mxu0 0.0
    %1536 = vmatpush1.msra.mxu0 0.0
    %1537 = vmatprep.subr.mxu0 0.0
    %1538 = vmatpush1.msra.mxu0 0.0
    %1539 = vmatprep.subr.mxu0 0.0
    %1540 = vmatpush1.msra.mxu0 0.0
    %1541 = vmatprep.subr.mxu0 0.0
    %1542 = vmatpush1.msra.mxu0 0.0
    %1543 = vmatprep.subr.mxu0 0.0
    %1544 = vmatpush1.msra.mxu0 0.0
    %1545 = vmatprep.subr.mxu0 0.0
    %1546 = vmatpush1.msra.mxu0 0.0
    %1547 = vmatprep.subr.mxu0 0.0
    %1548 = vmatpush1.msra.mxu0 0.0
    %1549 = vmatprep.subr.mxu0 0.0
    %1550 = vmatpush1.msra.mxu0 0.0
    %1551 = vmatprep.subr.mxu0 0.0
    %1552 = vmatpush1.msra.mxu0 0.0
    %1553 = vmatprep.subr.mxu0 0.0
    %1554 = vmatpush1.msra.mxu0 0.0
    %1555 = vmatprep.subr.mxu0 0.0
    %1556 = vmatpush1.msra.mxu0 0.0
    %1557 = vmatprep.subr.mxu0 0.0
    %1558 = vmatpush1.msra.mxu0 0.0
    %1559 = vmatprep.subr.mxu0 0.0
    %1560 = vmatpush1.msra.mxu0 0.0
    %1561 = vmatprep.subr.mxu0 0.0
    %1562 = vmatpush1.msra.mxu0 0.0
    %1563 = vmatprep.subr.mxu0 0.0
    %1564 = vmatpush1.msra.mxu0 0.0
    %1565 = vmatprep.subr.mxu0 0.0
    %1566 = vmatpush1.msra.mxu0 0.0
    %1567 = vmatprep.subr.mxu0 0.0
    %1568 = vmatpush1.msra.mxu0 0.0
    %1569 = vmatprep.subr.mxu0 0.0
    %1570 = vmatpush1.msra.mxu0 0.0
    %1571 = vmatprep.subr.mxu0 0.0
    %1572 = vmatpush1.msra.mxu0 0.0
    %1573 = vmatprep.subr.mxu0 0.0
    %1574 = vmatpush1.msra.mxu0 0.0
    %1575 = vmatprep.subr.mxu0 0.0
    %1576 = vmatpush1.msra.mxu0 0.0
    %1577 = vmatprep.subr.mxu0 0.0
    %1578 = vmatpush1.msra.mxu0 0.0
    %1579 = vmatprep.subr.mxu0 0.0
    %1580 = vmatpush1.msra.mxu0 0.0
    %1581 = vmatprep.subr.mxu0 0.0
    %1582 = vmatpush1.msra.mxu0 0.0
    %1583 = vmatprep.subr.mxu0 0.0
    %1584 = vmatpush1.msra.mxu0 0.0
    %1585 = vmatprep.subr.mxu0 0.0
    %1586 = vmatpush1.msra.mxu0 0.0
    %1587 = vmatprep.subr.mxu0 0.0
    %1588 = vmatpush1.msra.mxu0 0.0
    %1589 = vmatprep.mubr.f32.mxu0 0.0
    %1590 = vmatmul.mubr.f32.gmra.mrb[0].mxu0 %v1523
    %v1591 = vpop.f32.mrb[0].mxu0
    %v1592 = vadd.f32 %v1521, %v1591
    %v1593 = vpop.f32.mrb[0].mxu0
    %1594 = vdwg.mxu0
    %1595 = vst.msk [vmem:[#allocation14] sm:$0xf] %vm942, %v1592
    %v1596 = vld [vmem:[%s2] sm:$0x3]
    %v1597 = vld [vmem:[#allocation10] sm:$0x3f]
    %v1598 = vld [vmem:[#allocation10 + $0x8] sm:$0x1]
    %v1599 = vlaneseq
    %v1600 = vshrl.u32 %v1599, 7
    %v1601 = vsub.s32 0, %v1600
    %v1602 = vrot.slane %v1598, %v1601
    %vm1603 = vcmask 48128
    %v1605 = vsel %vm1603, %v1596, 0
    %vm1607 = vcmask 1045504
    %v1609 = vsel %vm1607, %v1597, 0
    %1611 = vmatprep.subr.mxu0 0.0
    %1612 = vmatpush1.msra.mxu0 %v1609
    %1613 = vmatprep.subr.mxu0 0.0
    %1614 = vmatpush1.msra.mxu0 0.0
    %1615 = vmatprep.subr.mxu0 0.0
    %1616 = vmatpush1.msra.mxu0 0.0
    %1617 = vmatprep.subr.mxu0 0.0
    %1618 = vmatpush1.msra.mxu0 0.0
    %1619 = vmatprep.subr.mxu0 0.0
    %1620 = vmatpush1.msra.mxu0 0.0
    %1621 = vmatprep.subr.mxu0 0.0
    %1622 = vmatpush1.msra.mxu0 0.0
    %1623 = vmatprep.subr.mxu0 0.0
    %1624 = vmatpush1.msra.mxu0 0.0
    %1625 = vmatprep.subr.mxu0 0.0
    %1626 = vmatpush1.msra.mxu0 0.0
    %1627 = vmatprep.subr.mxu0 0.0
    %1628 = vmatpush1.msra.mxu0 0.0
    %1629 = vmatprep.subr.mxu0 0.0
    %1630 = vmatpush1.msra.mxu0 0.0
    %1631 = vmatprep.subr.mxu0 0.0
    %1632 = vmatpush1.msra.mxu0 0.0
    %1633 = vmatprep.subr.mxu0 0.0
    %1634 = vmatpush1.msra.mxu0 0.0
    %1635 = vmatprep.subr.mxu0 0.0
    %1636 = vmatpush1.msra.mxu0 0.0
    %1637 = vmatprep.subr.mxu0 0.0
    %1638 = vmatpush1.msra.mxu0 0.0
    %1639 = vmatprep.subr.mxu0 0.0
    %1640 = vmatpush1.msra.mxu0 0.0
    %1641 = vmatprep.subr.mxu0 0.0
    %1642 = vmatpush1.msra.mxu0 0.0
    %1643 = vmatprep.subr.mxu0 0.0
    %1644 = vmatpush1.msra.mxu0 0.0
    %1645 = vmatprep.subr.mxu0 0.0
    %1646 = vmatpush1.msra.mxu0 0.0
    %1647 = vmatprep.subr.mxu0 0.0
    %1648 = vmatpush1.msra.mxu0 0.0
    %1649 = vmatprep.subr.mxu0 0.0
    %1650 = vmatpush1.msra.mxu0 0.0
    %1651 = vmatprep.subr.mxu0 0.0
    %1652 = vmatpush1.msra.mxu0 0.0
    %1653 = vmatprep.subr.mxu0 0.0
    %1654 = vmatpush1.msra.mxu0 0.0
    %1655 = vmatprep.subr.mxu0 0.0
    %1656 = vmatpush1.msra.mxu0 0.0
    %1657 = vmatprep.subr.mxu0 0.0
    %1658 = vmatpush1.msra.mxu0 0.0
    %1659 = vmatprep.subr.mxu0 0.0
    %1660 = vmatpush1.msra.mxu0 0.0
    %1661 = vmatprep.subr.mxu0 0.0
    %1662 = vmatpush1.msra.mxu0 0.0
    %1663 = vmatprep.subr.mxu0 0.0
    %1664 = vmatpush1.msra.mxu0 0.0
    %1665 = vmatprep.subr.mxu0 0.0
    %1666 = vmatpush1.msra.mxu0 0.0
    %1667 = vmatprep.subr.mxu0 0.0
    %1668 = vmatpush1.msra.mxu0 0.0
    %1669 = vmatprep.subr.mxu0 0.0
    %1670 = vmatpush1.msra.mxu0 0.0
    %1671 = vmatprep.subr.mxu0 0.0
    %1672 = vmatpush1.msra.mxu0 0.0
    %1673 = vmatprep.subr.mxu0 0.0
    %1674 = vmatpush1.msra.mxu0 0.0
    %1675 = vmatprep.mubr.f32.mxu0 0.0
    %1676 = vmatmul.mubr.f32.gmra.mrb[0].mxu0 %v1605
    %v1677 = vpop.f32.mrb[0].mxu0
    %v1678 = vadd.f32 %v1602, %v1677
    %v1679 = vpop.f32.mrb[0].mxu0
    %1680 = vdwg.mxu0
    %v1681 = vld [vmem:[#allocation10 + $0x10] sm:$0x1]
    %v1682 = vld [vmem:[#allocation10 + $0x18] sm:$0x1]
    %vm1683 = vcmask 582656
    %v1684 = vsel %vm1683, %v1678, 0.0
    %1685 = vadd.xlane.f32.xlu0 %v1684
    %v1686 = vpop.xlane.xlu0 %1685
    %v1687 = vrcp.pop 72.0
    %v1688 = vmul.f32 %v1686, %v1687
    %v1689 = vmul.f32 %v1678, %v1678
    %v1690 = vsel %vm1683, %v1689, 0.0
    %1691 = vadd.xlane.f32.xlu0 %v1690
    %v1692 = vpop.xlane.xlu0 %1691
    %v1693 = vmul.f32 %v1692, %v1687
    %v1694 = vmul.f32 %v1688, %v1688
    %v1695 = vsub.f32 %v1693, %v1694
    %v1696 = vmax.f32 %v1695, 0.0
    %v1697 = vsub.f32 %v1678, %v1688
    %v1698 = vadd.f32 %v1696, 1e-05
    %v1699 = vrsqrt.pop %v1698
    %v1700 = vmul.f32 %v1697, %v1699
    %v1701 = vlaneseq
    %v1702 = vshrl.u32 %v1701, 7
    %v1703 = vsub.s32 0, %v1702
    %v1704 = vrot.slane %v1681, %v1703
    %v1705 = vmul.f32 %v1700, %v1704
    %v1706 = vlaneseq
    %v1707 = vshrl.u32 %v1706, 7
    %v1708 = vsub.s32 0, %v1707
    %v1709 = vrot.slane %v1682, %v1708
    %v1710 = vadd.f32 %v1705, %v1709
    %v1711 = vld [vmem:[#allocation10 + $0x20] sm:$0xff]
    %v1712 = vld [vmem:[#allocation10 + $0x28] sm:$0xff]
    %v1713 = vld [vmem:[#allocation10 + $0x30] sm:$0xff]
    %v1714 = vld [vmem:[#allocation10 + $0x38] sm:$0xff]
    %v1715 = vld [vmem:[#allocation10 + $0x40] sm:$0xff]
    %v1716 = vld [vmem:[#allocation10 + $0x48] sm:$0xff]
    %v1717 = vld [vmem:[#allocation10 + $0x50] sm:$0xff]
    %v1718 = vld [vmem:[#allocation10 + $0x58] sm:$0xff]
    %v1719 = vld [vmem:[#allocation10 + $0x60] sm:$0xff]
    %v1720 = vld [vmem:[#allocation10 + $0x68] sm:$0x1]
    %v1721 = vlaneseq
    %v1722 = vshrl.u32 %v1721, 7
    %v1723 = vsub.s32 0, %v1722
    %v1724 = vrot.slane %v1720, %v1723
    %vm1725 = vcmask 588800
    %v1727 = vsel %vm1725, %v1710, 0
    %1729 = vmatprep.subr.mxu0 0.0
    %1730 = vmatpush1.msra.mxu0 %v1711
    %1731 = vmatprep.subr.mxu0 0.0
    %1732 = vmatpush1.msra.mxu0 %v1712
    %1733 = vmatprep.subr.mxu0 0.0
    %1734 = vmatpush1.msra.mxu0 %v1713
    %1735 = vmatprep.subr.mxu0 0.0
    %1736 = vmatpush1.msra.mxu0 %v1714
    %1737 = vmatprep.subr.mxu0 0.0
    %1738 = vmatpush1.msra.mxu0 %v1715
    %1739 = vmatprep.subr.mxu0 0.0
    %1740 = vmatpush1.msra.mxu0 %v1716
    %1741 = vmatprep.subr.mxu0 0.0
    %1742 = vmatpush1.msra.mxu0 %v1717
    %1743 = vmatprep.subr.mxu0 0.0
    %1744 = vmatpush1.msra.mxu0 %v1718
    %1745 = vmatprep.subr.mxu0 0.0
    %1746 = vmatpush1.msra.mxu0 %v1719
    %1747 = vmatprep.subr.mxu0 0.0
    %1748 = vmatpush1.msra.mxu0 0.0
    %1749 = vmatprep.subr.mxu0 0.0
    %1750 = vmatpush1.msra.mxu0 0.0
    %1751 = vmatprep.subr.mxu0 0.0
    %1752 = vmatpush1.msra.mxu0 0.0
    %1753 = vmatprep.subr.mxu0 0.0
    %1754 = vmatpush1.msra.mxu0 0.0
    %1755 = vmatprep.subr.mxu0 0.0
    %1756 = vmatpush1.msra.mxu0 0.0
    %1757 = vmatprep.subr.mxu0 0.0
    %1758 = vmatpush1.msra.mxu0 0.0
    %1759 = vmatprep.subr.mxu0 0.0
    %1760 = vmatpush1.msra.mxu0 0.0
    %1761 = vmatprep.subr.mxu0 0.0
    %1762 = vmatpush1.msra.mxu0 0.0
    %1763 = vmatprep.subr.mxu0 0.0
    %1764 = vmatpush1.msra.mxu0 0.0
    %1765 = vmatprep.subr.mxu0 0.0
    %1766 = vmatpush1.msra.mxu0 0.0
    %1767 = vmatprep.subr.mxu0 0.0
    %1768 = vmatpush1.msra.mxu0 0.0
    %1769 = vmatprep.subr.mxu0 0.0
    %1770 = vmatpush1.msra.mxu0 0.0
    %1771 = vmatprep.subr.mxu0 0.0
    %1772 = vmatpush1.msra.mxu0 0.0
    %1773 = vmatprep.subr.mxu0 0.0
    %1774 = vmatpush1.msra.mxu0 0.0
    %1775 = vmatprep.subr.mxu0 0.0
    %1776 = vmatpush1.msra.mxu0 0.0
    %1777 = vmatprep.subr.mxu0 0.0
    %1778 = vmatpush1.msra.mxu0 0.0
    %1779 = vmatprep.subr.mxu0 0.0
    %1780 = vmatpush1.msra.mxu0 0.0
    %1781 = vmatprep.subr.mxu0 0.0
    %1782 = vmatpush1.msra.mxu0 0.0
    %1783 = vmatprep.subr.mxu0 0.0
    %1784 = vmatpush1.msra.mxu0 0.0
    %1785 = vmatprep.subr.mxu0 0.0
    %1786 = vmatpush1.msra.mxu0 0.0
    %1787 = vmatprep.subr.mxu0 0.0
    %1788 = vmatpush1.msra.mxu0 0.0
    %1789 = vmatprep.subr.mxu0 0.0
    %1790 = vmatpush1.msra.mxu0 0.0
    %1791 = vmatprep.subr.mxu0 0.0
    %1792 = vmatpush1.msra.mxu0 0.0
    %1793 = vmatprep.mubr.f32.mxu0 0.0
    %1794 = vmatmul.mubr.f32.gmra.mrb[0].mxu0 %v1727
    %v1795 = vpop.f32.mrb[0].mxu0
    %v1796 = vadd.f32 %v1724, %v1795
    %v1797 = vpop.f32.mrb[0].mxu0
    %1798 = vdwg.mxu0
    %vm1799 = vcmp.ge.f32.partialorder %v1796, 0.0
    %v1800 = vmul.f32 %v1796, 0.01
    %v1801 = vsel %vm1799, %v1796, %v1800
    %v1802 = vld [vmem:[#allocation10 + $0x70] sm:$0xff]
    %v1803 = vld [vmem:[#allocation10 + $0x78] sm:$0xff]
    %v1804 = vld [vmem:[#allocation10 + $0x80] sm:$0xff]
    %v1805 = vld [vmem:[#allocation10 + $0x88] sm:$0x1]
    %v1806 = vlaneseq
    %v1807 = vshrl.u32 %v1806, 7
    %v1808 = vsub.s32 0, %v1807
    %v1809 = vrot.slane %v1805, %v1808
    %vm1810 = vcmask 195584
    %v1812 = vsel %vm1810, %v1801, 0
    %1814 = vmatprep.subr.mxu0 0.0
    %1815 = vmatpush1.msra.mxu0 %v1802
    %1816 = vmatprep.subr.mxu0 0.0
    %1817 = vmatpush1.msra.mxu0 %v1803
    %1818 = vmatprep.subr.mxu0 0.0
    %1819 = vmatpush1.msra.mxu0 %v1804
    %1820 = vmatprep.subr.mxu0 0.0
    %1821 = vmatpush1.msra.mxu0 0.0
    %1822 = vmatprep.subr.mxu0 0.0
    %1823 = vmatpush1.msra.mxu0 0.0
    %1824 = vmatprep.subr.mxu0 0.0
    %1825 = vmatpush1.msra.mxu0 0.0
    %1826 = vmatprep.subr.mxu0 0.0
    %1827 = vmatpush1.msra.mxu0 0.0
    %1828 = vmatprep.subr.mxu0 0.0
    %1829 = vmatpush1.msra.mxu0 0.0
    %1830 = vmatprep.subr.mxu0 0.0
    %1831 = vmatpush1.msra.mxu0 0.0
    %1832 = vmatprep.subr.mxu0 0.0
    %1833 = vmatpush1.msra.mxu0 0.0
    %1834 = vmatprep.subr.mxu0 0.0
    %1835 = vmatpush1.msra.mxu0 0.0
    %1836 = vmatprep.subr.mxu0 0.0
    %1837 = vmatpush1.msra.mxu0 0.0
    %1838 = vmatprep.subr.mxu0 0.0
    %1839 = vmatpush1.msra.mxu0 0.0
    %1840 = vmatprep.subr.mxu0 0.0
    %1841 = vmatpush1.msra.mxu0 0.0
    %1842 = vmatprep.subr.mxu0 0.0
    %1843 = vmatpush1.msra.mxu0 0.0
    %1844 = vmatprep.subr.mxu0 0.0
    %1845 = vmatpush1.msra.mxu0 0.0
    %1846 = vmatprep.subr.mxu0 0.0
    %1847 = vmatpush1.msra.mxu0 0.0
    %1848 = vmatprep.subr.mxu0 0.0
    %1849 = vmatpush1.msra.mxu0 0.0
    %1850 = vmatprep.subr.mxu0 0.0
    %1851 = vmatpush1.msra.mxu0 0.0
    %1852 = vmatprep.subr.mxu0 0.0
    %1853 = vmatpush1.msra.mxu0 0.0
    %1854 = vmatprep.subr.mxu0 0.0
    %1855 = vmatpush1.msra.mxu0 0.0
    %1856 = vmatprep.subr.mxu0 0.0
    %1857 = vmatpush1.msra.mxu0 0.0
    %1858 = vmatprep.subr.mxu0 0.0
    %1859 = vmatpush1.msra.mxu0 0.0
    %1860 = vmatprep.subr.mxu0 0.0
    %1861 = vmatpush1.msra.mxu0 0.0
    %1862 = vmatprep.subr.mxu0 0.0
    %1863 = vmatpush1.msra.mxu0 0.0
    %1864 = vmatprep.subr.mxu0 0.0
    %1865 = vmatpush1.msra.mxu0 0.0
    %1866 = vmatprep.subr.mxu0 0.0
    %1867 = vmatpush1.msra.mxu0 0.0
    %1868 = vmatprep.subr.mxu0 0.0
    %1869 = vmatpush1.msra.mxu0 0.0
    %1870 = vmatprep.subr.mxu0 0.0
    %1871 = vmatpush1.msra.mxu0 0.0
    %1872 = vmatprep.subr.mxu0 0.0
    %1873 = vmatpush1.msra.mxu0 0.0
    %1874 = vmatprep.subr.mxu0 0.0
    %1875 = vmatpush1.msra.mxu0 0.0
    %1876 = vmatprep.subr.mxu0 0.0
    %1877 = vmatpush1.msra.mxu0 0.0
    %1878 = vmatprep.mubr.f32.mxu0 0.0
    %1879 = vmatmul.mubr.f32.gmra.mrb[0].mxu0 %v1812
    %v1880 = vpop.f32.mrb[0].mxu0
    %v1881 = vadd.f32 %v1809, %v1880
    %v1882 = vpop.f32.mrb[0].mxu0
    %1883 = vdwg.mxu0
    %vm1884 = vcmp.ge.f32.partialorder %v1881, 0.0
    %v1885 = vmul.f32 %v1881, 0.01
    %v1886 = vsel %vm1884, %v1881, %v1885
    %v1887 = vld [vmem:[#allocation10 + $0x90] sm:$0x1]
    %v1888 = vld [vmem:[#allocation10 + $0x98] sm:$0x1]
    %1889 = vrot.lane.b32.xlu0 %v1596, 122
    %v1890 = vpop.permute.xlu0 %1889
    %vm1892 = vcmask 25600
    %v1893 = vsel %vm1892, %v1890, 0.0
    %1894 = vadd.xlane.f32.xlu0 %v1893
    %v1895 = vpop.xlane.xlu0 %1894
    %v1896 = vrcp.pop 4.0
    %v1897 = vmul.f32 %v1895, %v1896
    %v1898 = vmul.f32 %v1596, %v1596
    %1900 = vrot.lane.b32.xlu0 %v1898, 122
    %v1901 = vpop.permute.xlu0 %1900
    %v1903 = vsel %vm1892, %v1901, 0.0
    %1904 = vadd.xlane.f32.xlu0 %v1903
    %v1905 = vpop.xlane.xlu0 %1904
    %v1906 = vmul.f32 %v1905, %v1896
    %v1907 = vmul.f32 %v1897, %v1897
    %v1908 = vsub.f32 %v1906, %v1907
    %v1909 = vmax.f32 %v1908, 0.0
    %v1910 = vsub.f32 %v1596, %v1897
    %v1911 = vadd.f32 %v1909, 1e-05
    %v1912 = vrsqrt.pop %v1911
    %v1913 = vmul.f32 %v1910, %v1912
    %v1914 = vlaneseq
    %v1915 = vshrl.u32 %v1914, 7
    %v1916 = vsub.s32 0, %v1915
    %v1917 = vrot.slane %v1887, %v1916
    %1919 = vrot.lane.b32.xlu0 %v1917, 6
    %v1920 = vpop.permute.xlu0 %1919
    %v1922 = vmul.f32 %v1913, %v1920
    %v1923 = vlaneseq
    %v1924 = vshrl.u32 %v1923, 7
    %v1925 = vsub.s32 0, %v1924
    %v1926 = vrot.slane %v1888, %v1925
    %1928 = vrot.lane.b32.xlu0 %v1926, 6
    %v1929 = vpop.permute.xlu0 %1928
    %v1931 = vadd.f32 %v1922, %v1929
    %v1932 = vld [vmem:[#allocation10 + $0xa0] sm:$0xf]
    %v1933 = vld [vmem:[#allocation10 + $0xa8] sm:$0x1]
    %v1934 = vlaneseq
    %v1935 = vshrl.u32 %v1934, 7
    %v1936 = vsub.s32 0, %v1935
    %v1937 = vrot.slane %v1933, %v1936
    %1939 = vrot.lane.b32.xlu0 %v1931, 122
    %v1940 = vpop.permute.xlu0 %1939
    %v1941 = vsel %vm862, %v1940, 0
    %v1944 = vsel %vm866, %v1932, 0
    %1946 = vmatprep.subr.mxu0 0.0
    %1947 = vmatpush1.msra.mxu0 %v1944
    %1948 = vmatprep.subr.mxu0 0.0
    %1949 = vmatpush1.msra.mxu0 0.0
    %1950 = vmatprep.subr.mxu0 0.0
    %1951 = vmatpush1.msra.mxu0 0.0
    %1952 = vmatprep.subr.mxu0 0.0
    %1953 = vmatpush1.msra.mxu0 0.0
    %1954 = vmatprep.subr.mxu0 0.0
    %1955 = vmatpush1.msra.mxu0 0.0
    %1956 = vmatprep.subr.mxu0 0.0
    %1957 = vmatpush1.msra.mxu0 0.0
    %1958 = vmatprep.subr.mxu0 0.0
    %1959 = vmatpush1.msra.mxu0 0.0
    %1960 = vmatprep.subr.mxu0 0.0
    %1961 = vmatpush1.msra.mxu0 0.0
    %1962 = vmatprep.subr.mxu0 0.0
    %1963 = vmatpush1.msra.mxu0 0.0
    %1964 = vmatprep.subr.mxu0 0.0
    %1965 = vmatpush1.msra.mxu0 0.0
    %1966 = vmatprep.subr.mxu0 0.0
    %1967 = vmatpush1.msra.mxu0 0.0
    %1968 = vmatprep.subr.mxu0 0.0
    %1969 = vmatpush1.msra.mxu0 0.0
    %1970 = vmatprep.subr.mxu0 0.0
    %1971 = vmatpush1.msra.mxu0 0.0
    %1972 = vmatprep.subr.mxu0 0.0
    %1973 = vmatpush1.msra.mxu0 0.0
    %1974 = vmatprep.subr.mxu0 0.0
    %1975 = vmatpush1.msra.mxu0 0.0
    %1976 = vmatprep.subr.mxu0 0.0
    %1977 = vmatpush1.msra.mxu0 0.0
    %1978 = vmatprep.subr.mxu0 0.0
    %1979 = vmatpush1.msra.mxu0 0.0
    %1980 = vmatprep.subr.mxu0 0.0
    %1981 = vmatpush1.msra.mxu0 0.0
    %1982 = vmatprep.subr.mxu0 0.0
    %1983 = vmatpush1.msra.mxu0 0.0
    %1984 = vmatprep.subr.mxu0 0.0
    %1985 = vmatpush1.msra.mxu0 0.0
    %1986 = vmatprep.subr.mxu0 0.0
    %1987 = vmatpush1.msra.mxu0 0.0
    %1988 = vmatprep.subr.mxu0 0.0
    %1989 = vmatpush1.msra.mxu0 0.0
    %1990 = vmatprep.subr.mxu0 0.0
    %1991 = vmatpush1.msra.mxu0 0.0
    %1992 = vmatprep.subr.mxu0 0.0
    %1993 = vmatpush1.msra.mxu0 0.0
    %1994 = vmatprep.subr.mxu0 0.0
    %1995 = vmatpush1.msra.mxu0 0.0
    %1996 = vmatprep.subr.mxu0 0.0
    %1997 = vmatpush1.msra.mxu0 0.0
    %1998 = vmatprep.subr.mxu0 0.0
    %1999 = vmatpush1.msra.mxu0 0.0
    %2000 = vmatprep.subr.mxu0 0.0
    %2001 = vmatpush1.msra.mxu0 0.0
    %2002 = vmatprep.subr.mxu0 0.0
    %2003 = vmatpush1.msra.mxu0 0.0
    %2004 = vmatprep.subr.mxu0 0.0
    %2005 = vmatpush1.msra.mxu0 0.0
    %2006 = vmatprep.subr.mxu0 0.0
    %2007 = vmatpush1.msra.mxu0 0.0
    %2008 = vmatprep.subr.mxu0 0.0
    %2009 = vmatpush1.msra.mxu0 0.0
    %2010 = vmatprep.mubr.f32.mxu0 0.0
    %2011 = vmatmul.mubr.f32.gmra.mrb[0].mxu0 %v1941
    %v2012 = vpop.f32.mrb[0].mxu0
    %v2013 = vadd.f32 %v1937, %v2012
    %v2014 = vpop.f32.mrb[0].mxu0
    %2015 = vdwg.mxu0
    %vm2016 = vcmp.ge.f32.partialorder %v2013, 0.0
    %v2017 = vmul.f32 %v2013, 0.01
    %v2018 = vsel %vm2016, %v2013, %v2017
    %v2019 = vld [vmem:[#allocation10 + $0xb0] sm:$0xf]
    %v2020 = vld [vmem:[#allocation10 + $0xb8] sm:$0x1]
    %v2021 = vlaneseq
    %v2022 = vshrl.u32 %v2021, 7
    %v2023 = vsub.s32 0, %v2022
    %v2024 = vrot.slane %v2020, %v2023
    %v2026 = vsel %vm862, %v2018, 0
    %v2029 = vsel %vm866, %v2019, 0
    %2031 = vmatprep.subr.mxu0 0.0
    %2032 = vmatpush1.msra.mxu0 %v2029
    %2033 = vmatprep.subr.mxu0 0.0
    %2034 = vmatpush1.msra.mxu0 0.0
    %2035 = vmatprep.subr.mxu0 0.0
    %2036 = vmatpush1.msra.mxu0 0.0
    %2037 = vmatprep.subr.mxu0 0.0
    %2038 = vmatpush1.msra.mxu0 0.0
    %2039 = vmatprep.subr.mxu0 0.0
    %2040 = vmatpush1.msra.mxu0 0.0
    %2041 = vmatprep.subr.mxu0 0.0
    %2042 = vmatpush1.msra.mxu0 0.0
    %2043 = vmatprep.subr.mxu0 0.0
    %2044 = vmatpush1.msra.mxu0 0.0
    %2045 = vmatprep.subr.mxu0 0.0
    %2046 = vmatpush1.msra.mxu0 0.0
    %2047 = vmatprep.subr.mxu0 0.0
    %2048 = vmatpush1.msra.mxu0 0.0
    %2049 = vmatprep.subr.mxu0 0.0
    %2050 = vmatpush1.msra.mxu0 0.0
    %2051 = vmatprep.subr.mxu0 0.0
    %2052 = vmatpush1.msra.mxu0 0.0
    %2053 = vmatprep.subr.mxu0 0.0
    %2054 = vmatpush1.msra.mxu0 0.0
    %2055 = vmatprep.subr.mxu0 0.0
    %2056 = vmatpush1.msra.mxu0 0.0
    %2057 = vmatprep.subr.mxu0 0.0
    %2058 = vmatpush1.msra.mxu0 0.0
    %2059 = vmatprep.subr.mxu0 0.0
    %2060 = vmatpush1.msra.mxu0 0.0
    %2061 = vmatprep.subr.mxu0 0.0
    %2062 = vmatpush1.msra.mxu0 0.0
    %2063 = vmatprep.subr.mxu0 0.0
    %2064 = vmatpush1.msra.mxu0 0.0
    %2065 = vmatprep.subr.mxu0 0.0
    %2066 = vmatpush1.msra.mxu0 0.0
    %2067 = vmatprep.subr.mxu0 0.0
    %2068 = vmatpush1.msra.mxu0 0.0
    %2069 = vmatprep.subr.mxu0 0.0
    %2070 = vmatpush1.msra.mxu0 0.0
    %2071 = vmatprep.subr.mxu0 0.0
    %2072 = vmatpush1.msra.mxu0 0.0
    %2073 = vmatprep.subr.mxu0 0.0
    %2074 = vmatpush1.msra.mxu0 0.0
    %2075 = vmatprep.subr.mxu0 0.0
    %2076 = vmatpush1.msra.mxu0 0.0
    %2077 = vmatprep.subr.mxu0 0.0
    %2078 = vmatpush1.msra.mxu0 0.0
    %2079 = vmatprep.subr.mxu0 0.0
    %2080 = vmatpush1.msra.mxu0 0.0
    %2081 = vmatprep.subr.mxu0 0.0
    %2082 = vmatpush1.msra.mxu0 0.0
    %2083 = vmatprep.subr.mxu0 0.0
    %2084 = vmatpush1.msra.mxu0 0.0
    %2085 = vmatprep.subr.mxu0 0.0
    %2086 = vmatpush1.msra.mxu0 0.0
    %2087 = vmatprep.subr.mxu0 0.0
    %2088 = vmatpush1.msra.mxu0 0.0
    %2089 = vmatprep.subr.mxu0 0.0
    %2090 = vmatpush1.msra.mxu0 0.0
    %2091 = vmatprep.subr.mxu0 0.0
    %2092 = vmatpush1.msra.mxu0 0.0
    %2093 = vmatprep.subr.mxu0 0.0
    %2094 = vmatpush1.msra.mxu0 0.0
    %2095 = vmatprep.mubr.f32.mxu0 0.0
    %2096 = vmatmul.mubr.f32.gmra.mrb[0].mxu0 %v2026
    %v2097 = vpop.f32.mrb[0].mxu0
    %v2098 = vadd.f32 %v2024, %v2097
    %v2099 = vpop.f32.mrb[0].mxu0
    %2100 = vdwg.mxu0
    %v2101 = vld [vmem:[#allocation10 + $0xc0] sm:$0xff]
    %v2102 = vld [vmem:[#allocation10 + $0xc8] sm:$0xff]
    %v2103 = vld [vmem:[#allocation10 + $0xd0] sm:$0xff]
    %v2104 = vld [vmem:[#allocation10 + $0xd8] sm:$0xf]
    %v2106 = vsel %vm862, %v2098, 0
    %v2109 = vsel %vm866, %v2104, 0
    %2111 = vmatprep.subr.mxu0 0.0
    %2112 = vmatpush1.msra.mxu0 %v2109
    %2113 = vmatprep.subr.mxu0 0.0
    %2114 = vmatpush1.msra.mxu0 0.0
    %2115 = vmatprep.subr.mxu0 0.0
    %2116 = vmatpush1.msra.mxu0 0.0
    %2117 = vmatprep.subr.mxu0 0.0
    %2118 = vmatpush1.msra.mxu0 0.0
    %2119 = vmatprep.subr.mxu0 0.0
    %2120 = vmatpush1.msra.mxu0 0.0
    %2121 = vmatprep.subr.mxu0 0.0
    %2122 = vmatpush1.msra.mxu0 0.0
    %2123 = vmatprep.subr.mxu0 0.0
    %2124 = vmatpush1.msra.mxu0 0.0
    %2125 = vmatprep.subr.mxu0 0.0
    %2126 = vmatpush1.msra.mxu0 0.0
    %2127 = vmatprep.subr.mxu0 0.0
    %2128 = vmatpush1.msra.mxu0 0.0
    %2129 = vmatprep.subr.mxu0 0.0
    %2130 = vmatpush1.msra.mxu0 0.0
    %2131 = vmatprep.subr.mxu0 0.0
    %2132 = vmatpush1.msra.mxu0 0.0
    %2133 = vmatprep.subr.mxu0 0.0
    %2134 = vmatpush1.msra.mxu0 0.0
    %2135 = vmatprep.subr.mxu0 0.0
    %2136 = vmatpush1.msra.mxu0 0.0
    %2137 = vmatprep.subr.mxu0 0.0
    %2138 = vmatpush1.msra.mxu0 0.0
    %2139 = vmatprep.subr.mxu0 0.0
    %2140 = vmatpush1.msra.mxu0 0.0
    %2141 = vmatprep.subr.mxu0 0.0
    %2142 = vmatpush1.msra.mxu0 0.0
    %2143 = vmatprep.subr.mxu0 0.0
    %2144 = vmatpush1.msra.mxu0 0.0
    %2145 = vmatprep.subr.mxu0 0.0
    %2146 = vmatpush1.msra.mxu0 0.0
    %2147 = vmatprep.subr.mxu0 0.0
    %2148 = vmatpush1.msra.mxu0 0.0
    %2149 = vmatprep.subr.mxu0 0.0
    %2150 = vmatpush1.msra.mxu0 0.0
    %2151 = vmatprep.subr.mxu0 0.0
    %2152 = vmatpush1.msra.mxu0 0.0
    %2153 = vmatprep.subr.mxu0 0.0
    %2154 = vmatpush1.msra.mxu0 0.0
    %2155 = vmatprep.subr.mxu0 0.0
    %2156 = vmatpush1.msra.mxu0 0.0
    %2157 = vmatprep.subr.mxu0 0.0
    %2158 = vmatpush1.msra.mxu0 0.0
    %2159 = vmatprep.subr.mxu0 0.0
    %2160 = vmatpush1.msra.mxu0 0.0
    %2161 = vmatprep.subr.mxu0 0.0
    %2162 = vmatpush1.msra.mxu0 0.0
    %2163 = vmatprep.subr.mxu0 0.0
    %2164 = vmatpush1.msra.mxu0 0.0
    %2165 = vmatprep.subr.mxu0 0.0
    %2166 = vmatpush1.msra.mxu0 0.0
    %2167 = vmatprep.subr.mxu0 0.0
    %2168 = vmatpush1.msra.mxu0 0.0
    %2169 = vmatprep.subr.mxu0 0.0
    %2170 = vmatpush1.msra.mxu0 0.0
    %2171 = vmatprep.subr.mxu0 0.0
    %2172 = vmatpush1.msra.mxu0 0.0
    %2173 = vmatprep.subr.mxu0 0.0
    %2174 = vmatpush1.msra.mxu0 0.0
    %2175 = vmatprep.mubr.f32.mxu0 0.0
    %2176 = vmatmul.mubr.f32.gmra.mrb[0].mxu0 %v2106
    %v2177 = vpop.f32.mrb[0].mxu0
    %v2178 = vadd.f32 0.0, %v2177
    %v2179 = vpop.f32.mrb[0].mxu0
    %2180 = vdwg.mxu0
    %v2182 = vsel %vm1810, %v1886, 0
    %2184 = vmatprep.subr.mxu0 0.0
    %2185 = vmatpush1.msra.mxu0 %v2101
    %2186 = vmatprep.subr.mxu0 0.0
    %2187 = vmatpush1.msra.mxu0 %v2102
    %2188 = vmatprep.subr.mxu0 0.0
    %2189 = vmatpush1.msra.mxu0 %v2103
    %2190 = vmatprep.subr.mxu0 0.0
    %2191 = vmatpush1.msra.mxu0 0.0
    %2192 = vmatprep.subr.mxu0 0.0
    %2193 = vmatpush1.msra.mxu0 0.0
    %2194 = vmatprep.subr.mxu0 0.0
    %2195 = vmatpush1.msra.mxu0 0.0
    %2196 = vmatprep.subr.mxu0 0.0
    %2197 = vmatpush1.msra.mxu0 0.0
    %2198 = vmatprep.subr.mxu0 0.0
    %2199 = vmatpush1.msra.mxu0 0.0
    %2200 = vmatprep.subr.mxu0 0.0
    %2201 = vmatpush1.msra.mxu0 0.0
    %2202 = vmatprep.subr.mxu0 0.0
    %2203 = vmatpush1.msra.mxu0 0.0
    %2204 = vmatprep.subr.mxu0 0.0
    %2205 = vmatpush1.msra.mxu0 0.0
    %2206 = vmatprep.subr.mxu0 0.0
    %2207 = vmatpush1.msra.mxu0 0.0
    %2208 = vmatprep.subr.mxu0 0.0
    %2209 = vmatpush1.msra.mxu0 0.0
    %2210 = vmatprep.subr.mxu0 0.0
    %2211 = vmatpush1.msra.mxu0 0.0
    %2212 = vmatprep.subr.mxu0 0.0
    %2213 = vmatpush1.msra.mxu0 0.0
    %2214 = vmatprep.subr.mxu0 0.0
    %2215 = vmatpush1.msra.mxu0 0.0
    %2216 = vmatprep.subr.mxu0 0.0
    %2217 = vmatpush1.msra.mxu0 0.0
    %2218 = vmatprep.subr.mxu0 0.0
    %2219 = vmatpush1.msra.mxu0 0.0
    %2220 = vmatprep.subr.mxu0 0.0
    %2221 = vmatpush1.msra.mxu0 0.0
    %2222 = vmatprep.subr.mxu0 0.0
    %2223 = vmatpush1.msra.mxu0 0.0
    %2224 = vmatprep.subr.mxu0 0.0
    %2225 = vmatpush1.msra.mxu0 0.0
    %2226 = vmatprep.subr.mxu0 0.0
    %2227 = vmatpush1.msra.mxu0 0.0
    %2228 = vmatprep.subr.mxu0 0.0
    %2229 = vmatpush1.msra.mxu0 0.0
    %2230 = vmatprep.subr.mxu0 0.0
    %2231 = vmatpush1.msra.mxu0 0.0
    %2232 = vmatprep.subr.mxu0 0.0
    %2233 = vmatpush1.msra.mxu0 0.0
    %2234 = vmatprep.subr.mxu0 0.0
    %2235 = vmatpush1.msra.mxu0 0.0
    %2236 = vmatprep.subr.mxu0 0.0
    %2237 = vmatpush1.msra.mxu0 0.0
    %2238 = vmatprep.subr.mxu0 0.0
    %2239 = vmatpush1.msra.mxu0 0.0
    %2240 = vmatprep.subr.mxu0 0.0
    %2241 = vmatpush1.msra.mxu0 0.0
    %2242 = vmatprep.subr.mxu0 0.0
    %2243 = vmatpush1.msra.mxu0 0.0
    %2244 = vmatprep.subr.mxu0 0.0
    %2245 = vmatpush1.msra.mxu0 0.0
    %2246 = vmatprep.subr.mxu0 0.0
    %2247 = vmatpush1.msra.mxu0 0.0
    %2248 = vmatprep.mubr.f32.mxu0 0.0
    %2249 = vmatmul.mubr.f32.gmra.mrb[0].mxu0 %v2182
    %v2250 = vpop.f32.mrb[0].mxu0
    %v2251 = vadd.f32 %v2178, %v2250
    %v2252 = vpop.f32.mrb[0].mxu0
    %2253 = vdwg.mxu0
    %v2254 = vld [vmem:[#allocation10 + $0xe0] sm:$0x1]
    %v2255 = vlaneseq
    %v2256 = vshrl.u32 %v2255, 7
    %v2257 = vsub.s32 0, %v2256
    %v2258 = vrot.slane %v2254, %v2257
    %v2259 = vadd.f32 %v2251, %v2258
    %vm2260 = vcmp.ge.f32.partialorder %v2259, 0.0
    %v2261 = vmul.f32 %v2259, 0.01
    %v2262 = vsel %vm2260, %v2259, %v2261
    %v2263 = vld [vmem:[#allocation10 + $0xe8] sm:$0xff]
    %v2264 = vld [vmem:[#allocation10 + $0xf0] sm:$0xff]
    %v2265 = vld [vmem:[#allocation10 + $0xf8] sm:$0xff]
    %v2266 = vld [vmem:[#allocation10 + $0x100] sm:$0xff]
    %v2267 = vld [vmem:[#allocation10 + $0x108] sm:$0x1]
    %v2268 = vlaneseq
    %v2269 = vshrl.u32 %v2268, 7
    %v2270 = vsub.s32 0, %v2269
    %v2271 = vrot.slane %v2267, %v2270
    %v2273 = vsel %vm779, %v2262, 0
    %2275 = vmatprep.subr.mxu0 0.0
    %2276 = vmatpush1.msra.mxu0 %v2263
    %2277 = vmatprep.subr.mxu0 0.0
    %2278 = vmatpush1.msra.mxu0 %v2264
    %2279 = vmatprep.subr.mxu0 0.0
    %2280 = vmatpush1.msra.mxu0 %v2265
    %2281 = vmatprep.subr.mxu0 0.0
    %2282 = vmatpush1.msra.mxu0 %v2266
    %2283 = vmatprep.subr.mxu0 0.0
    %2284 = vmatpush1.msra.mxu0 0.0
    %2285 = vmatprep.subr.mxu0 0.0
    %2286 = vmatpush1.msra.mxu0 0.0
    %2287 = vmatprep.subr.mxu0 0.0
    %2288 = vmatpush1.msra.mxu0 0.0
    %2289 = vmatprep.subr.mxu0 0.0
    %2290 = vmatpush1.msra.mxu0 0.0
    %2291 = vmatprep.subr.mxu0 0.0
    %2292 = vmatpush1.msra.mxu0 0.0
    %2293 = vmatprep.subr.mxu0 0.0
    %2294 = vmatpush1.msra.mxu0 0.0
    %2295 = vmatprep.subr.mxu0 0.0
    %2296 = vmatpush1.msra.mxu0 0.0
    %2297 = vmatprep.subr.mxu0 0.0
    %2298 = vmatpush1.msra.mxu0 0.0
    %2299 = vmatprep.subr.mxu0 0.0
    %2300 = vmatpush1.msra.mxu0 0.0
    %2301 = vmatprep.subr.mxu0 0.0
    %2302 = vmatpush1.msra.mxu0 0.0
    %2303 = vmatprep.subr.mxu0 0.0
    %2304 = vmatpush1.msra.mxu0 0.0
    %2305 = vmatprep.subr.mxu0 0.0
    %2306 = vmatpush1.msra.mxu0 0.0
    %2307 = vmatprep.subr.mxu0 0.0
    %2308 = vmatpush1.msra.mxu0 0.0
    %2309 = vmatprep.subr.mxu0 0.0
    %2310 = vmatpush1.msra.mxu0 0.0
    %2311 = vmatprep.subr.mxu0 0.0
    %2312 = vmatpush1.msra.mxu0 0.0
    %2313 = vmatprep.subr.mxu0 0.0
    %2314 = vmatpush1.msra.mxu0 0.0
    %2315 = vmatprep.subr.mxu0 0.0
    %2316 = vmatpush1.msra.mxu0 0.0
    %2317 = vmatprep.subr.mxu0 0.0
    %2318 = vmatpush1.msra.mxu0 0.0
    %2319 = vmatprep.subr.mxu0 0.0
    %2320 = vmatpush1.msra.mxu0 0.0
    %2321 = vmatprep.subr.mxu0 0.0
    %2322 = vmatpush1.msra.mxu0 0.0
    %2323 = vmatprep.subr.mxu0 0.0
    %2324 = vmatpush1.msra.mxu0 0.0
    %2325 = vmatprep.subr.mxu0 0.0
    %2326 = vmatpush1.msra.mxu0 0.0
    %2327 = vmatprep.subr.mxu0 0.0
    %2328 = vmatpush1.msra.mxu0 0.0
    %2329 = vmatprep.subr.mxu0 0.0
    %2330 = vmatpush1.msra.mxu0 0.0
    %2331 = vmatprep.subr.mxu0 0.0
    %2332 = vmatpush1.msra.mxu0 0.0
    %2333 = vmatprep.subr.mxu0 0.0
    %2334 = vmatpush1.msra.mxu0 0.0
    %2335 = vmatprep.subr.mxu0 0.0
    %2336 = vmatpush1.msra.mxu0 0.0
    %2337 = vmatprep.subr.mxu0 0.0
    %2338 = vmatpush1.msra.mxu0 0.0
    %2339 = vmatprep.mubr.f32.mxu0 0.0
    %2340 = vmatmul.mubr.f32.gmra.mrb[0].mxu0 %v2273
    %v2341 = vpop.f32.mrb[0].mxu0
    %v2342 = vadd.f32 %v2271, %v2341
    %v2343 = vpop.f32.mrb[0].mxu0
    %2344 = vdwg.mxu0
    %vm2345 = vcmask 254976
    %2346 = vst.msk [vmem:[#allocation16] sm:$0x3] %vm2345, %v2342
    %v2347 = vld [vmem:[%s3] sm:$0x3]
    %v2348 = vld [vmem:[#allocation11] sm:$0x1]
    %v2349 = vld [vmem:[#allocation11 + $0x8] sm:$0x1]
    %vm2350 = vcmask 33792
    %v2351 = vsel %vm2350, %v2347, 0.0
    %2352 = vadd.xlane.f32.xlu0 %v2351
    %v2353 = vpop.xlane.xlu0 %2352
    %v2354 = vrcp.pop 5.0
    %v2355 = vmul.f32 %v2353, %v2354
    %v2356 = vmul.f32 %v2347, %v2347
    %v2357 = vsel %vm2350, %v2356, 0.0
    %2358 = vadd.xlane.f32.xlu0 %v2357
    %v2359 = vpop.xlane.xlu0 %2358
    %v2360 = vmul.f32 %v2359, %v2354
    %v2361 = vmul.f32 %v2355, %v2355
    %v2362 = vsub.f32 %v2360, %v2361
    %v2363 = vmax.f32 %v2362, 0.0
    %v2364 = vsub.f32 %v2347, %v2355
    %v2365 = vadd.f32 %v2363, 1e-05
    %v2366 = vrsqrt.pop %v2365
    %v2367 = vmul.f32 %v2364, %v2366
    %v2368 = vlaneseq
    %v2369 = vshrl.u32 %v2368, 7
    %v2370 = vsub.s32 0, %v2369
    %v2371 = vrot.slane %v2348, %v2370
    %v2372 = vmul.f32 %v2367, %v2371
    %v2373 = vlaneseq
    %v2374 = vshrl.u32 %v2373, 7
    %v2375 = vsub.s32 0, %v2374
    %v2376 = vrot.slane %v2349, %v2375
    %v2377 = vadd.f32 %v2372, %v2376
    %v2378 = vld [vmem:[#allocation11 + $0x10] sm:$0x1f]
    %v2379 = vld [vmem:[#allocation11 + $0x18] sm:$0x1]
    %v2380 = vlaneseq
    %v2381 = vshrl.u32 %v2380, 7
    %v2382 = vsub.s32 0, %v2381
    %v2383 = vrot.slane %v2379, %v2382
    %vm2384 = vcmask 39936
    %v2386 = vsel %vm2384, %v2377, 0
    %vm2388 = vcmask 1044480
    %v2390 = vsel %vm2388, %v2378, 0
    %2392 = vmatprep.subr.mxu0 0.0
    %2393 = vmatpush1.msra.mxu0 %v2390
    %2394 = vmatprep.subr.mxu0 0.0
    %2395 = vmatpush1.msra.mxu0 0.0
    %2396 = vmatprep.subr.mxu0 0.0
    %2397 = vmatpush1.msra.mxu0 0.0
    %2398 = vmatprep.subr.mxu0 0.0
    %2399 = vmatpush1.msra.mxu0 0.0
    %2400 = vmatprep.subr.mxu0 0.0
    %2401 = vmatpush1.msra.mxu0 0.0
    %2402 = vmatprep.subr.mxu0 0.0
    %2403 = vmatpush1.msra.mxu0 0.0
    %2404 = vmatprep.subr.mxu0 0.0
    %2405 = vmatpush1.msra.mxu0 0.0
    %2406 = vmatprep.subr.mxu0 0.0
    %2407 = vmatpush1.msra.mxu0 0.0
    %2408 = vmatprep.subr.mxu0 0.0
    %2409 = vmatpush1.msra.mxu0 0.0
    %2410 = vmatprep.subr.mxu0 0.0
    %2411 = vmatpush1.msra.mxu0 0.0
    %2412 = vmatprep.subr.mxu0 0.0
    %2413 = vmatpush1.msra.mxu0 0.0
    %2414 = vmatprep.subr.mxu0 0.0
    %2415 = vmatpush1.msra.mxu0 0.0
    %2416 = vmatprep.subr.mxu0 0.0
    %2417 = vmatpush1.msra.mxu0 0.0
    %2418 = vmatprep.subr.mxu0 0.0
    %2419 = vmatpush1.msra.mxu0 0.0
    %2420 = vmatprep.subr.mxu0 0.0
    %2421 = vmatpush1.msra.mxu0 0.0
    %2422 = vmatprep.subr.mxu0 0.0
    %2423 = vmatpush1.msra.mxu0 0.0
    %2424 = vmatprep.subr.mxu0 0.0
    %2425 = vmatpush1.msra.mxu0 0.0
    %2426 = vmatprep.subr.mxu0 0.0
    %2427 = vmatpush1.msra.mxu0 0.0
    %2428 = vmatprep.subr.mxu0 0.0
    %2429 = vmatpush1.msra.mxu0 0.0
    %2430 = vmatprep.subr.mxu0 0.0
    %2431 = vmatpush1.msra.mxu0 0.0
    %2432 = vmatprep.subr.mxu0 0.0
    %2433 = vmatpush1.msra.mxu0 0.0
    %2434 = vmatprep.subr.mxu0 0.0
    %2435 = vmatpush1.msra.mxu0 0.0
    %2436 = vmatprep.subr.mxu0 0.0
    %2437 = vmatpush1.msra.mxu0 0.0
    %2438 = vmatprep.subr.mxu0 0.0
    %2439 = vmatpush1.msra.mxu0 0.0
    %2440 = vmatprep.subr.mxu0 0.0
    %2441 = vmatpush1.msra.mxu0 0.0
    %2442 = vmatprep.subr.mxu0 0.0
    %2443 = vmatpush1.msra.mxu0 0.0
    %2444 = vmatprep.subr.mxu0 0.0
    %2445 = vmatpush1.msra.mxu0 0.0
    %2446 = vmatprep.subr.mxu0 0.0
    %2447 = vmatpush1.msra.mxu0 0.0
    %2448 = vmatprep.subr.mxu0 0.0
    %2449 = vmatpush1.msra.mxu0 0.0
    %2450 = vmatprep.subr.mxu0 0.0
    %2451 = vmatpush1.msra.mxu0 0.0
    %2452 = vmatprep.subr.mxu0 0.0
    %2453 = vmatpush1.msra.mxu0 0.0
    %2454 = vmatprep.subr.mxu0 0.0
    %2455 = vmatpush1.msra.mxu0 0.0
    %2456 = vmatprep.mubr.f32.mxu0 0.0
    %2457 = vmatmul.mubr.f32.gmra.mrb[0].mxu0 %v2386
    %v2458 = vpop.f32.mrb[0].mxu0
    %v2459 = vadd.f32 %v2383, %v2458
    %v2460 = vpop.f32.mrb[0].mxu0
    %2461 = vdwg.mxu0
    %vm2462 = vcmp.ge.f32.partialorder %v2459, 0.0
    %v2463 = vmul.f32 %v2459, 0.01
    %v2464 = vsel %vm2462, %v2459, %v2463
    %v2465 = vld [vmem:[#allocation11 + $0x20] sm:$0xff]
    %v2466 = vld [vmem:[#allocation11 + $0x28] sm:$0xff]
    %v2467 = vld [vmem:[#allocation11 + $0x30] sm:$0x1]
    %v2468 = vlaneseq
    %v2469 = vshrl.u32 %v2468, 7
    %v2470 = vsub.s32 0, %v2469
    %v2471 = vrot.slane %v2467, %v2470
    %v2473 = vsel %vm1062, %v2464, 0
    %2475 = vmatprep.subr.mxu0 0.0
    %2476 = vmatpush1.msra.mxu0 %v2465
    %2477 = vmatprep.subr.mxu0 0.0
    %2478 = vmatpush1.msra.mxu0 %v2466
    %2479 = vmatprep.subr.mxu0 0.0
    %2480 = vmatpush1.msra.mxu0 0.0
    %2481 = vmatprep.subr.mxu0 0.0
    %2482 = vmatpush1.msra.mxu0 0.0
    %2483 = vmatprep.subr.mxu0 0.0
    %2484 = vmatpush1.msra.mxu0 0.0
    %2485 = vmatprep.subr.mxu0 0.0
    %2486 = vmatpush1.msra.mxu0 0.0
    %2487 = vmatprep.subr.mxu0 0.0
    %2488 = vmatpush1.msra.mxu0 0.0
    %2489 = vmatprep.subr.mxu0 0.0
    %2490 = vmatpush1.msra.mxu0 0.0
    %2491 = vmatprep.subr.mxu0 0.0
    %2492 = vmatpush1.msra.mxu0 0.0
    %2493 = vmatprep.subr.mxu0 0.0
    %2494 = vmatpush1.msra.mxu0 0.0
    %2495 = vmatprep.subr.mxu0 0.0
    %2496 = vmatpush1.msra.mxu0 0.0
    %2497 = vmatprep.subr.mxu0 0.0
    %2498 = vmatpush1.msra.mxu0 0.0
    %2499 = vmatprep.subr.mxu0 0.0
    %2500 = vmatpush1.msra.mxu0 0.0
    %2501 = vmatprep.subr.mxu0 0.0
    %2502 = vmatpush1.msra.mxu0 0.0
    %2503 = vmatprep.subr.mxu0 0.0
    %2504 = vmatpush1.msra.mxu0 0.0
    %2505 = vmatprep.subr.mxu0 0.0
    %2506 = vmatpush1.msra.mxu0 0.0
    %2507 = vmatprep.subr.mxu0 0.0
    %2508 = vmatpush1.msra.mxu0 0.0
    %2509 = vmatprep.subr.mxu0 0.0
    %2510 = vmatpush1.msra.mxu0 0.0
    %2511 = vmatprep.subr.mxu0 0.0
    %2512 = vmatpush1.msra.mxu0 0.0
    %2513 = vmatprep.subr.mxu0 0.0
    %2514 = vmatpush1.msra.mxu0 0.0
    %2515 = vmatprep.subr.mxu0 0.0
    %2516 = vmatpush1.msra.mxu0 0.0
    %2517 = vmatprep.subr.mxu0 0.0
    %2518 = vmatpush1.msra.mxu0 0.0
    %2519 = vmatprep.subr.mxu0 0.0
    %2520 = vmatpush1.msra.mxu0 0.0
    %2521 = vmatprep.subr.mxu0 0.0
    %2522 = vmatpush1.msra.mxu0 0.0
    %2523 = vmatprep.subr.mxu0 0.0
    %2524 = vmatpush1.msra.mxu0 0.0
    %2525 = vmatprep.subr.mxu0 0.0
    %2526 = vmatpush1.msra.mxu0 0.0
    %2527 = vmatprep.subr.mxu0 0.0
    %2528 = vmatpush1.msra.mxu0 0.0
    %2529 = vmatprep.subr.mxu0 0.0
    %2530 = vmatpush1.msra.mxu0 0.0
    %2531 = vmatprep.subr.mxu0 0.0
    %2532 = vmatpush1.msra.mxu0 0.0
    %2533 = vmatprep.subr.mxu0 0.0
    %2534 = vmatpush1.msra.mxu0 0.0
    %2535 = vmatprep.subr.mxu0 0.0
    %2536 = vmatpush1.msra.mxu0 0.0
    %2537 = vmatprep.subr.mxu0 0.0
    %2538 = vmatpush1.msra.mxu0 0.0
    %2539 = vmatprep.mubr.f32.mxu0 0.0
    %2540 = vmatmul.mubr.f32.gmra.mrb[0].mxu0 %v2473
    %v2541 = vpop.f32.mrb[0].mxu0
    %v2542 = vadd.f32 %v2471, %v2541
    %v2543 = vpop.f32.mrb[0].mxu0
    %2544 = vdwg.mxu0
    %vm2545 = vcmask 123904
    %2546 = vst.msk [vmem:[#allocation17] sm:$0x3] %vm2545, %v2542
    // Predicated region
    $region58: #{tpu_custom_call.1} parent=1 // pred_check
      _
    $region59: #{tpu_custom_call.1} parent=1 // pred_check_branch
      %2548 = sbr.rel (0) target = $region61
    $region60: #{tpu_custom_call.1} parent=1 // pred_region
      %s2550 = ssub.s32 64, 64
      %2551 = vsyncadd [#allocation4], %s2550
      %s2553 = sshll.u32 [#allocation13], 4
      %s2554 = int_to_ptr.vmem [resolvable:$true] %s2553
      %2556 = dma.vmem_to_hbm [thread:$0]  %s2554, 64, %s8, [#allocation4]
    $region61: #{tpu_custom_call.1} parent=1 // pred_fallthru
      _
    // Predicated region
    $region62: #{tpu_custom_call.1} parent=1 // pred_check
      _
    $region63: #{tpu_custom_call.1} parent=1 // pred_check_branch
      %2558 = sbr.rel (0) target = $region65
    $region64: #{tpu_custom_call.1} parent=1 // pred_region
      %s2560 = ssub.s32 64, 64
      %2561 = vsyncadd [#allocation15], %s2560
      %s2563 = sshll.u32 [#allocation14], 4
      %s2564 = int_to_ptr.vmem [resolvable:$true] %s2563
      %2566 = dma.vmem_to_hbm [thread:$0]  %s2564, 64, %s9, [#allocation15]
    $region65: #{tpu_custom_call.1} parent=1 // pred_fallthru
      _
    // Predicated region
    $region66: #{tpu_custom_call.1} parent=1 // pred_check
      _
    $region67: #{tpu_custom_call.1} parent=1 // pred_check_branch
      %2568 = sbr.rel (0) target = $region69
    $region68: #{tpu_custom_call.1} parent=1 // pred_region
      %s2570 = ssub.s32 32, 32
      %2571 = vsyncadd [#allocation15], %s2570
      %s2573 = sshll.u32 [#allocation16], 4
      %s2574 = int_to_ptr.vmem [resolvable:$true] %s2573
      %2576 = dma.vmem_to_hbm [thread:$0]  %s2574, 32, %s10, [#allocation15]
    $region69: #{tpu_custom_call.1} parent=1 // pred_fallthru
      _
    // Predicated region
    $region70: #{tpu_custom_call.1} parent=1 // pred_check
      _
    $region71: #{tpu_custom_call.1} parent=1 // pred_check_branch
      %2578 = sbr.rel (0) target = $region73
    $region72: #{tpu_custom_call.1} parent=1 // pred_region
      %s2580 = ssub.s32 32, 32
      %2581 = vsyncadd [#allocation18], %s2580
      %s2583 = sshll.u32 [#allocation17], 4
      %s2584 = int_to_ptr.vmem [resolvable:$true] %s2583
      %2586 = dma.vmem_to_hbm [thread:$0]  %s2584, 32, %s11, [#allocation18]
    $region73: #{tpu_custom_call.1} parent=1 // pred_fallthru
      _
    // Predicated region
    $region74: #{tpu_custom_call.1} parent=1 // pred_check
      _
    $region75: #{tpu_custom_call.1} parent=1 // pred_check_branch
      %2588 = sbr.rel (0) target = $region77
    $region76: #{tpu_custom_call.1} parent=1 // pred_region
      %2589 = dma.done [#allocation4], 64
    $region77: #{tpu_custom_call.1} parent=1 // pred_fallthru
      _
    // Predicated region
    $region78: #{tpu_custom_call.1} parent=1 // pred_check
      _
    $region79: #{tpu_custom_call.1} parent=1 // pred_check_branch
      %2591 = sbr.rel (0) target = $region81
    $region80: #{tpu_custom_call.1} parent=1 // pred_region
      %2592 = dma.done [#allocation15], 64
    $region81: #{tpu_custom_call.1} parent=1 // pred_fallthru
      _
    // Predicated region
    $region82: #{tpu_custom_call.1} parent=1 // pred_check
      _
    $region83: #{tpu_custom_call.1} parent=1 // pred_check_branch
      %2594 = sbr.rel (0) target = $region85
    $region84: #{tpu_custom_call.1} parent=1 // pred_region
      %2595 = dma.done [#allocation15], 32
    $region85: #{tpu_custom_call.1} parent=1 // pred_fallthru
      _
    // Predicated region
    $region86: #{tpu_custom_call.1} parent=1 // pred_check
      _
    $region87: #{tpu_custom_call.1} parent=1 // pred_check_branch
      %2597 = sbr.rel (0) target = $region89
    $region88: #{tpu_custom_call.1} parent=1 // pred_region
      %2598 = dma.done [#allocation18], 32
    $region89: #{tpu_custom_call.1} parent=1 // pred_fallthru
      _
    %2599 = vsyncpa [#allocation3], 1
    %2600 = vsyncpa [#allocation6], 1
    %2601 = vsyncpa [#allocation9], 1
    %2602 = vsyncpa [#allocation12], 1
    %2603 = vsyncpa [#allocation4], 1
    %2604 = vsyncpa [#allocation15], 1
    %2605 = vsyncpa [#allocation18], 1

</llo_original>
